<compile_context>
chip_gen: v7x
topology: tpu7x:2x2x1
jax: 0.10.0
libtpu: 0.0.40
codegen_flags: <defaults>
</compile_context>

<pallas_src>
import jax
import jax.numpy as jnp
from jax.experimental import pallas as pl
from jax.experimental.pallas import tpu as pltpu

L_IN = 24          # MLP dim_in (== C*L, example uses C=1, L=24)
LSTM_IN = 18
HIDDEN = 50
NUM_LAYERS = 2
NUM_CLASS = 21

GP = 128                    # per-gate lane padding (one vreg lane group)
MXU_DTYPE = jnp.bfloat16    # operand dtype for the hoisted batched matmuls


# ---------------------------------------------------------------------------
# Fused kernel: MLP + folded layer-0 input projection (batched over all
# timesteps), 2-layer LSTM recurrence, final Linear + log_softmax.
# One grid step handles a tile of the batch.
# ---------------------------------------------------------------------------
def _fused_kernel(x_ref,                     # (S, BT, CL) time-major input
                  w1_ref, b1_ref,            # (CL, 100) bf16, (1, 100) f32
                  wx0_ref, bx0_ref,          # folded: (100, 4*GP) bf16, (1, 4*GP)
                  whh0_ref,                  # (GP, 4*GP)
                  wl1_ref, bl1_ref,          # stacked [Wih1; Whh1]: (2*GP, 4*GP), (1, 4*GP)
                  h0_ref, c0_ref,            # (NUM_LAYERS, BT, GP)
                  wlin_ref, blin_ref,        # (GP, 21), (1, 21)
                  o_ref,                     # (BT, 21)
                  gx_ref):                   # scratch (S, BT, 4*GP)
    S, BT, CL = x_ref.shape

    # ---- stage 1: MLP + folded layer-0 input projection, all timesteps at once
    x2d = x_ref[...].reshape(S * BT, CL)
    hid = jnp.dot(x2d.astype(MXU_DTYPE), w1_ref[...],
                  preferred_element_type=jnp.float32) + b1_ref[...]
    hid = jnp.maximum(hid, 0.0)                                   # ReLU
    gx = jnp.dot(hid.astype(MXU_DTYPE), wx0_ref[...],
                 preferred_element_type=jnp.float32) + bx0_ref[...]
    gx_ref[...] = gx.reshape(S, BT, 4 * GP)

    # ---- stage 2: serial 2-layer LSTM recurrence (gate math in f32)
    whh0 = whh0_ref[...]
    wl1 = wl1_ref[...]
    bl1 = bl1_ref[...]

    def gates(g):
        # PyTorch gate order [i | f | g | o], each padded to GP lanes.
        i = jax.nn.sigmoid(g[:, 0 * GP:1 * GP])
        f = jax.nn.sigmoid(g[:, 1 * GP:2 * GP])
        c = jnp.tanh(g[:, 2 * GP:3 * GP])
        o = jax.nn.sigmoid(g[:, 3 * GP:4 * GP])
        return i, f, c, o

    def step(t, carry):
        h_a, c_a, h_b, c_b = carry
        # layer 0: input part (incl. all biases) precomputed in gx_ref
        g0 = gx_ref[t] + jnp.dot(h_a, whh0, preferred_element_type=jnp.float32)
        i0, f0, g0c, o0 = gates(g0)
        c_a = f0 * c_a + i0 * g0c
        h_a = o0 * jnp.tanh(c_a)
        # layer 1: single fused matmul on concat([x_t(=h_a), h_prev])
        g1 = jnp.dot(jnp.concatenate([h_a, h_b], axis=-1), wl1,
                     preferred_element_type=jnp.float32) + bl1
        i1, f1, g1c, o1 = gates(g1)
        c_b = f1 * c_b + i1 * g1c
        h_b = o1 * jnp.tanh(c_b)
        # (dropout between layers is identity in eval mode)
        return h_a, c_a, h_b, c_b

    carry = (h0_ref[0], c0_ref[0], h0_ref[1], c0_ref[1])
    if S <= 16:                       # short sequence: static unroll
        for t in range(S):
            carry = step(t, carry)
    else:                             # long sequence: bounded trace / live ranges
        carry = jax.lax.fori_loop(0, S, step, carry, unroll=True)
    h_top = carry[2]                  # last-timestep output of layer 1

    logits = (jnp.dot(h_top, wlin_ref[...], preferred_element_type=jnp.float32)
              + blin_ref[...])
    o_ref[...] = jax.nn.log_softmax(logits, axis=-1).astype(o_ref.dtype)


# ---------------------------------------------------------------------------
# Wrapper: layout plumbing + weight folding / gate-aligned padding in JAX,
# compute in the single Pallas kernel.
# ---------------------------------------------------------------------------
def _gate_pad_cols(w):
    """(..., 4*HIDDEN) -> (..., 4*GP): each gate block padded to GP lanes."""
    lead = w.shape[:-1]
    w4 = w.reshape(lead + (4, HIDDEN))
    pad = [(0, 0)] * (len(lead) + 1) + [(0, GP - HIDDEN)]
    return jnp.pad(w4, pad).reshape(lead + (4 * GP,))


def _pad_rows(w, rows):
    return jnp.pad(w, ((0, rows - w.shape[0]), (0, 0)))


def mlp_lstm_forward(x, params, h0, c0):
    B, T, C, S, L = x.shape
    # c_out.view(B, S, -1) only matches LSTM input_size=18 when T == 1.
    assert T == 1, "MLP_LSTM forward requires timesteps == 1 (torch .view semantics)"
    CL = C * L

    # Faithful to torch: x.view(B*T*S, C, L) -> flatten -> rows, then (B, S, CL).
    x_bsf = x.reshape(B, S, CL)
    x_tm = jnp.transpose(x_bsf, (1, 0, 2))          # (S, B, CL): time leading

    # Pad batch to a full sublane group and choose a batch tile.
    # TODO(synk): for very long S, also tile the time axis so the gx scratch
    # stays within the v7x 64 MiB VMEM budget.
    b_tile = min(128, ((B + 7) // 8) * 8)
    b_pad = ((B + b_tile - 1) // b_tile) * b_tile
    x_tm = jnp.pad(x_tm, ((0, 0), (0, b_pad - B), (0, 0)))
    h0_p = jnp.pad(h0, ((0, 0), (0, b_pad - B), (0, GP - HIDDEN)))
    c0_p = jnp.pad(c0, ((0, 0), (0, b_pad - B), (0, GP - HIDDEN)))

    # Weight precompute: fold second MLP linear into layer-0 input projection,
    # pad gates to 128 lanes, pad hidden-dim rows to 128, stack layer-1 weights.
    wih0_gp = _gate_pad_cols(params["wih0"])                       # (18, 4*GP)
    wx0 = jnp.dot(params["w2"], wih0_gp)                           # (100, 4*GP)
    bx0 = (jnp.dot(params["b2"], wih0_gp)
           + _gate_pad_cols(params["bih0"])
           + _gate_pad_cols(params["bhh0"]))                       # (1, 4*GP)
    whh0_p = _pad_rows(_gate_pad_cols(params["whh0"]), GP)         # (GP, 4*GP)
    wl1 = jnp.concatenate(
        [_pad_rows(_gate_pad_cols(params["wih1"]), GP),
         _pad_rows(_gate_pad_cols(params["whh1"]), GP)], axis=0)   # (2*GP, 4*GP)
    bl1 = _gate_pad_cols(params["bih1"] + params["bhh1"])          # (1, 4*GP)
    wlin_p = _pad_rows(params["wlin"], GP)                         # (GP, 21)

    w1_mx = params["w1"].astype(MXU_DTYPE)
    wx0_mx = wx0.astype(MXU_DTYPE)

    n_tiles = b_pad // b_tile

    def rep0(i):                      # weights: same block every grid step
        return (0, 0)

    in_specs = [
        pl.BlockSpec((S, b_tile, CL), lambda i: (0, i, 0)),           # x (time-major)
        pl.BlockSpec((CL, 100), rep0),                                # w1
        pl.BlockSpec((1, 100), rep0),                                 # b1
        pl.BlockSpec((100, 4 * GP), rep0),                            # wx0 (folded)
        pl.BlockSpec((1, 4 * GP), rep0),                              # bx0
        pl.BlockSpec((GP, 4 * GP), rep0),                             # whh0
        pl.BlockSpec((2 * GP, 4 * GP), rep0),                         # [wih1; whh1]
        pl.BlockSpec((1, 4 * GP), rep0),                              # bl1
        pl.BlockSpec((NUM_LAYERS, b_tile, GP), lambda i: (0, i, 0)),  # h0
        pl.BlockSpec((NUM_LAYERS, b_tile, GP), lambda i: (0, i, 0)),  # c0
        pl.BlockSpec((GP, NUM_CLASS), rep0),                          # wlin
        pl.BlockSpec((1, NUM_CLASS), rep0),                           # blin
    ]

    out = pl.pallas_call(
        _fused_kernel,
        out_shape=jax.ShapeDtypeStruct((b_pad, NUM_CLASS), jnp.float32),
        grid=(n_tiles,),
        in_specs=in_specs,
        out_specs=pl.BlockSpec((b_tile, NUM_CLASS), lambda i: (i, 0)),
        scratch_shapes=[pltpu.VMEM((S, b_tile, 4 * GP), jnp.float32)],
        compiler_params=pltpu.CompilerParams(
            dimension_semantics=("parallel",)),
    )(x_tm, w1_mx, params["b1"], wx0_mx, bx0,
      whh0_p, wl1, bl1, h0_p, c0_p, wlin_p, params["blin"])

    return out[:B]


# ---------------------------------------------------------------------------
# Pure-JAX reference (unfolded, unpadded) for correctness checking.
# ---------------------------------------------------------------------------
def _reference_forward(x, params, h0, c0):
    B, T, C, S, L = x.shape
    xr = x.reshape(B * T * S, C * L)
    h = jax.nn.relu(xr @ params["w1"] + params["b1"])
    c_out = h @ params["w2"] + params["b2"]
    r = c_out.reshape(B, S, -1)
    H = HIDDEN

    def cell(x_t, h_prev, c_prev, wih, whh, bih, bhh):
        g = x_t @ wih + h_prev @ whh + bih + bhh
        i = jax.nn.sigmoid(g[:, :H])
        f = jax.nn.sigmoid(g[:, H:2 * H])
        gg = jnp.tanh(g[:, 2 * H:3 * H])
        o = jax.nn.sigmoid(g[:, 3 * H:])
        c = f * c_prev + i * gg
        return o * jnp.tanh(c), c

    h_l0, c_l0, h_l1, c_l1 = h0[0], c0[0], h0[1], c0[1]
    for t in range(S):
        h_l0, c_l0 = cell(r[:, t, :], h_l0, c_l0, params["wih0"],
                          params["whh0"], params["bih0"], params["bhh0"])
        h_l1, c_l1 = cell(h_l0, h_l1, c_l1, params["wih1"],
                          params["whh1"], params["bih1"], params["bhh1"])
    logits = h_l1 @ params["wlin"] + params["blin"]
    return jax.nn.log_softmax(logits, axis=-1)


# ---------------------------------------------------------------------------
# Deterministic parameter init (PyTorch-style uniform(-1/sqrt(k), 1/sqrt(k))).
# Weights stored as (in, out); biases as (1, out); LSTM gate order [i|f|g|o].
# ---------------------------------------------------------------------------
def init_params(key):
    keys = jax.random.split(key, 14)

    def u(k, shape, fan):
        bound = 1.0 / jnp.sqrt(jnp.float32(fan))
        return jax.random.uniform(k, shape, jnp.float32, -bound, bound)

    p = {}
    p["w1"] = u(keys[0], (L_IN, 100), L_IN)
    p["b1"] = u(keys[1], (1, 100), L_IN)
    p["w2"] = u(keys[2], (100, LSTM_IN), 100)
    p["b2"] = u(keys[3], (1, LSTM_IN), 100)
    p["wih0"] = u(keys[4], (LSTM_IN, 4 * HIDDEN), HIDDEN)
    p["whh0"] = u(keys[5], (HIDDEN, 4 * HIDDEN), HIDDEN)
    p["bih0"] = u(keys[6], (1, 4 * HIDDEN), HIDDEN)
    p["bhh0"] = u(keys[7], (1, 4 * HIDDEN), HIDDEN)
    p["wih1"] = u(keys[8], (HIDDEN, 4 * HIDDEN), HIDDEN)
    p["whh1"] = u(keys[9], (HIDDEN, 4 * HIDDEN), HIDDEN)
    p["bih1"] = u(keys[10], (1, 4 * HIDDEN), HIDDEN)
    p["bhh1"] = u(keys[11], (1, 4 * HIDDEN), HIDDEN)
    p["wlin"] = u(keys[12], (HIDDEN, NUM_CLASS), HIDDEN)
    p["blin"] = u(keys[13], (1, NUM_CLASS), HIDDEN)
    return p


if __name__ == "__main__":
    key = jax.random.PRNGKey(0)
    k_x, k_p = jax.random.split(key)

    # shapes implied by the forward: (batch, timesteps, C, sequence, L)
    B, T, C, S = 2, 1, 1, 8
    x = jax.random.normal(k_x, (B, T, C, S, L_IN), jnp.float32)
    params = init_params(k_p)

    # self.hidden = (h, c), each (num_layers, batch, hidden_size)
    h0 = jnp.zeros((NUM_LAYERS, B, HIDDEN), jnp.float32)
    c0 = jnp.zeros((NUM_LAYERS, B, HIDDEN), jnp.float32)

    out = jax.jit(mlp_lstm_forward)(x, params, h0, c0)
    out = jax.block_until_ready(out)

    assert out.shape == (B, NUM_CLASS), out.shape
    # rows of log_softmax should (approximately) exponentiate-sum to 1
    assert jnp.allclose(jnp.exp(out).sum(axis=1), 1.0, atol=1e-3)
    # matches the unfolded f32 reference up to bf16-matmul rounding
    ref = _reference_forward(x, params, h0, c0)
    assert jnp.allclose(out, ref, atol=0.1), float(jnp.abs(out - ref).max())

    print("KERNEL_OK")
</pallas_src>

<mosaic_0001>
module attributes {stable_mosaic.version = 11 : i64} {
  func.func @_fused_kernel(%arg0: i32, %arg1: memref<8x8x24xf32, #tpu.memory_space<vmem>>, %arg2: memref<24x100xbf16, #tpu.memory_space<vmem>>, %arg3: memref<1x100xf32, #tpu.memory_space<vmem>>, %arg4: memref<100x512xbf16, #tpu.memory_space<vmem>>, %arg5: memref<1x512xf32, #tpu.memory_space<vmem>>, %arg6: memref<128x512xf32, #tpu.memory_space<vmem>>, %arg7: memref<256x512xf32, #tpu.memory_space<vmem>>, %arg8: memref<1x512xf32, #tpu.memory_space<vmem>>, %arg9: memref<2x8x128xf32, #tpu.memory_space<vmem>>, %arg10: memref<2x8x128xf32, #tpu.memory_space<vmem>>, %arg11: memref<128x21xf32, #tpu.memory_space<vmem>>, %arg12: memref<1x21xf32, #tpu.memory_space<vmem>>, %arg13: memref<8x21xf32, #tpu.memory_space<vmem>>, %arg14: memref<8x8x512xf32, #tpu.memory_space<vmem>>) attributes {dimension_semantics = [#tpu.dimension_semantics<parallel>], iteration_bounds = array<i64: 1>, scalar_prefetch = 0 : i64, scratch_operands = 1 : i64, tpu.core_type = #tpu.core_type<tc>, window_params = [{transform_indices = @transform_0, window_bounds = array<i64: 8, 8, 24>}, {pipeline_mode = #tpu.pipeline_mode<synchronous>, transform_indices = @transform_1, window_bounds = array<i64: 24, 100>}, {pipeline_mode = #tpu.pipeline_mode<synchronous>, transform_indices = @transform_2, window_bounds = array<i64: 1, 100>}, {pipeline_mode = #tpu.pipeline_mode<synchronous>, transform_indices = @transform_3, window_bounds = array<i64: 100, 512>}, {pipeline_mode = #tpu.pipeline_mode<synchronous>, transform_indices = @transform_4, window_bounds = array<i64: 1, 512>}, {pipeline_mode = #tpu.pipeline_mode<synchronous>, transform_indices = @transform_5, window_bounds = array<i64: 128, 512>}, {pipeline_mode = #tpu.pipeline_mode<synchronous>, transform_indices = @transform_6, window_bounds = array<i64: 256, 512>}, {pipeline_mode = #tpu.pipeline_mode<synchronous>, transform_indices = @transform_7, window_bounds = array<i64: 1, 512>}, {transform_indices = @transform_8, window_bounds = array<i64: 2, 8, 128>}, {transform_indices = @transform_9, window_bounds = array<i64: 2, 8, 128>}, {pipeline_mode = #tpu.pipeline_mode<synchronous>, transform_indices = @transform_10, window_bounds = array<i64: 128, 21>}, {pipeline_mode = #tpu.pipeline_mode<synchronous>, transform_indices = @transform_11, window_bounds = array<i64: 1, 21>}, {transform_indices = @transform_12, window_bounds = array<i64: 8, 21>}]} {
    %c0 = arith.constant 0 : index
    %c0_0 = arith.constant 0 : index
    %c0_1 = arith.constant 0 : index
    %0 = vector.load %arg1[%c0, %c0_0, %c0_1] : memref<8x8x24xf32, #tpu.memory_space<vmem>>, vector<8x8x24xf32>
    %1 = vector.shape_cast %0 : vector<8x8x24xf32> to vector<64x24xf32>
    %2 = arith.truncf %1 : vector<64x24xf32> to vector<64x24xbf16>
    %c0_2 = arith.constant 0 : index
    %c0_3 = arith.constant 0 : index
    %3 = vector.load %arg2[%c0_2, %c0_3] : memref<24x100xbf16, #tpu.memory_space<vmem>>, vector<24x100xbf16>
    %cst = arith.constant dense<0.000000e+00> : vector<64x100xf32>
    %4 = tpu.matmul %2, %3, %cst {dimension_numbers = #tpu.dot_dimension_numbers<[1], [0], [0], [1], [0, 0, 1, 1], [], []>} : vector<64x24xbf16>, vector<24x100xbf16>, vector<64x100xf32> -> vector<64x100xf32>
    %c0_4 = arith.constant 0 : index
    %c0_5 = arith.constant 0 : index
    %5 = vector.load %arg3[%c0_4, %c0_5] : memref<1x100xf32, #tpu.memory_space<vmem>>, vector<1x100xf32>
    %6 = vector.broadcast %5 : vector<1x100xf32> to vector<64x100xf32>
    %7 = arith.addf %4, %6 : vector<64x100xf32>
    %cst_6 = arith.constant 0.000000e+00 : f32
    %8 = vector.broadcast %cst_6 : f32 to vector<64x100xf32>
    %9 = arith.maximumf %7, %8 : vector<64x100xf32>
    %10 = arith.truncf %9 : vector<64x100xf32> to vector<64x100xbf16>
    %c0_7 = arith.constant 0 : index
    %c0_8 = arith.constant 0 : index
    %11 = vector.load %arg4[%c0_7, %c0_8] : memref<100x512xbf16, #tpu.memory_space<vmem>>, vector<100x512xbf16>
    %cst_9 = arith.constant dense<0.000000e+00> : vector<64x512xf32>
    %12 = tpu.matmul %10, %11, %cst_9 {dimension_numbers = #tpu.dot_dimension_numbers<[1], [0], [0], [1], [0, 0, 1, 1], [], []>} : vector<64x100xbf16>, vector<100x512xbf16>, vector<64x512xf32> -> vector<64x512xf32>
    %c0_10 = arith.constant 0 : index
    %c0_11 = arith.constant 0 : index
    %13 = vector.load %arg5[%c0_10, %c0_11] : memref<1x512xf32, #tpu.memory_space<vmem>>, vector<1x512xf32>
    %14 = vector.broadcast %13 : vector<1x512xf32> to vector<64x512xf32>
    %15 = arith.addf %12, %14 : vector<64x512xf32>
    %16 = vector.shape_cast %15 : vector<64x512xf32> to vector<8x8x512xf32>
    %c0_12 = arith.constant 0 : index
    %c0_13 = arith.constant 0 : index
    %c0_14 = arith.constant 0 : index
    %17 = vector.load %arg14[%c0_12, %c0_13, %c0_14] : memref<8x8x512xf32, #tpu.memory_space<vmem>>, vector<8x8x512xf32>
    tpu.vector_store %arg14[%c0_12, %c0_13, %c0_14], %16 {strides = array<i32>} : memref<8x8x512xf32, #tpu.memory_space<vmem>>, vector<8x8x512xf32>,
    %c0_15 = arith.constant 0 : index
    %c0_16 = arith.constant 0 : index
    %18 = vector.load %arg6[%c0_15, %c0_16] : memref<128x512xf32, #tpu.memory_space<vmem>>, vector<128x512xf32>
    %c0_17 = arith.constant 0 : index
    %c0_18 = arith.constant 0 : index
    %19 = vector.load %arg7[%c0_17, %c0_18] : memref<256x512xf32, #tpu.memory_space<vmem>>, vector<256x512xf32>
    %c0_19 = arith.constant 0 : index
    %c0_20 = arith.constant 0 : index
    %20 = vector.load %arg8[%c0_19, %c0_20] : memref<1x512xf32, #tpu.memory_space<vmem>>, vector<1x512xf32>
    %c0_21 = arith.constant 0 : index
    %c0_22 = arith.constant 0 : index
    %c0_23 = arith.constant 0 : index
    %21 = vector.load %arg9[%c0_21, %c0_22, %c0_23] : memref<2x8x128xf32, #tpu.memory_space<vmem>>, vector<1x8x128xf32>
    %22 = vector.shape_cast %21 : vector<1x8x128xf32> to vector<8x128xf32>
    %c0_24 = arith.constant 0 : index
    %c0_25 = arith.constant 0 : index
    %c0_26 = arith.constant 0 : index
    %23 = vector.load %arg10[%c0_24, %c0_25, %c0_26] : memref<2x8x128xf32, #tpu.memory_space<vmem>>, vector<1x8x128xf32>
    %24 = vector.shape_cast %23 : vector<1x8x128xf32> to vector<8x128xf32>
    %c1 = arith.constant 1 : index
    %c0_27 = arith.constant 0 : index
    %c0_28 = arith.constant 0 : index
    %25 = vector.load %arg9[%c1, %c0_27, %c0_28] : memref<2x8x128xf32, #tpu.memory_space<vmem>>, vector<1x8x128xf32>
    %26 = vector.shape_cast %25 : vector<1x8x128xf32> to vector<8x128xf32>
    %c1_29 = arith.constant 1 : index
    %c0_30 = arith.constant 0 : index
    %c0_31 = arith.constant 0 : index
    %27 = vector.load %arg10[%c1_29, %c0_30, %c0_31] : memref<2x8x128xf32, #tpu.memory_space<vmem>>, vector<1x8x128xf32>
    %28 = vector.shape_cast %27 : vector<1x8x128xf32> to vector<8x128xf32>
    %c0_32 = arith.constant 0 : index
    %c0_33 = arith.constant 0 : index
    %c0_34 = arith.constant 0 : index
    %29 = vector.load %arg14[%c0_32, %c0_33, %c0_34] : memref<8x8x512xf32, #tpu.memory_space<vmem>>, vector<1x8x512xf32>
    %30 = vector.shape_cast %29 : vector<1x8x512xf32> to vector<8x512xf32>
    %cst_35 = arith.constant dense<0.000000e+00> : vector<8x512xf32>
    %31 = tpu.matmul %22, %18, %cst_35 {dimension_numbers = #tpu.dot_dimension_numbers<[1], [0], [0], [1], [0, 0, 1, 1], [], []>} : vector<8x128xf32>, vector<128x512xf32>, vector<8x512xf32> -> vector<8x512xf32>
    %32 = arith.addf %30, %31 : vector<8x512xf32>
    %33 = vector.extract_strided_slice %32 {offsets = [0, 0], sizes = [8, 128], strides = [1, 1]} : vector<8x512xf32> to vector<8x128xf32>
    %34 = arith.negf %33 : vector<8x128xf32>
    %35 = math.exp %34 : vector<8x128xf32>
    %cst_36 = arith.constant 1.000000e+00 : f32
    %36 = vector.broadcast %cst_36 : f32 to vector<8x128xf32>
    %37 = arith.addf %36, %35 : vector<8x128xf32>
    %38 = arith.divf %36, %37 : vector<8x128xf32>
    %39 = vector.extract_strided_slice %32 {offsets = [0, 128], sizes = [8, 128], strides = [1, 1]} : vector<8x512xf32> to vector<8x128xf32>
    %40 = arith.negf %39 : vector<8x128xf32>
    %41 = math.exp %40 : vector<8x128xf32>
    %cst_37 = arith.constant 1.000000e+00 : f32
    %42 = vector.broadcast %cst_37 : f32 to vector<8x128xf32>
    %43 = arith.addf %42, %41 : vector<8x128xf32>
    %44 = arith.divf %42, %43 : vector<8x128xf32>
    %45 = vector.extract_strided_slice %32 {offsets = [0, 256], sizes = [8, 128], strides = [1, 1]} : vector<8x512xf32> to vector<8x128xf32>
    %46 = math.tanh %45 : vector<8x128xf32>
    %47 = vector.extract_strided_slice %32 {offsets = [0, 384], sizes = [8, 128], strides = [1, 1]} : vector<8x512xf32> to vector<8x128xf32>
    %48 = arith.negf %47 : vector<8x128xf32>
    %49 = math.exp %48 : vector<8x128xf32>
    %cst_38 = arith.constant 1.000000e+00 : f32
    %50 = vector.broadcast %cst_38 : f32 to vector<8x128xf32>
    %51 = arith.addf %50, %49 : vector<8x128xf32>
    %52 = arith.divf %50, %51 : vector<8x128xf32>
    %53 = arith.mulf %44, %24 : vector<8x128xf32>
    %54 = arith.mulf %38, %46 : vector<8x128xf32>
    %55 = arith.addf %53, %54 : vector<8x128xf32>
    %56 = math.tanh %55 : vector<8x128xf32>
    %57 = arith.mulf %52, %56 : vector<8x128xf32>
    %58 = tpu.concatenate %57, %26 in 1 : vector<8x128xf32>, vector<8x128xf32> -> vector<8x256xf32>
    %cst_39 = arith.constant dense<0.000000e+00> : vector<8x512xf32>
    %59 = tpu.matmul %58, %19, %cst_39 {dimension_numbers = #tpu.dot_dimension_numbers<[1], [0], [0], [1], [0, 0, 1, 1], [], []>} : vector<8x256xf32>, vector<256x512xf32>, vector<8x512xf32> -> vector<8x512xf32>
    %60 = vector.broadcast %20 : vector<1x512xf32> to vector<8x512xf32>
    %61 = arith.addf %59, %60 : vector<8x512xf32>
    %62 = vector.extract_strided_slice %61 {offsets = [0, 0], sizes = [8, 128], strides = [1, 1]} : vector<8x512xf32> to vector<8x128xf32>
    %63 = arith.negf %62 : vector<8x128xf32>
    %64 = math.exp %63 : vector<8x128xf32>
    %cst_40 = arith.constant 1.000000e+00 : f32
    %65 = vector.broadcast %cst_40 : f32 to vector<8x128xf32>
    %66 = arith.addf %65, %64 : vector<8x128xf32>
    %67 = arith.divf %65, %66 : vector<8x128xf32>
    %68 = vector.extract_strided_slice %61 {offsets = [0, 128], sizes = [8, 128], strides = [1, 1]} : vector<8x512xf32> to vector<8x128xf32>
    %69 = arith.negf %68 : vector<8x128xf32>
    %70 = math.exp %69 : vector<8x128xf32>
    %cst_41 = arith.constant 1.000000e+00 : f32
    %71 = vector.broadcast %cst_41 : f32 to vector<8x128xf32>
    %72 = arith.addf %71, %70 : vector<8x128xf32>
    %73 = arith.divf %71, %72 : vector<8x128xf32>
    %74 = vector.extract_strided_slice %61 {offsets = [0, 256], sizes = [8, 128], strides = [1, 1]} : vector<8x512xf32> to vector<8x128xf32>
    %75 = math.tanh %74 : vector<8x128xf32>
    %76 = vector.extract_strided_slice %61 {offsets = [0, 384], sizes = [8, 128], strides = [1, 1]} : vector<8x512xf32> to vector<8x128xf32>
    %77 = arith.negf %76 : vector<8x128xf32>
    %78 = math.exp %77 : vector<8x128xf32>
    %cst_42 = arith.constant 1.000000e+00 : f32
    %79 = vector.broadcast %cst_42 : f32 to vector<8x128xf32>
    %80 = arith.addf %79, %78 : vector<8x128xf32>
    %81 = arith.divf %79, %80 : vector<8x128xf32>
    %82 = arith.mulf %73, %28 : vector<8x128xf32>
    %83 = arith.mulf %67, %75 : vector<8x128xf32>
    %84 = arith.addf %82, %83 : vector<8x128xf32>
    %85 = math.tanh %84 : vector<8x128xf32>
    %86 = arith.mulf %81, %85 : vector<8x128xf32>
    %c1_43 = arith.constant 1 : index
    %c0_44 = arith.constant 0 : index
    %c0_45 = arith.constant 0 : index
    %87 = vector.load %arg14[%c1_43, %c0_44, %c0_45] : memref<8x8x512xf32, #tpu.memory_space<vmem>>, vector<1x8x512xf32>
    %88 = vector.shape_cast %87 : vector<1x8x512xf32> to vector<8x512xf32>
    %cst_46 = arith.constant dense<0.000000e+00> : vector<8x512xf32>
    %89 = tpu.matmul %57, %18, %cst_46 {dimension_numbers = #tpu.dot_dimension_numbers<[1], [0], [0], [1], [0, 0, 1, 1], [], []>} : vector<8x128xf32>, vector<128x512xf32>, vector<8x512xf32> -> vector<8x512xf32>
    %90 = arith.addf %88, %89 : vector<8x512xf32>
    %91 = vector.extract_strided_slice %90 {offsets = [0, 0], sizes = [8, 128], strides = [1, 1]} : vector<8x512xf32> to vector<8x128xf32>
    %92 = arith.negf %91 : vector<8x128xf32>
    %93 = math.exp %92 : vector<8x128xf32>
    %cst_47 = arith.constant 1.000000e+00 : f32
    %94 = vector.broadcast %cst_47 : f32 to vector<8x128xf32>
    %95 = arith.addf %94, %93 : vector<8x128xf32>
    %96 = arith.divf %94, %95 : vector<8x128xf32>
    %97 = vector.extract_strided_slice %90 {offsets = [0, 128], sizes = [8, 128], strides = [1, 1]} : vector<8x512xf32> to vector<8x128xf32>
    %98 = arith.negf %97 : vector<8x128xf32>
    %99 = math.exp %98 : vector<8x128xf32>
    %cst_48 = arith.constant 1.000000e+00 : f32
    %100 = vector.broadcast %cst_48 : f32 to vector<8x128xf32>
    %101 = arith.addf %100, %99 : vector<8x128xf32>
    %102 = arith.divf %100, %101 : vector<8x128xf32>
    %103 = vector.extract_strided_slice %90 {offsets = [0, 256], sizes = [8, 128], strides = [1, 1]} : vector<8x512xf32> to vector<8x128xf32>
    %104 = math.tanh %103 : vector<8x128xf32>
    %105 = vector.extract_strided_slice %90 {offsets = [0, 384], sizes = [8, 128], strides = [1, 1]} : vector<8x512xf32> to vector<8x128xf32>
    %106 = arith.negf %105 : vector<8x128xf32>
    %107 = math.exp %106 : vector<8x128xf32>
    %cst_49 = arith.constant 1.000000e+00 : f32
    %108 = vector.broadcast %cst_49 : f32 to vector<8x128xf32>
    %109 = arith.addf %108, %107 : vector<8x128xf32>
    %110 = arith.divf %108, %109 : vector<8x128xf32>
    %111 = arith.mulf %102, %55 : vector<8x128xf32>
    %112 = arith.mulf %96, %104 : vector<8x128xf32>
    %113 = arith.addf %111, %112 : vector<8x128xf32>
    %114 = math.tanh %113 : vector<8x128xf32>
    %115 = arith.mulf %110, %114 : vector<8x128xf32>
    %116 = tpu.concatenate %115, %86 in 1 : vector<8x128xf32>, vector<8x128xf32> -> vector<8x256xf32>
    %cst_50 = arith.constant dense<0.000000e+00> : vector<8x512xf32>
    %117 = tpu.matmul %116, %19, %cst_50 {dimension_numbers = #tpu.dot_dimension_numbers<[1], [0], [0], [1], [0, 0, 1, 1], [], []>} : vector<8x256xf32>, vector<256x512xf32>, vector<8x512xf32> -> vector<8x512xf32>
    %118 = vector.broadcast %20 : vector<1x512xf32> to vector<8x512xf32>
    %119 = arith.addf %117, %118 : vector<8x512xf32>
    %120 = vector.extract_strided_slice %119 {offsets = [0, 0], sizes = [8, 128], strides = [1, 1]} : vector<8x512xf32> to vector<8x128xf32>
    %121 = arith.negf %120 : vector<8x128xf32>
    %122 = math.exp %121 : vector<8x128xf32>
    %cst_51 = arith.constant 1.000000e+00 : f32
    %123 = vector.broadcast %cst_51 : f32 to vector<8x128xf32>
    %124 = arith.addf %123, %122 : vector<8x128xf32>
    %125 = arith.divf %123, %124 : vector<8x128xf32>
    %126 = vector.extract_strided_slice %119 {offsets = [0, 128], sizes = [8, 128], strides = [1, 1]} : vector<8x512xf32> to vector<8x128xf32>
    %127 = arith.negf %126 : vector<8x128xf32>
    %128 = math.exp %127 : vector<8x128xf32>
    %cst_52 = arith.constant 1.000000e+00 : f32
    %129 = vector.broadcast %cst_52 : f32 to vector<8x128xf32>
    %130 = arith.addf %129, %128 : vector<8x128xf32>
    %131 = arith.divf %129, %130 : vector<8x128xf32>
    %132 = vector.extract_strided_slice %119 {offsets = [0, 256], sizes = [8, 128], strides = [1, 1]} : vector<8x512xf32> to vector<8x128xf32>
    %133 = math.tanh %132 : vector<8x128xf32>
    %134 = vector.extract_strided_slice %119 {offsets = [0, 384], sizes = [8, 128], strides = [1, 1]} : vector<8x512xf32> to vector<8x128xf32>
    %135 = arith.negf %134 : vector<8x128xf32>
    %136 = math.exp %135 : vector<8x128xf32>
    %cst_53 = arith.constant 1.000000e+00 : f32
    %137 = vector.broadcast %cst_53 : f32 to vector<8x128xf32>
    %138 = arith.addf %137, %136 : vector<8x128xf32>
    %139 = arith.divf %137, %138 : vector<8x128xf32>
    %140 = arith.mulf %131, %84 : vector<8x128xf32>
    %141 = arith.mulf %125, %133 : vector<8x128xf32>
    %142 = arith.addf %140, %141 : vector<8x128xf32>
    %143 = math.tanh %142 : vector<8x128xf32>
    %144 = arith.mulf %139, %143 : vector<8x128xf32>
    %c2 = arith.constant 2 : index
    %c0_54 = arith.constant 0 : index
    %c0_55 = arith.constant 0 : index
    %145 = vector.load %arg14[%c2, %c0_54, %c0_55] : memref<8x8x512xf32, #tpu.memory_space<vmem>>, vector<1x8x512xf32>
    %146 = vector.shape_cast %145 : vector<1x8x512xf32> to vector<8x512xf32>
    %cst_56 = arith.constant dense<0.000000e+00> : vector<8x512xf32>
    %147 = tpu.matmul %115, %18, %cst_56 {dimension_numbers = #tpu.dot_dimension_numbers<[1], [0], [0], [1], [0, 0, 1, 1], [], []>} : vector<8x128xf32>, vector<128x512xf32>, vector<8x512xf32> -> vector<8x512xf32>
    %148 = arith.addf %146, %147 : vector<8x512xf32>
    %149 = vector.extract_strided_slice %148 {offsets = [0, 0], sizes = [8, 128], strides = [1, 1]} : vector<8x512xf32> to vector<8x128xf32>
    %150 = arith.negf %149 : vector<8x128xf32>
    %151 = math.exp %150 : vector<8x128xf32>
    %cst_57 = arith.constant 1.000000e+00 : f32
    %152 = vector.broadcast %cst_57 : f32 to vector<8x128xf32>
    %153 = arith.addf %152, %151 : vector<8x128xf32>
    %154 = arith.divf %152, %153 : vector<8x128xf32>
    %155 = vector.extract_strided_slice %148 {offsets = [0, 128], sizes = [8, 128], strides = [1, 1]} : vector<8x512xf32> to vector<8x128xf32>
    %156 = arith.negf %155 : vector<8x128xf32>
    %157 = math.exp %156 : vector<8x128xf32>
    %cst_58 = arith.constant 1.000000e+00 : f32
    %158 = vector.broadcast %cst_58 : f32 to vector<8x128xf32>
    %159 = arith.addf %158, %157 : vector<8x128xf32>
    %160 = arith.divf %158, %159 : vector<8x128xf32>
    %161 = vector.extract_strided_slice %148 {offsets = [0, 256], sizes = [8, 128], strides = [1, 1]} : vector<8x512xf32> to vector<8x128xf32>
    %162 = math.tanh %161 : vector<8x128xf32>
    %163 = vector.extract_strided_slice %148 {offsets = [0, 384], sizes = [8, 128], strides = [1, 1]} : vector<8x512xf32> to vector<8x128xf32>
    %164 = arith.negf %163 : vector<8x128xf32>
    %165 = math.exp %164 : vector<8x128xf32>
    %cst_59 = arith.constant 1.000000e+00 : f32
    %166 = vector.broadcast %cst_59 : f32 to vector<8x128xf32>
    %167 = arith.addf %166, %165 : vector<8x128xf32>
    %168 = arith.divf %166, %167 : vector<8x128xf32>
    %169 = arith.mulf %160, %113 : vector<8x128xf32>
    %170 = arith.mulf %154, %162 : vector<8x128xf32>
    %171 = arith.addf %169, %170 : vector<8x128xf32>
    %172 = math.tanh %171 : vector<8x128xf32>
    %173 = arith.mulf %168, %172 : vector<8x128xf32>
    %174 = tpu.concatenate %173, %144 in 1 : vector<8x128xf32>, vector<8x128xf32> -> vector<8x256xf32>
    %cst_60 = arith.constant dense<0.000000e+00> : vector<8x512xf32>
    %175 = tpu.matmul %174, %19, %cst_60 {dimension_numbers = #tpu.dot_dimension_numbers<[1], [0], [0], [1], [0, 0, 1, 1], [], []>} : vector<8x256xf32>, vector<256x512xf32>, vector<8x512xf32> -> vector<8x512xf32>
    %176 = vector.broadcast %20 : vector<1x512xf32> to vector<8x512xf32>
    %177 = arith.addf %175, %176 : vector<8x512xf32>
    %178 = vector.extract_strided_slice %177 {offsets = [0, 0], sizes = [8, 128], strides = [1, 1]} : vector<8x512xf32> to vector<8x128xf32>
    %179 = arith.negf %178 : vector<8x128xf32>
    %180 = math.exp %179 : vector<8x128xf32>
    %cst_61 = arith.constant 1.000000e+00 : f32
    %181 = vector.broadcast %cst_61 : f32 to vector<8x128xf32>
    %182 = arith.addf %181, %180 : vector<8x128xf32>
    %183 = arith.divf %181, %182 : vector<8x128xf32>
    %184 = vector.extract_strided_slice %177 {offsets = [0, 128], sizes = [8, 128], strides = [1, 1]} : vector<8x512xf32> to vector<8x128xf32>
    %185 = arith.negf %184 : vector<8x128xf32>
    %186 = math.exp %185 : vector<8x128xf32>
    %cst_62 = arith.constant 1.000000e+00 : f32
    %187 = vector.broadcast %cst_62 : f32 to vector<8x128xf32>
    %188 = arith.addf %187, %186 : vector<8x128xf32>
    %189 = arith.divf %187, %188 : vector<8x128xf32>
    %190 = vector.extract_strided_slice %177 {offsets = [0, 256], sizes = [8, 128], strides = [1, 1]} : vector<8x512xf32> to vector<8x128xf32>
    %191 = math.tanh %190 : vector<8x128xf32>
    %192 = vector.extract_strided_slice %177 {offsets = [0, 384], sizes = [8, 128], strides = [1, 1]} : vector<8x512xf32> to vector<8x128xf32>
    %193 = arith.negf %192 : vector<8x128xf32>
    %194 = math.exp %193 : vector<8x128xf32>
    %cst_63 = arith.constant 1.000000e+00 : f32
    %195 = vector.broadcast %cst_63 : f32 to vector<8x128xf32>
    %196 = arith.addf %195, %194 : vector<8x128xf32>
    %197 = arith.divf %195, %196 : vector<8x128xf32>
    %198 = arith.mulf %189, %142 : vector<8x128xf32>
    %199 = arith.mulf %183, %191 : vector<8x128xf32>
    %200 = arith.addf %198, %199 : vector<8x128xf32>
    %201 = math.tanh %200 : vector<8x128xf32>
    %202 = arith.mulf %197, %201 : vector<8x128xf32>
    %c3 = arith.constant 3 : index
    %c0_64 = arith.constant 0 : index
    %c0_65 = arith.constant 0 : index
    %203 = vector.load %arg14[%c3, %c0_64, %c0_65] : memref<8x8x512xf32, #tpu.memory_space<vmem>>, vector<1x8x512xf32>
    %204 = vector.shape_cast %203 : vector<1x8x512xf32> to vector<8x512xf32>
    %cst_66 = arith.constant dense<0.000000e+00> : vector<8x512xf32>
    %205 = tpu.matmul %173, %18, %cst_66 {dimension_numbers = #tpu.dot_dimension_numbers<[1], [0], [0], [1], [0, 0, 1, 1], [], []>} : vector<8x128xf32>, vector<128x512xf32>, vector<8x512xf32> -> vector<8x512xf32>
    %206 = arith.addf %204, %205 : vector<8x512xf32>
    %207 = vector.extract_strided_slice %206 {offsets = [0, 0], sizes = [8, 128], strides = [1, 1]} : vector<8x512xf32> to vector<8x128xf32>
    %208 = arith.negf %207 : vector<8x128xf32>
    %209 = math.exp %208 : vector<8x128xf32>
    %cst_67 = arith.constant 1.000000e+00 : f32
    %210 = vector.broadcast %cst_67 : f32 to vector<8x128xf32>
    %211 = arith.addf %210, %209 : vector<8x128xf32>
    %212 = arith.divf %210, %211 : vector<8x128xf32>
    %213 = vector.extract_strided_slice %206 {offsets = [0, 128], sizes = [8, 128], strides = [1, 1]} : vector<8x512xf32> to vector<8x128xf32>
    %214 = arith.negf %213 : vector<8x128xf32>
    %215 = math.exp %214 : vector<8x128xf32>
    %cst_68 = arith.constant 1.000000e+00 : f32
    %216 = vector.broadcast %cst_68 : f32 to vector<8x128xf32>
    %217 = arith.addf %216, %215 : vector<8x128xf32>
    %218 = arith.divf %216, %217 : vector<8x128xf32>
    %219 = vector.extract_strided_slice %206 {offsets = [0, 256], sizes = [8, 128], strides = [1, 1]} : vector<8x512xf32> to vector<8x128xf32>
    %220 = math.tanh %219 : vector<8x128xf32>
    %221 = vector.extract_strided_slice %206 {offsets = [0, 384], sizes = [8, 128], strides = [1, 1]} : vector<8x512xf32> to vector<8x128xf32>
    %222 = arith.negf %221 : vector<8x128xf32>
    %223 = math.exp %222 : vector<8x128xf32>
    %cst_69 = arith.constant 1.000000e+00 : f32
    %224 = vector.broadcast %cst_69 : f32 to vector<8x128xf32>
    %225 = arith.addf %224, %223 : vector<8x128xf32>
    %226 = arith.divf %224, %225 : vector<8x128xf32>
    %227 = arith.mulf %218, %171 : vector<8x128xf32>
    %228 = arith.mulf %212, %220 : vector<8x128xf32>
    %229 = arith.addf %227, %228 : vector<8x128xf32>
    %230 = math.tanh %229 : vector<8x128xf32>
    %231 = arith.mulf %226, %230 : vector<8x128xf32>
    %232 = tpu.concatenate %231, %202 in 1 : vector<8x128xf32>, vector<8x128xf32> -> vector<8x256xf32>
    %cst_70 = arith.constant dense<0.000000e+00> : vector<8x512xf32>
    %233 = tpu.matmul %232, %19, %cst_70 {dimension_numbers = #tpu.dot_dimension_numbers<[1], [0], [0], [1], [0, 0, 1, 1], [], []>} : vector<8x256xf32>, vector<256x512xf32>, vector<8x512xf32> -> vector<8x512xf32>
    %234 = vector.broadcast %20 : vector<1x512xf32> to vector<8x512xf32>
    %235 = arith.addf %233, %234 : vector<8x512xf32>
    %236 = vector.extract_strided_slice %235 {offsets = [0, 0], sizes = [8, 128], strides = [1, 1]} : vector<8x512xf32> to vector<8x128xf32>
    %237 = arith.negf %236 : vector<8x128xf32>
    %238 = math.exp %237 : vector<8x128xf32>
    %cst_71 = arith.constant 1.000000e+00 : f32
    %239 = vector.broadcast %cst_71 : f32 to vector<8x128xf32>
    %240 = arith.addf %239, %238 : vector<8x128xf32>
    %241 = arith.divf %239, %240 : vector<8x128xf32>
    %242 = vector.extract_strided_slice %235 {offsets = [0, 128], sizes = [8, 128], strides = [1, 1]} : vector<8x512xf32> to vector<8x128xf32>
    %243 = arith.negf %242 : vector<8x128xf32>
    %244 = math.exp %243 : vector<8x128xf32>
    %cst_72 = arith.constant 1.000000e+00 : f32
    %245 = vector.broadcast %cst_72 : f32 to vector<8x128xf32>
    %246 = arith.addf %245, %244 : vector<8x128xf32>
    %247 = arith.divf %245, %246 : vector<8x128xf32>
    %248 = vector.extract_strided_slice %235 {offsets = [0, 256], sizes = [8, 128], strides = [1, 1]} : vector<8x512xf32> to vector<8x128xf32>
    %249 = math.tanh %248 : vector<8x128xf32>
    %250 = vector.extract_strided_slice %235 {offsets = [0, 384], sizes = [8, 128], strides = [1, 1]} : vector<8x512xf32> to vector<8x128xf32>
    %251 = arith.negf %250 : vector<8x128xf32>
    %252 = math.exp %251 : vector<8x128xf32>
    %cst_73 = arith.constant 1.000000e+00 : f32
    %253 = vector.broadcast %cst_73 : f32 to vector<8x128xf32>
    %254 = arith.addf %253, %252 : vector<8x128xf32>
    %255 = arith.divf %253, %254 : vector<8x128xf32>
    %256 = arith.mulf %247, %200 : vector<8x128xf32>
    %257 = arith.mulf %241, %249 : vector<8x128xf32>
    %258 = arith.addf %256, %257 : vector<8x128xf32>
    %259 = math.tanh %258 : vector<8x128xf32>
    %260 = arith.mulf %255, %259 : vector<8x128xf32>
    %c4 = arith.constant 4 : index
    %c0_74 = arith.constant 0 : index
    %c0_75 = arith.constant 0 : index
    %261 = vector.load %arg14[%c4, %c0_74, %c0_75] : memref<8x8x512xf32, #tpu.memory_space<vmem>>, vector<1x8x512xf32>
    %262 = vector.shape_cast %261 : vector<1x8x512xf32> to vector<8x512xf32>
    %cst_76 = arith.constant dense<0.000000e+00> : vector<8x512xf32>
    %263 = tpu.matmul %231, %18, %cst_76 {dimension_numbers = #tpu.dot_dimension_numbers<[1], [0], [0], [1], [0, 0, 1, 1], [], []>} : vector<8x128xf32>, vector<128x512xf32>, vector<8x512xf32> -> vector<8x512xf32>
    %264 = arith.addf %262, %263 : vector<8x512xf32>
    %265 = vector.extract_strided_slice %264 {offsets = [0, 0], sizes = [8, 128], strides = [1, 1]} : vector<8x512xf32> to vector<8x128xf32>
    %266 = arith.negf %265 : vector<8x128xf32>
    %267 = math.exp %266 : vector<8x128xf32>
    %cst_77 = arith.constant 1.000000e+00 : f32
    %268 = vector.broadcast %cst_77 : f32 to vector<8x128xf32>
    %269 = arith.addf %268, %267 : vector<8x128xf32>
    %270 = arith.divf %268, %269 : vector<8x128xf32>
    %271 = vector.extract_strided_slice %264 {offsets = [0, 128], sizes = [8, 128], strides = [1, 1]} : vector<8x512xf32> to vector<8x128xf32>
    %272 = arith.negf %271 : vector<8x128xf32>
    %273 = math.exp %272 : vector<8x128xf32>
    %cst_78 = arith.constant 1.000000e+00 : f32
    %274 = vector.broadcast %cst_78 : f32 to vector<8x128xf32>
    %275 = arith.addf %274, %273 : vector<8x128xf32>
    %276 = arith.divf %274, %275 : vector<8x128xf32>
    %277 = vector.extract_strided_slice %264 {offsets = [0, 256], sizes = [8, 128], strides = [1, 1]} : vector<8x512xf32> to vector<8x128xf32>
    %278 = math.tanh %277 : vector<8x128xf32>
    %279 = vector.extract_strided_slice %264 {offsets = [0, 384], sizes = [8, 128], strides = [1, 1]} : vector<8x512xf32> to vector<8x128xf32>
    %280 = arith.negf %279 : vector<8x128xf32>
    %281 = math.exp %280 : vector<8x128xf32>
    %cst_79 = arith.constant 1.000000e+00 : f32
    %282 = vector.broadcast %cst_79 : f32 to vector<8x128xf32>
    %283 = arith.addf %282, %281 : vector<8x128xf32>
    %284 = arith.divf %282, %283 : vector<8x128xf32>
    %285 = arith.mulf %276, %229 : vector<8x128xf32>
    %286 = arith.mulf %270, %278 : vector<8x128xf32>
    %287 = arith.addf %285, %286 : vector<8x128xf32>
    %288 = math.tanh %287 : vector<8x128xf32>
    %289 = arith.mulf %284, %288 : vector<8x128xf32>
    %290 = tpu.concatenate %289, %260 in 1 : vector<8x128xf32>, vector<8x128xf32> -> vector<8x256xf32>
    %cst_80 = arith.constant dense<0.000000e+00> : vector<8x512xf32>
    %291 = tpu.matmul %290, %19, %cst_80 {dimension_numbers = #tpu.dot_dimension_numbers<[1], [0], [0], [1], [0, 0, 1, 1], [], []>} : vector<8x256xf32>, vector<256x512xf32>, vector<8x512xf32> -> vector<8x512xf32>
    %292 = vector.broadcast %20 : vector<1x512xf32> to vector<8x512xf32>
    %293 = arith.addf %291, %292 : vector<8x512xf32>
    %294 = vector.extract_strided_slice %293 {offsets = [0, 0], sizes = [8, 128], strides = [1, 1]} : vector<8x512xf32> to vector<8x128xf32>
    %295 = arith.negf %294 : vector<8x128xf32>
    %296 = math.exp %295 : vector<8x128xf32>
    %cst_81 = arith.constant 1.000000e+00 : f32
    %297 = vector.broadcast %cst_81 : f32 to vector<8x128xf32>
    %298 = arith.addf %297, %296 : vector<8x128xf32>
    %299 = arith.divf %297, %298 : vector<8x128xf32>
    %300 = vector.extract_strided_slice %293 {offsets = [0, 128], sizes = [8, 128], strides = [1, 1]} : vector<8x512xf32> to vector<8x128xf32>
    %301 = arith.negf %300 : vector<8x128xf32>
    %302 = math.exp %301 : vector<8x128xf32>
    %cst_82 = arith.constant 1.000000e+00 : f32
    %303 = vector.broadcast %cst_82 : f32 to vector<8x128xf32>
    %304 = arith.addf %303, %302 : vector<8x128xf32>
    %305 = arith.divf %303, %304 : vector<8x128xf32>
    %306 = vector.extract_strided_slice %293 {offsets = [0, 256], sizes = [8, 128], strides = [1, 1]} : vector<8x512xf32> to vector<8x128xf32>
    %307 = math.tanh %306 : vector<8x128xf32>
    %308 = vector.extract_strided_slice %293 {offsets = [0, 384], sizes = [8, 128], strides = [1, 1]} : vector<8x512xf32> to vector<8x128xf32>
    %309 = arith.negf %308 : vector<8x128xf32>
    %310 = math.exp %309 : vector<8x128xf32>
    %cst_83 = arith.constant 1.000000e+00 : f32
    %311 = vector.broadcast %cst_83 : f32 to vector<8x128xf32>
    %312 = arith.addf %311, %310 : vector<8x128xf32>
    %313 = arith.divf %311, %312 : vector<8x128xf32>
    %314 = arith.mulf %305, %258 : vector<8x128xf32>
    %315 = arith.mulf %299, %307 : vector<8x128xf32>
    %316 = arith.addf %314, %315 : vector<8x128xf32>
    %317 = math.tanh %316 : vector<8x128xf32>
    %318 = arith.mulf %313, %317 : vector<8x128xf32>
    %c5 = arith.constant 5 : index
    %c0_84 = arith.constant 0 : index
    %c0_85 = arith.constant 0 : index
    %319 = vector.load %arg14[%c5, %c0_84, %c0_85] : memref<8x8x512xf32, #tpu.memory_space<vmem>>, vector<1x8x512xf32>
    %320 = vector.shape_cast %319 : vector<1x8x512xf32> to vector<8x512xf32>
    %cst_86 = arith.constant dense<0.000000e+00> : vector<8x512xf32>
    %321 = tpu.matmul %289, %18, %cst_86 {dimension_numbers = #tpu.dot_dimension_numbers<[1], [0], [0], [1], [0, 0, 1, 1], [], []>} : vector<8x128xf32>, vector<128x512xf32>, vector<8x512xf32> -> vector<8x512xf32>
    %322 = arith.addf %320, %321 : vector<8x512xf32>
    %323 = vector.extract_strided_slice %322 {offsets = [0, 0], sizes = [8, 128], strides = [1, 1]} : vector<8x512xf32> to vector<8x128xf32>
    %324 = arith.negf %323 : vector<8x128xf32>
    %325 = math.exp %324 : vector<8x128xf32>
    %cst_87 = arith.constant 1.000000e+00 : f32
    %326 = vector.broadcast %cst_87 : f32 to vector<8x128xf32>
    %327 = arith.addf %326, %325 : vector<8x128xf32>
    %328 = arith.divf %326, %327 : vector<8x128xf32>
    %329 = vector.extract_strided_slice %322 {offsets = [0, 128], sizes = [8, 128], strides = [1, 1]} : vector<8x512xf32> to vector<8x128xf32>
    %330 = arith.negf %329 : vector<8x128xf32>
    %331 = math.exp %330 : vector<8x128xf32>
    %cst_88 = arith.constant 1.000000e+00 : f32
    %332 = vector.broadcast %cst_88 : f32 to vector<8x128xf32>
    %333 = arith.addf %332, %331 : vector<8x128xf32>
    %334 = arith.divf %332, %333 : vector<8x128xf32>
    %335 = vector.extract_strided_slice %322 {offsets = [0, 256], sizes = [8, 128], strides = [1, 1]} : vector<8x512xf32> to vector<8x128xf32>
    %336 = math.tanh %335 : vector<8x128xf32>
    %337 = vector.extract_strided_slice %322 {offsets = [0, 384], sizes = [8, 128], strides = [1, 1]} : vector<8x512xf32> to vector<8x128xf32>
    %338 = arith.negf %337 : vector<8x128xf32>
    %339 = math.exp %338 : vector<8x128xf32>
    %cst_89 = arith.constant 1.000000e+00 : f32
    %340 = vector.broadcast %cst_89 : f32 to vector<8x128xf32>
    %341 = arith.addf %340, %339 : vector<8x128xf32>
    %342 = arith.divf %340, %341 : vector<8x128xf32>
    %343 = arith.mulf %334, %287 : vector<8x128xf32>
    %344 = arith.mulf %328, %336 : vector<8x128xf32>
    %345 = arith.addf %343, %344 : vector<8x128xf32>
    %346 = math.tanh %345 : vector<8x128xf32>
    %347 = arith.mulf %342, %346 : vector<8x128xf32>
    %348 = tpu.concatenate %347, %318 in 1 : vector<8x128xf32>, vector<8x128xf32> -> vector<8x256xf32>
    %cst_90 = arith.constant dense<0.000000e+00> : vector<8x512xf32>
    %349 = tpu.matmul %348, %19, %cst_90 {dimension_numbers = #tpu.dot_dimension_numbers<[1], [0], [0], [1], [0, 0, 1, 1], [], []>} : vector<8x256xf32>, vector<256x512xf32>, vector<8x512xf32> -> vector<8x512xf32>
    %350 = vector.broadcast %20 : vector<1x512xf32> to vector<8x512xf32>
    %351 = arith.addf %349, %350 : vector<8x512xf32>
    %352 = vector.extract_strided_slice %351 {offsets = [0, 0], sizes = [8, 128], strides = [1, 1]} : vector<8x512xf32> to vector<8x128xf32>
    %353 = arith.negf %352 : vector<8x128xf32>
    %354 = math.exp %353 : vector<8x128xf32>
    %cst_91 = arith.constant 1.000000e+00 : f32
    %355 = vector.broadcast %cst_91 : f32 to vector<8x128xf32>
    %356 = arith.addf %355, %354 : vector<8x128xf32>
    %357 = arith.divf %355, %356 : vector<8x128xf32>
    %358 = vector.extract_strided_slice %351 {offsets = [0, 128], sizes = [8, 128], strides = [1, 1]} : vector<8x512xf32> to vector<8x128xf32>
    %359 = arith.negf %358 : vector<8x128xf32>
    %360 = math.exp %359 : vector<8x128xf32>
    %cst_92 = arith.constant 1.000000e+00 : f32
    %361 = vector.broadcast %cst_92 : f32 to vector<8x128xf32>
    %362 = arith.addf %361, %360 : vector<8x128xf32>
    %363 = arith.divf %361, %362 : vector<8x128xf32>
    %364 = vector.extract_strided_slice %351 {offsets = [0, 256], sizes = [8, 128], strides = [1, 1]} : vector<8x512xf32> to vector<8x128xf32>
    %365 = math.tanh %364 : vector<8x128xf32>
    %366 = vector.extract_strided_slice %351 {offsets = [0, 384], sizes = [8, 128], strides = [1, 1]} : vector<8x512xf32> to vector<8x128xf32>
    %367 = arith.negf %366 : vector<8x128xf32>
    %368 = math.exp %367 : vector<8x128xf32>
    %cst_93 = arith.constant 1.000000e+00 : f32
    %369 = vector.broadcast %cst_93 : f32 to vector<8x128xf32>
    %370 = arith.addf %369, %368 : vector<8x128xf32>
    %371 = arith.divf %369, %370 : vector<8x128xf32>
    %372 = arith.mulf %363, %316 : vector<8x128xf32>
    %373 = arith.mulf %357, %365 : vector<8x128xf32>
    %374 = arith.addf %372, %373 : vector<8x128xf32>
    %375 = math.tanh %374 : vector<8x128xf32>
    %376 = arith.mulf %371, %375 : vector<8x128xf32>
    %c6 = arith.constant 6 : index
    %c0_94 = arith.constant 0 : index
    %c0_95 = arith.constant 0 : index
    %377 = vector.load %arg14[%c6, %c0_94, %c0_95] : memref<8x8x512xf32, #tpu.memory_space<vmem>>, vector<1x8x512xf32>
    %378 = vector.shape_cast %377 : vector<1x8x512xf32> to vector<8x512xf32>
    %cst_96 = arith.constant dense<0.000000e+00> : vector<8x512xf32>
    %379 = tpu.matmul %347, %18, %cst_96 {dimension_numbers = #tpu.dot_dimension_numbers<[1], [0], [0], [1], [0, 0, 1, 1], [], []>} : vector<8x128xf32>, vector<128x512xf32>, vector<8x512xf32> -> vector<8x512xf32>
    %380 = arith.addf %378, %379 : vector<8x512xf32>
    %381 = vector.extract_strided_slice %380 {offsets = [0, 0], sizes = [8, 128], strides = [1, 1]} : vector<8x512xf32> to vector<8x128xf32>
    %382 = arith.negf %381 : vector<8x128xf32>
    %383 = math.exp %382 : vector<8x128xf32>
    %cst_97 = arith.constant 1.000000e+00 : f32
    %384 = vector.broadcast %cst_97 : f32 to vector<8x128xf32>
    %385 = arith.addf %384, %383 : vector<8x128xf32>
    %386 = arith.divf %384, %385 : vector<8x128xf32>
    %387 = vector.extract_strided_slice %380 {offsets = [0, 128], sizes = [8, 128], strides = [1, 1]} : vector<8x512xf32> to vector<8x128xf32>
    %388 = arith.negf %387 : vector<8x128xf32>
    %389 = math.exp %388 : vector<8x128xf32>
    %cst_98 = arith.constant 1.000000e+00 : f32
    %390 = vector.broadcast %cst_98 : f32 to vector<8x128xf32>
    %391 = arith.addf %390, %389 : vector<8x128xf32>
    %392 = arith.divf %390, %391 : vector<8x128xf32>
    %393 = vector.extract_strided_slice %380 {offsets = [0, 256], sizes = [8, 128], strides = [1, 1]} : vector<8x512xf32> to vector<8x128xf32>
    %394 = math.tanh %393 : vector<8x128xf32>
    %395 = vector.extract_strided_slice %380 {offsets = [0, 384], sizes = [8, 128], strides = [1, 1]} : vector<8x512xf32> to vector<8x128xf32>
    %396 = arith.negf %395 : vector<8x128xf32>
    %397 = math.exp %396 : vector<8x128xf32>
    %cst_99 = arith.constant 1.000000e+00 : f32
    %398 = vector.broadcast %cst_99 : f32 to vector<8x128xf32>
    %399 = arith.addf %398, %397 : vector<8x128xf32>
    %400 = arith.divf %398, %399 : vector<8x128xf32>
    %401 = arith.mulf %392, %345 : vector<8x128xf32>
    %402 = arith.mulf %386, %394 : vector<8x128xf32>
    %403 = arith.addf %401, %402 : vector<8x128xf32>
    %404 = math.tanh %403 : vector<8x128xf32>
    %405 = arith.mulf %400, %404 : vector<8x128xf32>
    %406 = tpu.concatenate %405, %376 in 1 : vector<8x128xf32>, vector<8x128xf32> -> vector<8x256xf32>
    %cst_100 = arith.constant dense<0.000000e+00> : vector<8x512xf32>
    %407 = tpu.matmul %406, %19, %cst_100 {dimension_numbers = #tpu.dot_dimension_numbers<[1], [0], [0], [1], [0, 0, 1, 1], [], []>} : vector<8x256xf32>, vector<256x512xf32>, vector<8x512xf32> -> vector<8x512xf32>
    %408 = vector.broadcast %20 : vector<1x512xf32> to vector<8x512xf32>
    %409 = arith.addf %407, %408 : vector<8x512xf32>
    %410 = vector.extract_strided_slice %409 {offsets = [0, 0], sizes = [8, 128], strides = [1, 1]} : vector<8x512xf32> to vector<8x128xf32>
    %411 = arith.negf %410 : vector<8x128xf32>
    %412 = math.exp %411 : vector<8x128xf32>
    %cst_101 = arith.constant 1.000000e+00 : f32
    %413 = vector.broadcast %cst_101 : f32 to vector<8x128xf32>
    %414 = arith.addf %413, %412 : vector<8x128xf32>
    %415 = arith.divf %413, %414 : vector<8x128xf32>
    %416 = vector.extract_strided_slice %409 {offsets = [0, 128], sizes = [8, 128], strides = [1, 1]} : vector<8x512xf32> to vector<8x128xf32>
    %417 = arith.negf %416 : vector<8x128xf32>
    %418 = math.exp %417 : vector<8x128xf32>
    %cst_102 = arith.constant 1.000000e+00 : f32
    %419 = vector.broadcast %cst_102 : f32 to vector<8x128xf32>
    %420 = arith.addf %419, %418 : vector<8x128xf32>
    %421 = arith.divf %419, %420 : vector<8x128xf32>
    %422 = vector.extract_strided_slice %409 {offsets = [0, 256], sizes = [8, 128], strides = [1, 1]} : vector<8x512xf32> to vector<8x128xf32>
    %423 = math.tanh %422 : vector<8x128xf32>
    %424 = vector.extract_strided_slice %409 {offsets = [0, 384], sizes = [8, 128], strides = [1, 1]} : vector<8x512xf32> to vector<8x128xf32>
    %425 = arith.negf %424 : vector<8x128xf32>
    %426 = math.exp %425 : vector<8x128xf32>
    %cst_103 = arith.constant 1.000000e+00 : f32
    %427 = vector.broadcast %cst_103 : f32 to vector<8x128xf32>
    %428 = arith.addf %427, %426 : vector<8x128xf32>
    %429 = arith.divf %427, %428 : vector<8x128xf32>
    %430 = arith.mulf %421, %374 : vector<8x128xf32>
    %431 = arith.mulf %415, %423 : vector<8x128xf32>
    %432 = arith.addf %430, %431 : vector<8x128xf32>
    %433 = math.tanh %432 : vector<8x128xf32>
    %434 = arith.mulf %429, %433 : vector<8x128xf32>
    %c7 = arith.constant 7 : index
    %c0_104 = arith.constant 0 : index
    %c0_105 = arith.constant 0 : index
    %435 = vector.load %arg14[%c7, %c0_104, %c0_105] : memref<8x8x512xf32, #tpu.memory_space<vmem>>, vector<1x8x512xf32>
    %436 = vector.shape_cast %435 : vector<1x8x512xf32> to vector<8x512xf32>
    %cst_106 = arith.constant dense<0.000000e+00> : vector<8x512xf32>
    %437 = tpu.matmul %405, %18, %cst_106 {dimension_numbers = #tpu.dot_dimension_numbers<[1], [0], [0], [1], [0, 0, 1, 1], [], []>} : vector<8x128xf32>, vector<128x512xf32>, vector<8x512xf32> -> vector<8x512xf32>
    %438 = arith.addf %436, %437 : vector<8x512xf32>
    %439 = vector.extract_strided_slice %438 {offsets = [0, 0], sizes = [8, 128], strides = [1, 1]} : vector<8x512xf32> to vector<8x128xf32>
    %440 = arith.negf %439 : vector<8x128xf32>
    %441 = math.exp %440 : vector<8x128xf32>
    %cst_107 = arith.constant 1.000000e+00 : f32
    %442 = vector.broadcast %cst_107 : f32 to vector<8x128xf32>
    %443 = arith.addf %442, %441 : vector<8x128xf32>
    %444 = arith.divf %442, %443 : vector<8x128xf32>
    %445 = vector.extract_strided_slice %438 {offsets = [0, 128], sizes = [8, 128], strides = [1, 1]} : vector<8x512xf32> to vector<8x128xf32>
    %446 = arith.negf %445 : vector<8x128xf32>
    %447 = math.exp %446 : vector<8x128xf32>
    %cst_108 = arith.constant 1.000000e+00 : f32
    %448 = vector.broadcast %cst_108 : f32 to vector<8x128xf32>
    %449 = arith.addf %448, %447 : vector<8x128xf32>
    %450 = arith.divf %448, %449 : vector<8x128xf32>
    %451 = vector.extract_strided_slice %438 {offsets = [0, 256], sizes = [8, 128], strides = [1, 1]} : vector<8x512xf32> to vector<8x128xf32>
    %452 = math.tanh %451 : vector<8x128xf32>
    %453 = vector.extract_strided_slice %438 {offsets = [0, 384], sizes = [8, 128], strides = [1, 1]} : vector<8x512xf32> to vector<8x128xf32>
    %454 = arith.negf %453 : vector<8x128xf32>
    %455 = math.exp %454 : vector<8x128xf32>
    %cst_109 = arith.constant 1.000000e+00 : f32
    %456 = vector.broadcast %cst_109 : f32 to vector<8x128xf32>
    %457 = arith.addf %456, %455 : vector<8x128xf32>
    %458 = arith.divf %456, %457 : vector<8x128xf32>
    %459 = arith.mulf %450, %403 : vector<8x128xf32>
    %460 = arith.mulf %444, %452 : vector<8x128xf32>
    %461 = arith.addf %459, %460 : vector<8x128xf32>
    %462 = math.tanh %461 : vector<8x128xf32>
    %463 = arith.mulf %458, %462 : vector<8x128xf32>
    %464 = tpu.concatenate %463, %434 in 1 : vector<8x128xf32>, vector<8x128xf32> -> vector<8x256xf32>
    %cst_110 = arith.constant dense<0.000000e+00> : vector<8x512xf32>
    %465 = tpu.matmul %464, %19, %cst_110 {dimension_numbers = #tpu.dot_dimension_numbers<[1], [0], [0], [1], [0, 0, 1, 1], [], []>} : vector<8x256xf32>, vector<256x512xf32>, vector<8x512xf32> -> vector<8x512xf32>
    %466 = vector.broadcast %20 : vector<1x512xf32> to vector<8x512xf32>
    %467 = arith.addf %465, %466 : vector<8x512xf32>
    %468 = vector.extract_strided_slice %467 {offsets = [0, 0], sizes = [8, 128], strides = [1, 1]} : vector<8x512xf32> to vector<8x128xf32>
    %469 = arith.negf %468 : vector<8x128xf32>
    %470 = math.exp %469 : vector<8x128xf32>
    %cst_111 = arith.constant 1.000000e+00 : f32
    %471 = vector.broadcast %cst_111 : f32 to vector<8x128xf32>
    %472 = arith.addf %471, %470 : vector<8x128xf32>
    %473 = arith.divf %471, %472 : vector<8x128xf32>
    %474 = vector.extract_strided_slice %467 {offsets = [0, 128], sizes = [8, 128], strides = [1, 1]} : vector<8x512xf32> to vector<8x128xf32>
    %475 = arith.negf %474 : vector<8x128xf32>
    %476 = math.exp %475 : vector<8x128xf32>
    %cst_112 = arith.constant 1.000000e+00 : f32
    %477 = vector.broadcast %cst_112 : f32 to vector<8x128xf32>
    %478 = arith.addf %477, %476 : vector<8x128xf32>
    %479 = arith.divf %477, %478 : vector<8x128xf32>
    %480 = vector.extract_strided_slice %467 {offsets = [0, 256], sizes = [8, 128], strides = [1, 1]} : vector<8x512xf32> to vector<8x128xf32>
    %481 = math.tanh %480 : vector<8x128xf32>
    %482 = vector.extract_strided_slice %467 {offsets = [0, 384], sizes = [8, 128], strides = [1, 1]} : vector<8x512xf32> to vector<8x128xf32>
    %483 = arith.negf %482 : vector<8x128xf32>
    %484 = math.exp %483 : vector<8x128xf32>
    %cst_113 = arith.constant 1.000000e+00 : f32
    %485 = vector.broadcast %cst_113 : f32 to vector<8x128xf32>
    %486 = arith.addf %485, %484 : vector<8x128xf32>
    %487 = arith.divf %485, %486 : vector<8x128xf32>
    %488 = arith.mulf %479, %432 : vector<8x128xf32>
    %489 = arith.mulf %473, %481 : vector<8x128xf32>
    %490 = arith.addf %488, %489 : vector<8x128xf32>
    %491 = math.tanh %490 : vector<8x128xf32>
    %492 = arith.mulf %487, %491 : vector<8x128xf32>
    %c0_114 = arith.constant 0 : index
    %c0_115 = arith.constant 0 : index
    %493 = vector.load %arg11[%c0_114, %c0_115] : memref<128x21xf32, #tpu.memory_space<vmem>>, vector<128x21xf32>
    %cst_116 = arith.constant dense<0.000000e+00> : vector<8x21xf32>
    %494 = tpu.matmul %492, %493, %cst_116 {dimension_numbers = #tpu.dot_dimension_numbers<[1], [0], [0], [1], [0, 0, 1, 1], [], []>} : vector<8x128xf32>, vector<128x21xf32>, vector<8x21xf32> -> vector<8x21xf32>
    %c0_117 = arith.constant 0 : index
    %c0_118 = arith.constant 0 : index
    %495 = vector.load %arg12[%c0_117, %c0_118] : memref<1x21xf32, #tpu.memory_space<vmem>>, vector<1x21xf32>
    %496 = vector.broadcast %495 : vector<1x21xf32> to vector<8x21xf32>
    %497 = arith.addf %494, %496 : vector<8x21xf32>
    %cst_119 = arith.constant dense<0xFF800000> : vector<8xf32>
    %498 = vector.multi_reduction <maximumf>, %497, %cst_119 [1] : vector<8x21xf32> to vector<8xf32>
    %cst_120 = arith.constant 0xFF800000 : f32
    %499 = vector.broadcast %cst_120 : f32 to vector<8xf32>
    %500 = arith.maximumf %499, %498 : vector<8xf32>
    %501 = vector.shape_cast %500 : vector<8xf32> to vector<8x1xf32>
    %502 = vector.broadcast %501 : vector<8x1xf32> to vector<8x21xf32>
    %503 = arith.subf %497, %502 : vector<8x21xf32>
    %504 = math.exp %503 : vector<8x21xf32>
    %cst_121 = arith.constant dense<0.000000e+00> : vector<8xf32>
    %505 = vector.multi_reduction <add>, %504, %cst_121 [1] : vector<8x21xf32> to vector<8xf32>
    %506 = vector.shape_cast %505 : vector<8xf32> to vector<8x1xf32>
    %507 = math.log %506 : vector<8x1xf32>
    %508 = vector.broadcast %507 : vector<8x1xf32> to vector<8x21xf32>
    %509 = arith.subf %503, %508 : vector<8x21xf32>
    %c0_122 = arith.constant 0 : index
    %c0_123 = arith.constant 0 : index
    %510 = vector.load %arg13[%c0_122, %c0_123] : memref<8x21xf32, #tpu.memory_space<vmem>>, vector<8x21xf32>
    tpu.vector_store %arg13[%c0_122, %c0_123], %509 {strides = array<i32>} : memref<8x21xf32, #tpu.memory_space<vmem>>, vector<8x21xf32>,
    return
  }
  func.func @transform_0(%arg0: i32) -> (i32, i32, i32) {
    %c0_i32 = arith.constant 0 : i32
    %c0_i32_0 = arith.constant 0 : i32
    %c0_i32_1 = arith.constant 0 : i32
    return %c0_i32, %arg0, %c0_i32_0 : i32, i32, i32
  }
  func.func @transform_1(%arg0: i32) -> (i32, i32) {
    %c0_i32 = arith.constant 0 : i32
    %c0_i32_0 = arith.constant 0 : i32
    %c0_i32_1 = arith.constant 0 : i32
    return %c0_i32, %c0_i32_0 : i32, i32
  }
  func.func @transform_2(%arg0: i32) -> (i32, i32) {
    %c0_i32 = arith.constant 0 : i32
    %c0_i32_0 = arith.constant 0 : i32
    %c0_i32_1 = arith.constant 0 : i32
    return %c0_i32, %c0_i32_0 : i32, i32
  }
  func.func @transform_3(%arg0: i32) -> (i32, i32) {
    %c0_i32 = arith.constant 0 : i32
    %c0_i32_0 = arith.constant 0 : i32
    %c0_i32_1 = arith.constant 0 : i32
    return %c0_i32, %c0_i32_0 : i32, i32
  }
  func.func @transform_4(%arg0: i32) -> (i32, i32) {
    %c0_i32 = arith.constant 0 : i32
    %c0_i32_0 = arith.constant 0 : i32
    %c0_i32_1 = arith.constant 0 : i32
    return %c0_i32, %c0_i32_0 : i32, i32
  }
  func.func @transform_5(%arg0: i32) -> (i32, i32) {
    %c0_i32 = arith.constant 0 : i32
    %c0_i32_0 = arith.constant 0 : i32
    %c0_i32_1 = arith.constant 0 : i32
    return %c0_i32, %c0_i32_0 : i32, i32
  }
  func.func @transform_6(%arg0: i32) -> (i32, i32) {
    %c0_i32 = arith.constant 0 : i32
    %c0_i32_0 = arith.constant 0 : i32
    %c0_i32_1 = arith.constant 0 : i32
    return %c0_i32, %c0_i32_0 : i32, i32
  }
  func.func @transform_7(%arg0: i32) -> (i32, i32) {
    %c0_i32 = arith.constant 0 : i32
    %c0_i32_0 = arith.constant 0 : i32
    %c0_i32_1 = arith.constant 0 : i32
    return %c0_i32, %c0_i32_0 : i32, i32
  }
  func.func @transform_8(%arg0: i32) -> (i32, i32, i32) {
    %c0_i32 = arith.constant 0 : i32
    %c0_i32_0 = arith.constant 0 : i32
    %c0_i32_1 = arith.constant 0 : i32
    return %c0_i32, %arg0, %c0_i32_0 : i32, i32, i32
  }
  func.func @transform_9(%arg0: i32) -> (i32, i32, i32) {
    %c0_i32 = arith.constant 0 : i32
    %c0_i32_0 = arith.constant 0 : i32
    %c0_i32_1 = arith.constant 0 : i32
    return %c0_i32, %arg0, %c0_i32_0 : i32, i32, i32
  }
  func.func @transform_10(%arg0: i32) -> (i32, i32) {
    %c0_i32 = arith.constant 0 : i32
    %c0_i32_0 = arith.constant 0 : i32
    %c0_i32_1 = arith.constant 0 : i32
    return %c0_i32, %c0_i32_0 : i32, i32
  }
  func.func @transform_11(%arg0: i32) -> (i32, i32) {
    %c0_i32 = arith.constant 0 : i32
    %c0_i32_0 = arith.constant 0 : i32
    %c0_i32_1 = arith.constant 0 : i32
    return %c0_i32, %c0_i32_0 : i32, i32
  }
  func.func @transform_12(%arg0: i32) -> (i32, i32) {
    %c0_i32 = arith.constant 0 : i32
    %c0_i32_0 = arith.constant 0 : i32
    return %arg0, %c0_i32 : i32, i32
  }
}

</mosaic_0001>

<llo_original>
// kernel: mlp_lstm_forward.1
$region0: #{mlp_lstm_forward.1}
  #allocation0 [shape = 'u32[]', space=smem, size = 0x4, offset = 0x4, fixed_abs, tag = 'smem constant byte address 0x4 - core index']
  #allocation1 [shape = 'u32[144,128]{1,0:T(1,128)}', space=vmem, size = 0x12000, scoped, tag = 'internal scratch']
  #allocation2 [shape = 'f32[8,8,512]{2,1,0:T(8,128)}', space=vmem, size = 0x20000, scoped, tag = 'scratch operand']
  %s0 = inlined_call_operand.vmem [shape: f32[8,8,24], index: 0, kind: input, shape index: {}]
  %s1 = inlined_call_operand.vmem [shape: bf16[24,100], index: 1, kind: input, shape index: {}]
  %s2 = inlined_call_operand.vmem [shape: f32[1,100], index: 2, kind: input, shape index: {}]
  %s3 = inlined_call_operand.vmem [shape: bf16[100,512], index: 3, kind: input, shape index: {}]
  %s4 = inlined_call_operand.vmem [shape: f32[1,512], index: 4, kind: input, shape index: {}]
  %s5 = inlined_call_operand.vmem [shape: f32[128,512], index: 5, kind: input, shape index: {}]
  %s6 = inlined_call_operand.vmem [shape: f32[256,512], index: 6, kind: input, shape index: {}]
  %s7 = inlined_call_operand.vmem [shape: f32[1,512], index: 7, kind: input, shape index: {}]
  %s8 = inlined_call_operand.vmem [shape: f32[2,8,128], index: 8, kind: input, shape index: {}]
  %s9 = inlined_call_operand.vmem [shape: f32[2,8,128], index: 9, kind: input, shape index: {}]
  %s10 = inlined_call_operand.vmem [shape: f32[128,21], index: 10, kind: input, shape index: {}]
  %s11 = inlined_call_operand.vmem [shape: f32[1,21], index: 11, kind: input, shape index: {}]
  %s12 = inlined_call_operand.vmem [shape: f32[8,21], index: 12, kind: output, shape index: {}]
  %s13 = sld [smem:[#allocation0]]
  $region58: #{mlp_lstm_forward.1} parent=0
    _
  %s15 = ssub.s32 1, %s13
  %s16 = scalar_select 0, %s15, %s13
  // Predicated region
  $region2: #{mlp_lstm_forward.1} parent=0 // pred_check
    _
  $region3: #{mlp_lstm_forward.1} parent=0 // pred_check_branch
    %18 = sbr.rel (0) target = $region5
  $region4: #{mlp_lstm_forward.1} parent=0 // pred_region
    _
  $region5: #{mlp_lstm_forward.1} parent=0 // pred_fallthru
    _
  // Predicated region
  $region6: #{mlp_lstm_forward.1} parent=0 // pred_check
    _
  $region7: #{mlp_lstm_forward.1} parent=0 // pred_check_branch
    %20 = sbr.rel (0) target = $region9
  $region8: #{mlp_lstm_forward.1} parent=0 // pred_region
    _
  $region9: #{mlp_lstm_forward.1} parent=0 // pred_fallthru
    _
  // Predicated region
  $region10: #{mlp_lstm_forward.1} parent=0 // pred_check
    _
  $region11: #{mlp_lstm_forward.1} parent=0 // pred_check_branch
    %22 = sbr.rel (0) target = $region13
  $region12: #{mlp_lstm_forward.1} parent=0 // pred_region
    _
  $region13: #{mlp_lstm_forward.1} parent=0 // pred_fallthru
    _
  // Predicated region
  $region14: #{mlp_lstm_forward.1} parent=0 // pred_check
    _
  $region15: #{mlp_lstm_forward.1} parent=0 // pred_check_branch
    %24 = sbr.rel (0) target = $region17
  $region16: #{mlp_lstm_forward.1} parent=0 // pred_region
    _
  $region17: #{mlp_lstm_forward.1} parent=0 // pred_fallthru
    _
  // Predicated region
  $region18: #{mlp_lstm_forward.1} parent=0 // pred_check
    _
  $region19: #{mlp_lstm_forward.1} parent=0 // pred_check_branch
    %26 = sbr.rel (0) target = $region21
  $region20: #{mlp_lstm_forward.1} parent=0 // pred_region
    _
  $region21: #{mlp_lstm_forward.1} parent=0 // pred_fallthru
    _
  // Predicated region
  $region22: #{mlp_lstm_forward.1} parent=0 // pred_check
    _
  $region23: #{mlp_lstm_forward.1} parent=0 // pred_check_branch
    %28 = sbr.rel (0) target = $region25
  $region24: #{mlp_lstm_forward.1} parent=0 // pred_region
    _
  $region25: #{mlp_lstm_forward.1} parent=0 // pred_fallthru
    _
  // Predicated region
  $region26: #{mlp_lstm_forward.1} parent=0 // pred_check
    _
  $region27: #{mlp_lstm_forward.1} parent=0 // pred_check_branch
    %30 = sbr.rel (0) target = $region29
  $region28: #{mlp_lstm_forward.1} parent=0 // pred_region
    _
  $region29: #{mlp_lstm_forward.1} parent=0 // pred_fallthru
    _
  // Predicated region
  $region30: #{mlp_lstm_forward.1} parent=0 // pred_check
    _
  $region31: #{mlp_lstm_forward.1} parent=0 // pred_check_branch
    %32 = sbr.rel (0) target = $region33
  $region32: #{mlp_lstm_forward.1} parent=0 // pred_region
    _
  $region33: #{mlp_lstm_forward.1} parent=0 // pred_fallthru
    _
  // Predicated region
  $region34: #{mlp_lstm_forward.1} parent=0 // pred_check
    _
  $region35: #{mlp_lstm_forward.1} parent=0 // pred_check_branch
    %34 = sbr.rel (0) target = $region37
  $region36: #{mlp_lstm_forward.1} parent=0 // pred_region
    _
  $region37: #{mlp_lstm_forward.1} parent=0 // pred_fallthru
    _
  // Predicated region
  $region38: #{mlp_lstm_forward.1} parent=0 // pred_check
    _
  $region39: #{mlp_lstm_forward.1} parent=0 // pred_check_branch
    %36 = sbr.rel (0) target = $region41
  $region40: #{mlp_lstm_forward.1} parent=0 // pred_region
    _
  $region41: #{mlp_lstm_forward.1} parent=0 // pred_fallthru
    _
  // Predicated region
  $region42: #{mlp_lstm_forward.1} parent=0 // pred_check
    _
  $region43: #{mlp_lstm_forward.1} parent=0 // pred_check_branch
    %38 = sbr.rel (0) target = $region45
  $region44: #{mlp_lstm_forward.1} parent=0 // pred_region
    _
  $region45: #{mlp_lstm_forward.1} parent=0 // pred_fallthru
    _
  // Predicated region
  $region46: #{mlp_lstm_forward.1} parent=0 // pred_check
    _
  $region47: #{mlp_lstm_forward.1} parent=0 // pred_check_branch
    %40 = sbr.rel (0) target = $region49
  $region48: #{mlp_lstm_forward.1} parent=0 // pred_region
    _
  $region49: #{mlp_lstm_forward.1} parent=0 // pred_fallthru
    _
  %v42 = vld [vmem:[%s0] sm:$0xff]
  %v43 = vld [vmem:[%s0 + $0x8] sm:$0xff]
  %v44 = vld [vmem:[%s0 + $0x10] sm:$0xff]
  %v45 = vld [vmem:[%s0 + $0x18] sm:$0xff]
  %v46 = vld [vmem:[%s0 + $0x20] sm:$0xff]
  %v47 = vld [vmem:[%s0 + $0x28] sm:$0xff]
  %v48 = vld [vmem:[%s0 + $0x30] sm:$0xff]
  %v49 = vld [vmem:[%s0 + $0x38] sm:$0xff]
  %v50 = vpack.c.bf16 %v43, %v42
  %v51 = vpack.c.bf16 %v45, %v44
  %v52 = vpack.c.bf16 %v47, %v46
  %v53 = vpack.c.bf16 %v49, %v48
  %v54 = vld [vmem:[%s1] sm:$0xf]
  %v55 = vld [vmem:[%s1 + $0x4] sm:$0xf]
  %v56 = vld [vmem:[%s1 + $0x8] sm:$0xf]
  %v57 = vld [vmem:[%s2] sm:$0x1]
  %v59 = vlaneseq
  %v60 = vshrl.u32 %v59, 7
  %v61 = vsub.s32 0, %v60
  %v62 = vrot.slane %v57, %v61
  %v67 = vunpack.c.l.b16 %v54
  %v68 = vunpack.c.l.b16 %v55
  %v69 = vunpack.c.l.b16 %v56
  %v70 = vpack.c.b16 %v68, %v67
  %v71 = vpack.c.b16 %v69, %v69
  %vm73 = vcmask 195584
  %v75 = vsel %vm73, %v50, 0
  %v78 = vsel %vm73, %v51, 0
  %v81 = vsel %vm73, %v52, 0
  %v84 = vsel %vm73, %v53, 0
  %vm86 = vcmask 1043456
  %v88 = vsel %vm86, %v71, 0
  %90 = vmatprep.subr.bf16.mxu0 0
  %91 = vmatpush1.bf16.msra.mxu0 %v70
  %92 = vmatprep.subr.bf16.mxu0 0
  %93 = vmatpush1.bf16.msra.mxu0 %v88
  %94 = vmatprep.subr.bf16.mxu0 0
  %95 = vmatpush1.bf16.msra.mxu0 0
  %96 = vmatprep.subr.bf16.mxu0 0
  %97 = vmatpush1.bf16.msra.mxu0 0
  %98 = vmatprep.subr.bf16.mxu0 0
  %99 = vmatpush1.bf16.msra.mxu0 0
  %100 = vmatprep.subr.bf16.mxu0 0
  %101 = vmatpush1.bf16.msra.mxu0 0
  %102 = vmatprep.subr.bf16.mxu0 0
  %103 = vmatpush1.bf16.msra.mxu0 0
  %104 = vmatprep.subr.bf16.mxu0 0
  %105 = vmatpush1.bf16.msra.mxu0 0
  %106 = vmatprep.subr.bf16.mxu0 0
  %107 = vmatpush1.bf16.msra.mxu0 0
  %108 = vmatprep.subr.bf16.mxu0 0
  %109 = vmatpush1.bf16.msra.mxu0 0
  %110 = vmatprep.subr.bf16.mxu0 0
  %111 = vmatpush1.bf16.msra.mxu0 0
  %112 = vmatprep.subr.bf16.mxu0 0
  %113 = vmatpush1.bf16.msra.mxu0 0
  %114 = vmatprep.subr.bf16.mxu0 0
  %115 = vmatpush1.bf16.msra.mxu0 0
  %116 = vmatprep.subr.bf16.mxu0 0
  %117 = vmatpush1.bf16.msra.mxu0 0
  %118 = vmatprep.subr.bf16.mxu0 0
  %119 = vmatpush1.bf16.msra.mxu0 0
  %120 = vmatprep.subr.bf16.mxu0 0
  %121 = vmatpush1.bf16.msra.mxu0 0
  %122 = vmatprep.mubr.bf16.mxu0 0
  %123 = vmatmul.mubr.bf16.gmra.mrb[0].mxu0 %v75
  %v124 = vpop.f32.mrb[0].mxu0
  %v125 = vadd.f32 %v62, %v124
  %v126 = vpop.f32.mrb[0].mxu0
  %v127 = vpop.f32.mrb[0].mxu0
  %v128 = vadd.f32 %v62, %v127
  %v129 = vpop.f32.mrb[0].mxu0
  %130 = vmatprep.mubr.bf16.mxu0 0
  %131 = vmatmul.mubr.bf16.gmra.mrb[0].mxu0 %v78
  %v132 = vpop.f32.mrb[0].mxu0
  %v133 = vadd.f32 %v62, %v132
  %v134 = vpop.f32.mrb[0].mxu0
  %v135 = vpop.f32.mrb[0].mxu0
  %v136 = vadd.f32 %v62, %v135
  %v137 = vpop.f32.mrb[0].mxu0
  %138 = vmatprep.mubr.bf16.mxu0 0
  %139 = vmatmul.mubr.bf16.gmra.mrb[0].mxu0 %v81
  %v140 = vpop.f32.mrb[0].mxu0
  %v141 = vadd.f32 %v62, %v140
  %v142 = vpop.f32.mrb[0].mxu0
  %v143 = vpop.f32.mrb[0].mxu0
  %v144 = vadd.f32 %v62, %v143
  %v145 = vpop.f32.mrb[0].mxu0
  %146 = vmatprep.mubr.bf16.mxu0 0
  %147 = vmatmul.mubr.bf16.gmra.mrb[0].mxu0 %v84
  %v148 = vpop.f32.mrb[0].mxu0
  %v149 = vadd.f32 %v62, %v148
  %v150 = vpop.f32.mrb[0].mxu0
  %v151 = vpop.f32.mrb[0].mxu0
  %v152 = vadd.f32 %v62, %v151
  %v153 = vpop.f32.mrb[0].mxu0
  %154 = vdwg.mxu0
  %v155 = vmax.f32 %v125, 0.0
  %v156 = vmax.f32 %v128, 0.0
  %v157 = vmax.f32 %v133, 0.0
  %v158 = vmax.f32 %v136, 0.0
  %v159 = vmax.f32 %v141, 0.0
  %v160 = vmax.f32 %v144, 0.0
  %v161 = vmax.f32 %v149, 0.0
  %v162 = vmax.f32 %v152, 0.0
  %v163 = vpack.c.bf16 %v156, %v155
  %v164 = vpack.c.bf16 %v158, %v157
  %v165 = vpack.c.bf16 %v160, %v159
  %v166 = vpack.c.bf16 %v162, %v161
  %v167 = vld [vmem:[%s3] sm:$0xff]
  %v168 = vld [vmem:[%s3 + $0x8] sm:$0xff]
  %v169 = vld [vmem:[%s3 + $0x10] sm:$0xff]
  %v170 = vld [vmem:[%s3 + $0x18] sm:$0xff]
  %v171 = vld [vmem:[%s3 + $0x20] sm:$0xff]
  %v172 = vld [vmem:[%s3 + $0x28] sm:$0xff]
  %v173 = vld [vmem:[%s3 + $0x30] sm:$0xff]
  %v174 = vld [vmem:[%s3 + $0x38] sm:$0xff]
  %v175 = vld [vmem:[%s3 + $0x40] sm:$0xff]
  %v176 = vld [vmem:[%s3 + $0x48] sm:$0xff]
  %v177 = vld [vmem:[%s3 + $0x50] sm:$0xff]
  %v178 = vld [vmem:[%s3 + $0x58] sm:$0xff]
  %v179 = vld [vmem:[%s3 + $0x60] sm:$0xff]
  %v180 = vld [vmem:[%s3 + $0x68] sm:$0xff]
  %v181 = vld [vmem:[%s3 + $0x70] sm:$0xff]
  %v182 = vld [vmem:[%s3 + $0x78] sm:$0xff]
  %v183 = vld [vmem:[%s3 + $0x80] sm:$0xff]
  %v184 = vld [vmem:[%s3 + $0x88] sm:$0xff]
  %v185 = vld [vmem:[%s3 + $0x90] sm:$0xff]
  %v186 = vld [vmem:[%s3 + $0x98] sm:$0xff]
  %v187 = vld [vmem:[%s3 + $0xa0] sm:$0xff]
  %v188 = vld [vmem:[%s3 + $0xa8] sm:$0xff]
  %v189 = vld [vmem:[%s3 + $0xb0] sm:$0xff]
  %v190 = vld [vmem:[%s3 + $0xb8] sm:$0xff]
  %v191 = vld [vmem:[%s3 + $0xc0] sm:$0x33]
  %v192 = vld [vmem:[%s3 + $0xc8] sm:$0x33]
  %v193 = vld [vmem:[%s4] sm:$0xf]
  %v195 = vlaneseq
  %v196 = vshrl.u32 %v195, 7
  %v197 = vsub.s32 0, %v196
  %v198 = vrot.slane %v193, %v197
  %v199 = vlaneseq
  %v200 = vshrl.u32 %v199, 7
  %v201 = vsub.s32 1, %v200
  %v202 = vrot.slane %v193, %v201
  %v203 = vlaneseq
  %v204 = vshrl.u32 %v203, 7
  %v205 = vsub.s32 2, %v204
  %v206 = vrot.slane %v193, %v205
  %v207 = vlaneseq
  %v208 = vshrl.u32 %v207, 7
  %v209 = vsub.s32 3, %v208
  %v210 = vrot.slane %v193, %v209
  %v241 = vunpack.c.l.b16 %v167
  %v242 = vunpack.c.h.b16 %v167
  %v243 = vunpack.c.l.b16 %v168
  %v244 = vunpack.c.h.b16 %v168
  %v245 = vunpack.c.l.b16 %v169
  %v246 = vunpack.c.h.b16 %v169
  %v247 = vunpack.c.l.b16 %v170
  %v248 = vunpack.c.h.b16 %v170
  %v249 = vunpack.c.l.b16 %v171
  %v250 = vunpack.c.h.b16 %v171
  %v251 = vunpack.c.l.b16 %v172
  %v252 = vunpack.c.h.b16 %v172
  %v253 = vunpack.c.l.b16 %v173
  %v254 = vunpack.c.h.b16 %v173
  %v255 = vunpack.c.l.b16 %v174
  %v256 = vunpack.c.h.b16 %v174
  %v257 = vunpack.c.l.b16 %v175
  %v258 = vunpack.c.h.b16 %v175
  %v259 = vunpack.c.l.b16 %v176
  %v260 = vunpack.c.h.b16 %v176
  %v261 = vunpack.c.l.b16 %v177
  %v262 = vunpack.c.h.b16 %v177
  %v263 = vunpack.c.l.b16 %v178
  %v264 = vunpack.c.h.b16 %v178
  %v265 = vunpack.c.l.b16 %v179
  %v266 = vunpack.c.h.b16 %v179
  %v267 = vunpack.c.l.b16 %v180
  %v268 = vunpack.c.h.b16 %v180
  %v269 = vunpack.c.l.b16 %v181
  %v270 = vunpack.c.h.b16 %v181
  %v271 = vunpack.c.l.b16 %v182
  %v272 = vunpack.c.h.b16 %v182
  %v273 = vunpack.c.l.b16 %v183
  %v274 = vunpack.c.h.b16 %v183
  %v275 = vunpack.c.l.b16 %v184
  %v276 = vunpack.c.h.b16 %v184
  %v277 = vunpack.c.l.b16 %v185
  %v278 = vunpack.c.h.b16 %v185
  %v279 = vunpack.c.l.b16 %v186
  %v280 = vunpack.c.h.b16 %v186
  %v281 = vunpack.c.l.b16 %v187
  %v282 = vunpack.c.h.b16 %v187
  %v283 = vunpack.c.l.b16 %v188
  %v284 = vunpack.c.h.b16 %v188
  %v285 = vunpack.c.l.b16 %v189
  %v286 = vunpack.c.h.b16 %v189
  %v287 = vunpack.c.l.b16 %v190
  %v288 = vunpack.c.h.b16 %v190
  %v289 = vunpack.c.l.b16 %v191
  %v290 = vunpack.c.h.b16 %v191
  %v291 = vunpack.c.l.b16 %v192
  %v292 = vunpack.c.h.b16 %v192
  %v293 = vpack.c.b16 %v245, %v241
  %v294 = vpack.c.b16 %v246, %v242
  %v295 = vpack.c.b16 %v247, %v243
  %v296 = vpack.c.b16 %v248, %v244
  %v297 = vpack.c.b16 %v253, %v249
  %v298 = vpack.c.b16 %v254, %v250
  %v299 = vpack.c.b16 %v255, %v251
  %v300 = vpack.c.b16 %v256, %v252
  %v301 = vpack.c.b16 %v261, %v257
  %v302 = vpack.c.b16 %v262, %v258
  %v303 = vpack.c.b16 %v263, %v259
  %v304 = vpack.c.b16 %v264, %v260
  %v305 = vpack.c.b16 %v269, %v265
  %v306 = vpack.c.b16 %v270, %v266
  %v307 = vpack.c.b16 %v271, %v267
  %v308 = vpack.c.b16 %v272, %v268
  %v309 = vpack.c.b16 %v277, %v273
  %v310 = vpack.c.b16 %v278, %v274
  %v311 = vpack.c.b16 %v279, %v275
  %v312 = vpack.c.b16 %v280, %v276
  %v313 = vpack.c.b16 %v285, %v281
  %v314 = vpack.c.b16 %v286, %v282
  %v315 = vpack.c.b16 %v287, %v283
  %v316 = vpack.c.b16 %v288, %v284
  %v317 = vpack.c.b16 %v289, %v289
  %v318 = vpack.c.b16 %v290, %v290
  %v319 = vpack.c.b16 %v291, %v291
  %v320 = vpack.c.b16 %v292, %v292
  %vm345 = vcmask 818176
  %v347 = vsel %vm345, %v163, 0
  %v350 = vsel %vm345, %v164, 0
  %v353 = vsel %vm345, %v165, 0
  %v356 = vsel %vm345, %v166, 0
  %vm358 = vcmask 1041408
  %v360 = vsel %vm358, %v317, 0
  %v363 = vsel %vm358, %v318, 0
  %v366 = vsel %vm358, %v319, 0
  %v369 = vsel %vm358, %v320, 0
  %371 = vmatprep.subr.bf16.mxu0 %v294
  %372 = vmatpush1.bf16.msra.mxu0 %v293
  %373 = vmatprep.subr.bf16.mxu0 %v298
  %374 = vmatpush1.bf16.msra.mxu0 %v297
  %375 = vmatprep.subr.bf16.mxu0 %v302
  %376 = vmatpush1.bf16.msra.mxu0 %v301
  %377 = vmatprep.subr.bf16.mxu0 %v306
  %378 = vmatpush1.bf16.msra.mxu0 %v305
  %379 = vmatprep.subr.bf16.mxu0 %v310
  %380 = vmatpush1.bf16.msra.mxu0 %v309
  %381 = vmatprep.subr.bf16.mxu0 %v314
  %382 = vmatpush1.bf16.msra.mxu0 %v313
  %383 = vmatprep.subr.bf16.mxu0 %v363
  %384 = vmatpush1.bf16.msra.mxu0 %v360
  %385 = vmatprep.subr.bf16.mxu0 0
  %386 = vmatpush1.bf16.msra.mxu0 0
  %387 = vmatprep.subr.bf16.mxu0 0
  %388 = vmatpush1.bf16.msra.mxu0 0
  %389 = vmatprep.subr.bf16.mxu0 0
  %390 = vmatpush1.bf16.msra.mxu0 0
  %391 = vmatprep.subr.bf16.mxu0 0
  %392 = vmatpush1.bf16.msra.mxu0 0
  %393 = vmatprep.subr.bf16.mxu0 0
  %394 = vmatpush1.bf16.msra.mxu0 0
  %395 = vmatprep.subr.bf16.mxu0 0
  %396 = vmatpush1.bf16.msra.mxu0 0
  %397 = vmatprep.subr.bf16.mxu0 0
  %398 = vmatpush1.bf16.msra.mxu0 0
  %399 = vmatprep.subr.bf16.mxu0 0
  %400 = vmatpush1.bf16.msra.mxu0 0
  %401 = vmatprep.subr.bf16.mxu0 0
  %402 = vmatpush1.bf16.msra.mxu0 0
  %403 = vmatprep.mubr.bf16.mxu0 0
  %404 = vmatmul.mubr.bf16.gmra.mrb[0].mxu0 %v347
  %v405 = vpop.f32.mrb[0].mxu0
  %v406 = vadd.f32 %v198, %v405
  %v407 = vpop.f32.mrb[0].mxu0
  %v408 = vadd.f32 %v202, %v407
  %v409 = vpop.f32.mrb[0].mxu0
  %v410 = vadd.f32 %v198, %v409
  %v411 = vpop.f32.mrb[0].mxu0
  %v412 = vadd.f32 %v202, %v411
  %413 = vmatprep.mubr.bf16.mxu0 0
  %414 = vmatmul.mubr.bf16.gmra.mrb[0].mxu0 %v350
  %v415 = vpop.f32.mrb[0].mxu0
  %v416 = vadd.f32 %v198, %v415
  %v417 = vpop.f32.mrb[0].mxu0
  %v418 = vadd.f32 %v202, %v417
  %v419 = vpop.f32.mrb[0].mxu0
  %v420 = vadd.f32 %v198, %v419
  %v421 = vpop.f32.mrb[0].mxu0
  %v422 = vadd.f32 %v202, %v421
  %423 = vmatprep.mubr.bf16.mxu0 0
  %424 = vmatmul.mubr.bf16.gmra.mrb[0].mxu0 %v353
  %v425 = vpop.f32.mrb[0].mxu0
  %v426 = vadd.f32 %v198, %v425
  %v427 = vpop.f32.mrb[0].mxu0
  %v428 = vadd.f32 %v202, %v427
  %v429 = vpop.f32.mrb[0].mxu0
  %v430 = vadd.f32 %v198, %v429
  %v431 = vpop.f32.mrb[0].mxu0
  %v432 = vadd.f32 %v202, %v431
  %433 = vmatprep.mubr.bf16.mxu0 0
  %434 = vmatmul.mubr.bf16.gmra.mrb[0].mxu0 %v356
  %v435 = vpop.f32.mrb[0].mxu0
  %v436 = vadd.f32 %v198, %v435
  %v437 = vpop.f32.mrb[0].mxu0
  %v438 = vadd.f32 %v202, %v437
  %v439 = vpop.f32.mrb[0].mxu0
  %v440 = vadd.f32 %v198, %v439
  %v441 = vpop.f32.mrb[0].mxu0
  %v442 = vadd.f32 %v202, %v441
  %443 = vdwg.mxu0
  %444 = vmatprep.subr.bf16.mxu0 %v296
  %445 = vmatpush1.bf16.msra.mxu0 %v295
  %446 = vmatprep.subr.bf16.mxu0 %v300
  %447 = vmatpush1.bf16.msra.mxu0 %v299
  %448 = vmatprep.subr.bf16.mxu0 %v304
  %449 = vmatpush1.bf16.msra.mxu0 %v303
  %450 = vmatprep.subr.bf16.mxu0 %v308
  %451 = vmatpush1.bf16.msra.mxu0 %v307
  %452 = vmatprep.subr.bf16.mxu0 %v312
  %453 = vmatpush1.bf16.msra.mxu0 %v311
  %454 = vmatprep.subr.bf16.mxu0 %v316
  %455 = vmatpush1.bf16.msra.mxu0 %v315
  %456 = vmatprep.subr.bf16.mxu0 %v369
  %457 = vmatpush1.bf16.msra.mxu0 %v366
  %458 = vmatprep.subr.bf16.mxu0 0
  %459 = vmatpush1.bf16.msra.mxu0 0
  %460 = vmatprep.subr.bf16.mxu0 0
  %461 = vmatpush1.bf16.msra.mxu0 0
  %462 = vmatprep.subr.bf16.mxu0 0
  %463 = vmatpush1.bf16.msra.mxu0 0
  %464 = vmatprep.subr.bf16.mxu0 0
  %465 = vmatpush1.bf16.msra.mxu0 0
  %466 = vmatprep.subr.bf16.mxu0 0
  %467 = vmatpush1.bf16.msra.mxu0 0
  %468 = vmatprep.subr.bf16.mxu0 0
  %469 = vmatpush1.bf16.msra.mxu0 0
  %470 = vmatprep.subr.bf16.mxu0 0
  %471 = vmatpush1.bf16.msra.mxu0 0
  %472 = vmatprep.subr.bf16.mxu0 0
  %473 = vmatpush1.bf16.msra.mxu0 0
  %474 = vmatprep.subr.bf16.mxu0 0
  %475 = vmatpush1.bf16.msra.mxu0 0
  %476 = vmatprep.mubr.bf16.mxu0 0
  %477 = vmatmul.mubr.bf16.gmra.mrb[0].mxu0 %v347
  %v478 = vpop.f32.mrb[0].mxu0
  %v479 = vadd.f32 %v206, %v478
  %v480 = vpop.f32.mrb[0].mxu0
  %v481 = vadd.f32 %v210, %v480
  %v482 = vpop.f32.mrb[0].mxu0
  %v483 = vadd.f32 %v206, %v482
  %v484 = vpop.f32.mrb[0].mxu0
  %v485 = vadd.f32 %v210, %v484
  %486 = vmatprep.mubr.bf16.mxu0 0
  %487 = vmatmul.mubr.bf16.gmra.mrb[0].mxu0 %v350
  %v488 = vpop.f32.mrb[0].mxu0
  %v489 = vadd.f32 %v206, %v488
  %v490 = vpop.f32.mrb[0].mxu0
  %v491 = vadd.f32 %v210, %v490
  %v492 = vpop.f32.mrb[0].mxu0
  %v493 = vadd.f32 %v206, %v492
  %v494 = vpop.f32.mrb[0].mxu0
  %v495 = vadd.f32 %v210, %v494
  %496 = vmatprep.mubr.bf16.mxu0 0
  %497 = vmatmul.mubr.bf16.gmra.mrb[0].mxu0 %v353
  %v498 = vpop.f32.mrb[0].mxu0
  %v499 = vadd.f32 %v206, %v498
  %v500 = vpop.f32.mrb[0].mxu0
  %v501 = vadd.f32 %v210, %v500
  %v502 = vpop.f32.mrb[0].mxu0
  %v503 = vadd.f32 %v206, %v502
  %v504 = vpop.f32.mrb[0].mxu0
  %v505 = vadd.f32 %v210, %v504
  %506 = vmatprep.mubr.bf16.mxu0 0
  %507 = vmatmul.mubr.bf16.gmra.mrb[0].mxu0 %v356
  %v508 = vpop.f32.mrb[0].mxu0
  %v509 = vadd.f32 %v206, %v508
  %v510 = vpop.f32.mrb[0].mxu0
  %v511 = vadd.f32 %v210, %v510
  %v512 = vpop.f32.mrb[0].mxu0
  %v513 = vadd.f32 %v206, %v512
  %v514 = vpop.f32.mrb[0].mxu0
  %v515 = vadd.f32 %v210, %v514
  %516 = vdwg.mxu0
  %517 = vst [vmem:[#allocation2] sm:$0xff] %v406
  %518 = vst [vmem:[#allocation2 + $0x8] sm:$0xff] %v408
  %519 = vst [vmem:[#allocation2 + $0x10] sm:$0xff] %v479
  %520 = vst [vmem:[#allocation2 + $0x18] sm:$0xff] %v481
  %521 = vst [vmem:[#allocation2 + $0x20] sm:$0xff] %v410
  %522 = vst [vmem:[#allocation2 + $0x28] sm:$0xff] %v412
  %523 = vst [vmem:[#allocation2 + $0x30] sm:$0xff] %v483
  %524 = vst [vmem:[#allocation2 + $0x38] sm:$0xff] %v485
  %525 = vst [vmem:[#allocation2 + $0x40] sm:$0xff] %v416
  %526 = vst [vmem:[#allocation2 + $0x48] sm:$0xff] %v418
  %527 = vst [vmem:[#allocation2 + $0x50] sm:$0xff] %v489
  %528 = vst [vmem:[#allocation2 + $0x58] sm:$0xff] %v491
  %529 = vst [vmem:[#allocation2 + $0x60] sm:$0xff] %v420
  %530 = vst [vmem:[#allocation2 + $0x68] sm:$0xff] %v422
  %531 = vst [vmem:[#allocation2 + $0x70] sm:$0xff] %v493
  %532 = vst [vmem:[#allocation2 + $0x78] sm:$0xff] %v495
  %533 = vst [vmem:[#allocation2 + $0x80] sm:$0xff] %v426
  %534 = vst [vmem:[#allocation2 + $0x88] sm:$0xff] %v428
  %535 = vst [vmem:[#allocation2 + $0x90] sm:$0xff] %v499
  %536 = vst [vmem:[#allocation2 + $0x98] sm:$0xff] %v501
  %537 = vst [vmem:[#allocation2 + $0xa0] sm:$0xff] %v430
  %538 = vst [vmem:[#allocation2 + $0xa8] sm:$0xff] %v432
  %539 = vst [vmem:[#allocation2 + $0xb0] sm:$0xff] %v503
  %540 = vst [vmem:[#allocation2 + $0xb8] sm:$0xff] %v505
  %541 = vst [vmem:[#allocation2 + $0xc0] sm:$0xff] %v436
  %542 = vst [vmem:[#allocation2 + $0xc8] sm:$0xff] %v438
  %543 = vst [vmem:[#allocation2 + $0xd0] sm:$0xff] %v509
  %544 = vst [vmem:[#allocation2 + $0xd8] sm:$0xff] %v511
  %545 = vst [vmem:[#allocation2 + $0xe0] sm:$0xff] %v440
  %546 = vst [vmem:[#allocation2 + $0xe8] sm:$0xff] %v442
  %547 = vst [vmem:[#allocation2 + $0xf0] sm:$0xff] %v513
  %548 = vst [vmem:[#allocation2 + $0xf8] sm:$0xff] %v515
  %v549 = vld [vmem:[%s5] sm:$0xff]
  %v550 = vld [vmem:[%s5 + $0x8] sm:$0xff]
  %v551 = vld [vmem:[%s5 + $0x10] sm:$0xff]
  %v552 = vld [vmem:[%s5 + $0x18] sm:$0xff]
  %v553 = vld [vmem:[%s5 + $0x20] sm:$0xff]
  %v554 = vld [vmem:[%s5 + $0x28] sm:$0xff]
  %v555 = vld [vmem:[%s5 + $0x30] sm:$0xff]
  %v556 = vld [vmem:[%s5 + $0x38] sm:$0xff]
  %v557 = vld [vmem:[%s5 + $0x40] sm:$0xff]
  %v558 = vld [vmem:[%s5 + $0x48] sm:$0xff]
  %v559 = vld [vmem:[%s5 + $0x50] sm:$0xff]
  %v560 = vld [vmem:[%s5 + $0x58] sm:$0xff]
  %v561 = vld [vmem:[%s5 + $0x60] sm:$0xff]
  %v562 = vld [vmem:[%s5 + $0x68] sm:$0xff]
  %v563 = vld [vmem:[%s5 + $0x70] sm:$0xff]
  %v564 = vld [vmem:[%s5 + $0x78] sm:$0xff]
  %v565 = vld [vmem:[%s5 + $0x80] sm:$0xff]
  %v566 = vld [vmem:[%s5 + $0x88] sm:$0xff]
  %v567 = vld [vmem:[%s5 + $0x90] sm:$0xff]
  %v568 = vld [vmem:[%s5 + $0x98] sm:$0xff]
  %v569 = vld [vmem:[%s5 + $0xa0] sm:$0xff]
  %v570 = vld [vmem:[%s5 + $0xa8] sm:$0xff]
  %v571 = vld [vmem:[%s5 + $0xb0] sm:$0xff]
  %v572 = vld [vmem:[%s5 + $0xb8] sm:$0xff]
  %v573 = vld [vmem:[%s5 + $0xc0] sm:$0xff]
  %v574 = vld [vmem:[%s5 + $0xc8] sm:$0xff]
  %v575 = vld [vmem:[%s5 + $0xd0] sm:$0xff]
  %v576 = vld [vmem:[%s5 + $0xd8] sm:$0xff]
  %v577 = vld [vmem:[%s5 + $0xe0] sm:$0xff]
  %v578 = vld [vmem:[%s5 + $0xe8] sm:$0xff]
  %v579 = vld [vmem:[%s5 + $0xf0] sm:$0xff]
  %v580 = vld [vmem:[%s5 + $0xf8] sm:$0xff]
  %v581 = vld [vmem:[%s5 + $0x100] sm:$0xff]
  %v582 = vld [vmem:[%s5 + $0x108] sm:$0xff]
  %v583 = vld [vmem:[%s5 + $0x110] sm:$0xff]
  %v584 = vld [vmem:[%s5 + $0x118] sm:$0xff]
  %v585 = vld [vmem:[%s5 + $0x120] sm:$0xff]
  %v586 = vld [vmem:[%s5 + $0x128] sm:$0xff]
  %v587 = vld [vmem:[%s5 + $0x130] sm:$0xff]
  %v588 = vld [vmem:[%s5 + $0x138] sm:$0xff]
  %v589 = vld [vmem:[%s5 + $0x140] sm:$0xff]
  %v590 = vld [vmem:[%s5 + $0x148] sm:$0xff]
  %v591 = vld [vmem:[%s5 + $0x150] sm:$0xff]
  %v592 = vld [vmem:[%s5 + $0x158] sm:$0xff]
  %v593 = vld [vmem:[%s5 + $0x160] sm:$0xff]
  %v594 = vld [vmem:[%s5 + $0x168] sm:$0xff]
  %v595 = vld [vmem:[%s5 + $0x170] sm:$0xff]
  %v596 = vld [vmem:[%s5 + $0x178] sm:$0xff]
  %v597 = vld [vmem:[%s5 + $0x180] sm:$0xff]
  %v598 = vld [vmem:[%s5 + $0x188] sm:$0xff]
  %v599 = vld [vmem:[%s5 + $0x190] sm:$0xff]
  %v600 = vld [vmem:[%s5 + $0x198] sm:$0xff]
  %v601 = vld [vmem:[%s5 + $0x1a0] sm:$0xff]
  %v602 = vld [vmem:[%s5 + $0x1a8] sm:$0xff]
  %v603 = vld [vmem:[%s5 + $0x1b0] sm:$0xff]
  %v604 = vld [vmem:[%s5 + $0x1b8] sm:$0xff]
  %v605 = vld [vmem:[%s5 + $0x1c0] sm:$0xff]
  %v606 = vld [vmem:[%s5 + $0x1c8] sm:$0xff]
  %v607 = vld [vmem:[%s5 + $0x1d0] sm:$0xff]
  %v608 = vld [vmem:[%s5 + $0x1d8] sm:$0xff]
  %v609 = vld [vmem:[%s5 + $0x1e0] sm:$0xff]
  %v610 = vld [vmem:[%s5 + $0x1e8] sm:$0xff]
  %v611 = vld [vmem:[%s5 + $0x1f0] sm:$0xff]
  %v612 = vld [vmem:[%s5 + $0x1f8] sm:$0xff]
  %v613 = vld [vmem:[%s6] sm:$0xff]
  %v614 = vld [vmem:[%s6 + $0x8] sm:$0xff]
  %v615 = vld [vmem:[%s6 + $0x10] sm:$0xff]
  %v616 = vld [vmem:[%s6 + $0x18] sm:$0xff]
  %v617 = vld [vmem:[%s6 + $0x20] sm:$0xff]
  %v618 = vld [vmem:[%s6 + $0x28] sm:$0xff]
  %v619 = vld [vmem:[%s6 + $0x30] sm:$0xff]
  %v620 = vld [vmem:[%s6 + $0x38] sm:$0xff]
  %v621 = vld [vmem:[%s6 + $0x40] sm:$0xff]
  %v622 = vld [vmem:[%s6 + $0x48] sm:$0xff]
  %v623 = vld [vmem:[%s6 + $0x50] sm:$0xff]
  %v624 = vld [vmem:[%s6 + $0x58] sm:$0xff]
  %v625 = vld [vmem:[%s6 + $0x60] sm:$0xff]
  %v626 = vld [vmem:[%s6 + $0x68] sm:$0xff]
  %v627 = vld [vmem:[%s6 + $0x70] sm:$0xff]
  %v628 = vld [vmem:[%s6 + $0x78] sm:$0xff]
  %v629 = vld [vmem:[%s6 + $0x80] sm:$0xff]
  %v630 = vld [vmem:[%s6 + $0x88] sm:$0xff]
  %v631 = vld [vmem:[%s6 + $0x90] sm:$0xff]
  %v632 = vld [vmem:[%s6 + $0x98] sm:$0xff]
  %v633 = vld [vmem:[%s6 + $0xa0] sm:$0xff]
  %v634 = vld [vmem:[%s6 + $0xa8] sm:$0xff]
  %v635 = vld [vmem:[%s6 + $0xb0] sm:$0xff]
  %v636 = vld [vmem:[%s6 + $0xb8] sm:$0xff]
  %v637 = vld [vmem:[%s6 + $0xc0] sm:$0xff]
  %v638 = vld [vmem:[%s6 + $0xc8] sm:$0xff]
  %v639 = vld [vmem:[%s6 + $0xd0] sm:$0xff]
  %v640 = vld [vmem:[%s6 + $0xd8] sm:$0xff]
  %v641 = vld [vmem:[%s6 + $0xe0] sm:$0xff]
  %v642 = vld [vmem:[%s6 + $0xe8] sm:$0xff]
  %v643 = vld [vmem:[%s6 + $0xf0] sm:$0xff]
  %v644 = vld [vmem:[%s6 + $0xf8] sm:$0xff]
  %v645 = vld [vmem:[%s6 + $0x100] sm:$0xff]
  %v646 = vld [vmem:[%s6 + $0x108] sm:$0xff]
  %v647 = vld [vmem:[%s6 + $0x110] sm:$0xff]
  %v648 = vld [vmem:[%s6 + $0x118] sm:$0xff]
  %v649 = vld [vmem:[%s6 + $0x120] sm:$0xff]
  %v650 = vld [vmem:[%s6 + $0x128] sm:$0xff]
  %v651 = vld [vmem:[%s6 + $0x130] sm:$0xff]
  %v652 = vld [vmem:[%s6 + $0x138] sm:$0xff]
  %v653 = vld [vmem:[%s6 + $0x140] sm:$0xff]
  %v654 = vld [vmem:[%s6 + $0x148] sm:$0xff]
  %v655 = vld [vmem:[%s6 + $0x150] sm:$0xff]
  %v656 = vld [vmem:[%s6 + $0x158] sm:$0xff]
  %v657 = vld [vmem:[%s6 + $0x160] sm:$0xff]
  %v658 = vld [vmem:[%s6 + $0x168] sm:$0xff]
  %v659 = vld [vmem:[%s6 + $0x170] sm:$0xff]
  %v660 = vld [vmem:[%s6 + $0x178] sm:$0xff]
  %v661 = vld [vmem:[%s6 + $0x180] sm:$0xff]
  %v662 = vld [vmem:[%s6 + $0x188] sm:$0xff]
  %v663 = vld [vmem:[%s6 + $0x190] sm:$0xff]
  %v664 = vld [vmem:[%s6 + $0x198] sm:$0xff]
  %v665 = vld [vmem:[%s6 + $0x1a0] sm:$0xff]
  %v666 = vld [vmem:[%s6 + $0x1a8] sm:$0xff]
  %v667 = vld [vmem:[%s6 + $0x1b0] sm:$0xff]
  %v668 = vld [vmem:[%s6 + $0x1b8] sm:$0xff]
  %v669 = vld [vmem:[%s6 + $0x1c0] sm:$0xff]
  %v670 = vld [vmem:[%s6 + $0x1c8] sm:$0xff]
  %v671 = vld [vmem:[%s6 + $0x1d0] sm:$0xff]
  %v672 = vld [vmem:[%s6 + $0x1d8] sm:$0xff]
  %v673 = vld [vmem:[%s6 + $0x1e0] sm:$0xff]
  %v674 = vld [vmem:[%s6 + $0x1e8] sm:$0xff]
  %v675 = vld [vmem:[%s6 + $0x1f0] sm:$0xff]
  %v676 = vld [vmem:[%s6 + $0x1f8] sm:$0xff]
  %v677 = vld [vmem:[%s6 + $0x200] sm:$0xff]
  %v678 = vld [vmem:[%s6 + $0x208] sm:$0xff]
  %v679 = vld [vmem:[%s6 + $0x210] sm:$0xff]
  %v680 = vld [vmem:[%s6 + $0x218] sm:$0xff]
  %v681 = vld [vmem:[%s6 + $0x220] sm:$0xff]
  %v682 = vld [vmem:[%s6 + $0x228] sm:$0xff]
  %v683 = vld [vmem:[%s6 + $0x230] sm:$0xff]
  %v684 = vld [vmem:[%s6 + $0x238] sm:$0xff]
  %v685 = vld [vmem:[%s6 + $0x240] sm:$0xff]
  %v686 = vld [vmem:[%s6 + $0x248] sm:$0xff]
  %v687 = vld [vmem:[%s6 + $0x250] sm:$0xff]
  %v688 = vld [vmem:[%s6 + $0x258] sm:$0xff]
  %v689 = vld [vmem:[%s6 + $0x260] sm:$0xff]
  %v690 = vld [vmem:[%s6 + $0x268] sm:$0xff]
  %v691 = vld [vmem:[%s6 + $0x270] sm:$0xff]
  %v692 = vld [vmem:[%s6 + $0x278] sm:$0xff]
  %v693 = vld [vmem:[%s6 + $0x280] sm:$0xff]
  %v694 = vld [vmem:[%s6 + $0x288] sm:$0xff]
  %v695 = vld [vmem:[%s6 + $0x290] sm:$0xff]
  %v696 = vld [vmem:[%s6 + $0x298] sm:$0xff]
  %v697 = vld [vmem:[%s6 + $0x2a0] sm:$0xff]
  %v698 = vld [vmem:[%s6 + $0x2a8] sm:$0xff]
  %v699 = vld [vmem:[%s6 + $0x2b0] sm:$0xff]
  %v700 = vld [vmem:[%s6 + $0x2b8] sm:$0xff]
  %v701 = vld [vmem:[%s6 + $0x2c0] sm:$0xff]
  %v702 = vld [vmem:[%s6 + $0x2c8] sm:$0xff]
  %v703 = vld [vmem:[%s6 + $0x2d0] sm:$0xff]
  %v704 = vld [vmem:[%s6 + $0x2d8] sm:$0xff]
  %v705 = vld [vmem:[%s6 + $0x2e0] sm:$0xff]
  %v706 = vld [vmem:[%s6 + $0x2e8] sm:$0xff]
  %v707 = vld [vmem:[%s6 + $0x2f0] sm:$0xff]
  %v708 = vld [vmem:[%s6 + $0x2f8] sm:$0xff]
  %v709 = vld [vmem:[%s6 + $0x300] sm:$0xff]
  %v710 = vld [vmem:[%s6 + $0x308] sm:$0xff]
  %v711 = vld [vmem:[%s6 + $0x310] sm:$0xff]
  %v712 = vld [vmem:[%s6 + $0x318] sm:$0xff]
  %v713 = vld [vmem:[%s6 + $0x320] sm:$0xff]
  %v714 = vld [vmem:[%s6 + $0x328] sm:$0xff]
  %v715 = vld [vmem:[%s6 + $0x330] sm:$0xff]
  %v716 = vld [vmem:[%s6 + $0x338] sm:$0xff]
  %v717 = vld [vmem:[%s6 + $0x340] sm:$0xff]
  %v718 = vld [vmem:[%s6 + $0x348] sm:$0xff]
  %v719 = vld [vmem:[%s6 + $0x350] sm:$0xff]
  %v720 = vld [vmem:[%s6 + $0x358] sm:$0xff]
  %v721 = vld [vmem:[%s6 + $0x360] sm:$0xff]
  %v722 = vld [vmem:[%s6 + $0x368] sm:$0xff]
  %v723 = vld [vmem:[%s6 + $0x370] sm:$0xff]
  %v724 = vld [vmem:[%s6 + $0x378] sm:$0xff]
  %v725 = vld [vmem:[%s6 + $0x380] sm:$0xff]
  %v726 = vld [vmem:[%s6 + $0x388] sm:$0xff]
  %v727 = vld [vmem:[%s6 + $0x390] sm:$0xff]
  %v728 = vld [vmem:[%s6 + $0x398] sm:$0xff]
  %v729 = vld [vmem:[%s6 + $0x3a0] sm:$0xff]
  %v730 = vld [vmem:[%s6 + $0x3a8] sm:$0xff]
  %v731 = vld [vmem:[%s6 + $0x3b0] sm:$0xff]
  %v732 = vld [vmem:[%s6 + $0x3b8] sm:$0xff]
  %v733 = vld [vmem:[%s6 + $0x3c0] sm:$0xff]
  %v734 = vld [vmem:[%s6 + $0x3c8] sm:$0xff]
  %v735 = vld [vmem:[%s6 + $0x3d0] sm:$0xff]
  %v736 = vld [vmem:[%s6 + $0x3d8] sm:$0xff]
  %v737 = vld [vmem:[%s6 + $0x3e0] sm:$0xff]
  %v738 = vld [vmem:[%s6 + $0x3e8] sm:$0xff]
  %v739 = vld [vmem:[%s6 + $0x3f0] sm:$0xff]
  %v740 = vld [vmem:[%s6 + $0x3f8] sm:$0xff]
  %v741 = vld [vmem:[%s7] sm:$0xf]
  %v742 = vld [vmem:[%s8] sm:$0xff]
  %v743 = vld [vmem:[%s9] sm:$0xff]
  %s744 = scalar_lea.vmem %s8, 8
  %v745 = vld [vmem:[%s744] sm:$0xff]
  %s746 = scalar_lea.vmem %s9, 8
  %v747 = vld [vmem:[%s746] sm:$0xff]
  %v748 = vld [vmem:[#allocation2] sm:$0xff]
  %v749 = vld [vmem:[#allocation2 + $0x8] sm:$0xff]
  %v750 = vld [vmem:[#allocation2 + $0x10] sm:$0xff]
  %v751 = vld [vmem:[#allocation2 + $0x18] sm:$0xff]
  %752 = vmatprep.subr.mxu0 %v550
  %753 = vmatpush1.msra.mxu0 %v549
  %754 = vmatprep.subr.mxu0 %v554
  %755 = vmatpush1.msra.mxu0 %v553
  %756 = vmatprep.subr.mxu0 %v558
  %757 = vmatpush1.msra.mxu0 %v557
  %758 = vmatprep.subr.mxu0 %v562
  %759 = vmatpush1.msra.mxu0 %v561
  %760 = vmatprep.subr.mxu0 %v566
  %761 = vmatpush1.msra.mxu0 %v565
  %762 = vmatprep.subr.mxu0 %v570
  %763 = vmatpush1.msra.mxu0 %v569
  %764 = vmatprep.subr.mxu0 %v574
  %765 = vmatpush1.msra.mxu0 %v573
  %766 = vmatprep.subr.mxu0 %v578
  %767 = vmatpush1.msra.mxu0 %v577
  %768 = vmatprep.subr.mxu0 %v582
  %769 = vmatpush1.msra.mxu0 %v581
  %770 = vmatprep.subr.mxu0 %v586
  %771 = vmatpush1.msra.mxu0 %v585
  %772 = vmatprep.subr.mxu0 %v590
  %773 = vmatpush1.msra.mxu0 %v589
  %774 = vmatprep.subr.mxu0 %v594
  %775 = vmatpush1.msra.mxu0 %v593
  %776 = vmatprep.subr.mxu0 %v598
  %777 = vmatpush1.msra.mxu0 %v597
  %778 = vmatprep.subr.mxu0 %v602
  %779 = vmatpush1.msra.mxu0 %v601
  %780 = vmatprep.subr.mxu0 %v606
  %781 = vmatpush1.msra.mxu0 %v605
  %782 = vmatprep.subr.mxu0 %v610
  %783 = vmatpush1.msra.mxu0 %v609
  %784 = vmatprep.subr.mxu0 0.0
  %785 = vmatpush1.msra.mxu0 0.0
  %786 = vmatprep.subr.mxu0 0.0
  %787 = vmatpush1.msra.mxu0 0.0
  %788 = vmatprep.subr.mxu0 0.0
  %789 = vmatpush1.msra.mxu0 0.0
  %790 = vmatprep.subr.mxu0 0.0
  %791 = vmatpush1.msra.mxu0 0.0
  %792 = vmatprep.subr.mxu0 0.0
  %793 = vmatpush1.msra.mxu0 0.0
  %794 = vmatprep.subr.mxu0 0.0
  %795 = vmatpush1.msra.mxu0 0.0
  %796 = vmatprep.subr.mxu0 0.0
  %797 = vmatpush1.msra.mxu0 0.0
  %798 = vmatprep.subr.mxu0 0.0
  %799 = vmatpush1.msra.mxu0 0.0
  %800 = vmatprep.subr.mxu0 0.0
  %801 = vmatpush1.msra.mxu0 0.0
  %802 = vmatprep.subr.mxu0 0.0
  %803 = vmatpush1.msra.mxu0 0.0
  %804 = vmatprep.subr.mxu0 0.0
  %805 = vmatpush1.msra.mxu0 0.0
  %806 = vmatprep.subr.mxu0 0.0
  %807 = vmatpush1.msra.mxu0 0.0
  %808 = vmatprep.subr.mxu0 0.0
  %809 = vmatpush1.msra.mxu0 0.0
  %810 = vmatprep.subr.mxu0 0.0
  %811 = vmatpush1.msra.mxu0 0.0
  %812 = vmatprep.subr.mxu0 0.0
  %813 = vmatpush1.msra.mxu0 0.0
  %814 = vmatprep.subr.mxu0 0.0
  %815 = vmatpush1.msra.mxu0 0.0
  %816 = vmatprep.mubr.f32.mxu0 0.0
  %817 = vmatmul.mubr.f32.gmra.mrb[0].mxu0 %v742
  %v818 = vpop.f32.mrb[0].mxu0
  %v819 = vadd.f32 0.0, %v818
  %v820 = vpop.f32.mrb[0].mxu0
  %v821 = vadd.f32 0.0, %v820
  %822 = vdwg.mxu0
  %823 = vmatprep.subr.mxu0 %v552
  %824 = vmatpush1.msra.mxu0 %v551
  %825 = vmatprep.subr.mxu0 %v556
  %826 = vmatpush1.msra.mxu0 %v555
  %827 = vmatprep.subr.mxu0 %v560
  %828 = vmatpush1.msra.mxu0 %v559
  %829 = vmatprep.subr.mxu0 %v564
  %830 = vmatpush1.msra.mxu0 %v563
  %831 = vmatprep.subr.mxu0 %v568
  %832 = vmatpush1.msra.mxu0 %v567
  %833 = vmatprep.subr.mxu0 %v572
  %834 = vmatpush1.msra.mxu0 %v571
  %835 = vmatprep.subr.mxu0 %v576
  %836 = vmatpush1.msra.mxu0 %v575
  %837 = vmatprep.subr.mxu0 %v580
  %838 = vmatpush1.msra.mxu0 %v579
  %839 = vmatprep.subr.mxu0 %v584
  %840 = vmatpush1.msra.mxu0 %v583
  %841 = vmatprep.subr.mxu0 %v588
  %842 = vmatpush1.msra.mxu0 %v587
  %843 = vmatprep.subr.mxu0 %v592
  %844 = vmatpush1.msra.mxu0 %v591
  %845 = vmatprep.subr.mxu0 %v596
  %846 = vmatpush1.msra.mxu0 %v595
  %847 = vmatprep.subr.mxu0 %v600
  %848 = vmatpush1.msra.mxu0 %v599
  %849 = vmatprep.subr.mxu0 %v604
  %850 = vmatpush1.msra.mxu0 %v603
  %851 = vmatprep.subr.mxu0 %v608
  %852 = vmatpush1.msra.mxu0 %v607
  %853 = vmatprep.subr.mxu0 %v612
  %854 = vmatpush1.msra.mxu0 %v611
  %855 = vmatprep.subr.mxu0 0.0
  %856 = vmatpush1.msra.mxu0 0.0
  %857 = vmatprep.subr.mxu0 0.0
  %858 = vmatpush1.msra.mxu0 0.0
  %859 = vmatprep.subr.mxu0 0.0
  %860 = vmatpush1.msra.mxu0 0.0
  %861 = vmatprep.subr.mxu0 0.0
  %862 = vmatpush1.msra.mxu0 0.0
  %863 = vmatprep.subr.mxu0 0.0
  %864 = vmatpush1.msra.mxu0 0.0
  %865 = vmatprep.subr.mxu0 0.0
  %866 = vmatpush1.msra.mxu0 0.0
  %867 = vmatprep.subr.mxu0 0.0
  %868 = vmatpush1.msra.mxu0 0.0
  %869 = vmatprep.subr.mxu0 0.0
  %870 = vmatpush1.msra.mxu0 0.0
  %871 = vmatprep.subr.mxu0 0.0
  %872 = vmatpush1.msra.mxu0 0.0
  %873 = vmatprep.subr.mxu0 0.0
  %874 = vmatpush1.msra.mxu0 0.0
  %875 = vmatprep.subr.mxu0 0.0
  %876 = vmatpush1.msra.mxu0 0.0
  %877 = vmatprep.subr.mxu0 0.0
  %878 = vmatpush1.msra.mxu0 0.0
  %879 = vmatprep.subr.mxu0 0.0
  %880 = vmatpush1.msra.mxu0 0.0
  %881 = vmatprep.subr.mxu0 0.0
  %882 = vmatpush1.msra.mxu0 0.0
  %883 = vmatprep.subr.mxu0 0.0
  %884 = vmatpush1.msra.mxu0 0.0
  %885 = vmatprep.subr.mxu0 0.0
  %886 = vmatpush1.msra.mxu0 0.0
  %887 = vmatprep.mubr.f32.mxu0 0.0
  %888 = vmatmul.mubr.f32.gmra.mrb[0].mxu0 %v742
  %v889 = vpop.f32.mrb[0].mxu0
  %v890 = vadd.f32 0.0, %v889
  %v891 = vpop.f32.mrb[0].mxu0
  %v892 = vadd.f32 0.0, %v891
  %893 = vdwg.mxu0
  %v894 = vadd.f32 %v748, %v819
  %v895 = vadd.f32 %v749, %v821
  %v896 = vadd.f32 %v750, %v890
  %v897 = vadd.f32 %v751, %v892
  %v898 = vxor.u32 %v894, 2147483648
  %v899 = vmul.f32 %v898, 1.442695
  %v900 = vpow.pop %v899
  %v901 = vadd.f32 %v900, 1.0
  %v902 = vrcp.pop %v901
  %v903 = vmul.f32 1.0, %v902
  %v904 = vxor.u32 %v895, 2147483648
  %v905 = vmul.f32 %v904, 1.442695
  %v906 = vpow.pop %v905
  %v907 = vadd.f32 %v906, 1.0
  %v908 = vrcp.pop %v907
  %v909 = vmul.f32 1.0, %v908
  %v910 = vtanh.pop %v896
  %v911 = vxor.u32 %v897, 2147483648
  %v912 = vmul.f32 %v911, 1.442695
  %v913 = vpow.pop %v912
  %v914 = vadd.f32 %v913, 1.0
  %v915 = vrcp.pop %v914
  %v916 = vmul.f32 1.0, %v915
  %v917 = vmul.f32 %v909, %v743
  %v918 = vmul.f32 %v903, %v910
  %v919 = vadd.f32 %v917, %v918
  %v920 = vtanh.pop %v919
  %v921 = vmul.f32 %v916, %v920
  %v923 = vlaneseq
  %v924 = vshrl.u32 %v923, 7
  %v925 = vsub.s32 0, %v924
  %v926 = vrot.slane %v741, %v925
  %v927 = vlaneseq
  %v928 = vshrl.u32 %v927, 7
  %v929 = vsub.s32 1, %v928
  %v930 = vrot.slane %v741, %v929
  %v931 = vlaneseq
  %v932 = vshrl.u32 %v931, 7
  %v933 = vsub.s32 2, %v932
  %v934 = vrot.slane %v741, %v933
  %v935 = vlaneseq
  %v936 = vshrl.u32 %v935, 7
  %v937 = vsub.s32 3, %v936
  %v938 = vrot.slane %v741, %v937
  %943 = vmatprep.subr.mxu0 %v614
  %944 = vmatpush1.msra.mxu0 %v613
  %945 = vmatprep.subr.mxu0 %v618
  %946 = vmatpush1.msra.mxu0 %v617
  %947 = vmatprep.subr.mxu0 %v622
  %948 = vmatpush1.msra.mxu0 %v621
  %949 = vmatprep.subr.mxu0 %v626
  %950 = vmatpush1.msra.mxu0 %v625
  %951 = vmatprep.subr.mxu0 %v630
  %952 = vmatpush1.msra.mxu0 %v629
  %953 = vmatprep.subr.mxu0 %v634
  %954 = vmatpush1.msra.mxu0 %v633
  %955 = vmatprep.subr.mxu0 %v638
  %956 = vmatpush1.msra.mxu0 %v637
  %957 = vmatprep.subr.mxu0 %v642
  %958 = vmatpush1.msra.mxu0 %v641
  %959 = vmatprep.subr.mxu0 %v646
  %960 = vmatpush1.msra.mxu0 %v645
  %961 = vmatprep.subr.mxu0 %v650
  %962 = vmatpush1.msra.mxu0 %v649
  %963 = vmatprep.subr.mxu0 %v654
  %964 = vmatpush1.msra.mxu0 %v653
  %965 = vmatprep.subr.mxu0 %v658
  %966 = vmatpush1.msra.mxu0 %v657
  %967 = vmatprep.subr.mxu0 %v662
  %968 = vmatpush1.msra.mxu0 %v661
  %969 = vmatprep.subr.mxu0 %v666
  %970 = vmatpush1.msra.mxu0 %v665
  %971 = vmatprep.subr.mxu0 %v670
  %972 = vmatpush1.msra.mxu0 %v669
  %973 = vmatprep.subr.mxu0 %v674
  %974 = vmatpush1.msra.mxu0 %v673
  %975 = vmatprep.subr.mxu0 %v678
  %976 = vmatpush1.msra.mxu0 %v677
  %977 = vmatprep.subr.mxu0 %v682
  %978 = vmatpush1.msra.mxu0 %v681
  %979 = vmatprep.subr.mxu0 %v686
  %980 = vmatpush1.msra.mxu0 %v685
  %981 = vmatprep.subr.mxu0 %v690
  %982 = vmatpush1.msra.mxu0 %v689
  %983 = vmatprep.subr.mxu0 %v694
  %984 = vmatpush1.msra.mxu0 %v693
  %985 = vmatprep.subr.mxu0 %v698
  %986 = vmatpush1.msra.mxu0 %v697
  %987 = vmatprep.subr.mxu0 %v702
  %988 = vmatpush1.msra.mxu0 %v701
  %989 = vmatprep.subr.mxu0 %v706
  %990 = vmatpush1.msra.mxu0 %v705
  %991 = vmatprep.subr.mxu0 %v710
  %992 = vmatpush1.msra.mxu0 %v709
  %993 = vmatprep.subr.mxu0 %v714
  %994 = vmatpush1.msra.mxu0 %v713
  %995 = vmatprep.subr.mxu0 %v718
  %996 = vmatpush1.msra.mxu0 %v717
  %997 = vmatprep.subr.mxu0 %v722
  %998 = vmatpush1.msra.mxu0 %v721
  %999 = vmatprep.subr.mxu0 %v726
  %1000 = vmatpush1.msra.mxu0 %v725
  %1001 = vmatprep.subr.mxu0 %v730
  %1002 = vmatpush1.msra.mxu0 %v729
  %1003 = vmatprep.subr.mxu0 %v734
  %1004 = vmatpush1.msra.mxu0 %v733
  %1005 = vmatprep.subr.mxu0 %v738
  %1006 = vmatpush1.msra.mxu0 %v737
  %1007 = vmatprep.mubr.f32.mxu0 %v745
  %1008 = vmatmul.mubr.f32.gmra.mrb[0].mxu0 %v921
  %v1009 = vpop.f32.mrb[0].mxu0
  %v1010 = vadd.f32 %v926, %v1009
  %v1011 = vpop.f32.mrb[0].mxu0
  %v1012 = vadd.f32 %v930, %v1011
  %1013 = vdwg.mxu0
  %1014 = vmatprep.subr.mxu0 %v616
  %1015 = vmatpush1.msra.mxu0 %v615
  %1016 = vmatprep.subr.mxu0 %v620
  %1017 = vmatpush1.msra.mxu0 %v619
  %1018 = vmatprep.subr.mxu0 %v624
  %1019 = vmatpush1.msra.mxu0 %v623
  %1020 = vmatprep.subr.mxu0 %v628
  %1021 = vmatpush1.msra.mxu0 %v627
  %1022 = vmatprep.subr.mxu0 %v632
  %1023 = vmatpush1.msra.mxu0 %v631
  %1024 = vmatprep.subr.mxu0 %v636
  %1025 = vmatpush1.msra.mxu0 %v635
  %1026 = vmatprep.subr.mxu0 %v640
  %1027 = vmatpush1.msra.mxu0 %v639
  %1028 = vmatprep.subr.mxu0 %v644
  %1029 = vmatpush1.msra.mxu0 %v643
  %1030 = vmatprep.subr.mxu0 %v648
  %1031 = vmatpush1.msra.mxu0 %v647
  %1032 = vmatprep.subr.mxu0 %v652
  %1033 = vmatpush1.msra.mxu0 %v651
  %1034 = vmatprep.subr.mxu0 %v656
  %1035 = vmatpush1.msra.mxu0 %v655
  %1036 = vmatprep.subr.mxu0 %v660
  %1037 = vmatpush1.msra.mxu0 %v659
  %1038 = vmatprep.subr.mxu0 %v664
  %1039 = vmatpush1.msra.mxu0 %v663
  %1040 = vmatprep.subr.mxu0 %v668
  %1041 = vmatpush1.msra.mxu0 %v667
  %1042 = vmatprep.subr.mxu0 %v672
  %1043 = vmatpush1.msra.mxu0 %v671
  %1044 = vmatprep.subr.mxu0 %v676
  %1045 = vmatpush1.msra.mxu0 %v675
  %1046 = vmatprep.subr.mxu0 %v680
  %1047 = vmatpush1.msra.mxu0 %v679
  %1048 = vmatprep.subr.mxu0 %v684
  %1049 = vmatpush1.msra.mxu0 %v683
  %1050 = vmatprep.subr.mxu0 %v688
  %1051 = vmatpush1.msra.mxu0 %v687
  %1052 = vmatprep.subr.mxu0 %v692
  %1053 = vmatpush1.msra.mxu0 %v691
  %1054 = vmatprep.subr.mxu0 %v696
  %1055 = vmatpush1.msra.mxu0 %v695
  %1056 = vmatprep.subr.mxu0 %v700
  %1057 = vmatpush1.msra.mxu0 %v699
  %1058 = vmatprep.subr.mxu0 %v704
  %1059 = vmatpush1.msra.mxu0 %v703
  %1060 = vmatprep.subr.mxu0 %v708
  %1061 = vmatpush1.msra.mxu0 %v707
  %1062 = vmatprep.subr.mxu0 %v712
  %1063 = vmatpush1.msra.mxu0 %v711
  %1064 = vmatprep.subr.mxu0 %v716
  %1065 = vmatpush1.msra.mxu0 %v715
  %1066 = vmatprep.subr.mxu0 %v720
  %1067 = vmatpush1.msra.mxu0 %v719
  %1068 = vmatprep.subr.mxu0 %v724
  %1069 = vmatpush1.msra.mxu0 %v723
  %1070 = vmatprep.subr.mxu0 %v728
  %1071 = vmatpush1.msra.mxu0 %v727
  %1072 = vmatprep.subr.mxu0 %v732
  %1073 = vmatpush1.msra.mxu0 %v731
  %1074 = vmatprep.subr.mxu0 %v736
  %1075 = vmatpush1.msra.mxu0 %v735
  %1076 = vmatprep.subr.mxu0 %v740
  %1077 = vmatpush1.msra.mxu0 %v739
  %1078 = vmatprep.mubr.f32.mxu0 %v745
  %1079 = vmatmul.mubr.f32.gmra.mrb[0].mxu0 %v921
  %v1080 = vpop.f32.mrb[0].mxu0
  %v1081 = vadd.f32 %v934, %v1080
  %v1082 = vpop.f32.mrb[0].mxu0
  %v1083 = vadd.f32 %v938, %v1082
  %1084 = vdwg.mxu0
  %v1085 = vxor.u32 %v1010, 2147483648
  %v1086 = vmul.f32 %v1085, 1.442695
  %v1087 = vpow.pop %v1086
  %v1088 = vadd.f32 %v1087, 1.0
  %v1089 = vrcp.pop %v1088
  %v1090 = vmul.f32 1.0, %v1089
  %v1091 = vxor.u32 %v1012, 2147483648
  %v1092 = vmul.f32 %v1091, 1.442695
  %v1093 = vpow.pop %v1092
  %v1094 = vadd.f32 %v1093, 1.0
  %v1095 = vrcp.pop %v1094
  %v1096 = vmul.f32 1.0, %v1095
  %v1097 = vtanh.pop %v1081
  %v1098 = vxor.u32 %v1083, 2147483648
  %v1099 = vmul.f32 %v1098, 1.442695
  %v1100 = vpow.pop %v1099
  %v1101 = vadd.f32 %v1100, 1.0
  %v1102 = vrcp.pop %v1101
  %v1103 = vmul.f32 1.0, %v1102
  %v1104 = vmul.f32 %v1096, %v747
  %v1105 = vmul.f32 %v1090, %v1097
  %v1106 = vadd.f32 %v1104, %v1105
  %v1107 = vtanh.pop %v1106
  %v1108 = vmul.f32 %v1103, %v1107
  %s1109 = scalar_lea.vmem [#allocation2], 32
  %v1110 = vld [vmem:[%s1109] sm:$0xff]
  %v1111 = vld [vmem:[%s1109 + $0x8] sm:$0xff]
  %v1112 = vld [vmem:[%s1109 + $0x10] sm:$0xff]
  %v1113 = vld [vmem:[%s1109 + $0x18] sm:$0xff]
  %1114 = vmatprep.subr.mxu0 %v550
  %1115 = vmatpush1.msra.mxu0 %v549
  %1116 = vmatprep.subr.mxu0 %v554
  %1117 = vmatpush1.msra.mxu0 %v553
  %1118 = vmatprep.subr.mxu0 %v558
  %1119 = vmatpush1.msra.mxu0 %v557
  %1120 = vmatprep.subr.mxu0 %v562
  %1121 = vmatpush1.msra.mxu0 %v561
  %1122 = vmatprep.subr.mxu0 %v566
  %1123 = vmatpush1.msra.mxu0 %v565
  %1124 = vmatprep.subr.mxu0 %v570
  %1125 = vmatpush1.msra.mxu0 %v569
  %1126 = vmatprep.subr.mxu0 %v574
  %1127 = vmatpush1.msra.mxu0 %v573
  %1128 = vmatprep.subr.mxu0 %v578
  %1129 = vmatpush1.msra.mxu0 %v577
  %1130 = vmatprep.subr.mxu0 %v582
  %1131 = vmatpush1.msra.mxu0 %v581
  %1132 = vmatprep.subr.mxu0 %v586
  %1133 = vmatpush1.msra.mxu0 %v585
  %1134 = vmatprep.subr.mxu0 %v590
  %1135 = vmatpush1.msra.mxu0 %v589
  %1136 = vmatprep.subr.mxu0 %v594
  %1137 = vmatpush1.msra.mxu0 %v593
  %1138 = vmatprep.subr.mxu0 %v598
  %1139 = vmatpush1.msra.mxu0 %v597
  %1140 = vmatprep.subr.mxu0 %v602
  %1141 = vmatpush1.msra.mxu0 %v601
  %1142 = vmatprep.subr.mxu0 %v606
  %1143 = vmatpush1.msra.mxu0 %v605
  %1144 = vmatprep.subr.mxu0 %v610
  %1145 = vmatpush1.msra.mxu0 %v609
  %1146 = vmatprep.subr.mxu0 0.0
  %1147 = vmatpush1.msra.mxu0 0.0
  %1148 = vmatprep.subr.mxu0 0.0
  %1149 = vmatpush1.msra.mxu0 0.0
  %1150 = vmatprep.subr.mxu0 0.0
  %1151 = vmatpush1.msra.mxu0 0.0
  %1152 = vmatprep.subr.mxu0 0.0
  %1153 = vmatpush1.msra.mxu0 0.0
  %1154 = vmatprep.subr.mxu0 0.0
  %1155 = vmatpush1.msra.mxu0 0.0
  %1156 = vmatprep.subr.mxu0 0.0
  %1157 = vmatpush1.msra.mxu0 0.0
  %1158 = vmatprep.subr.mxu0 0.0
  %1159 = vmatpush1.msra.mxu0 0.0
  %1160 = vmatprep.subr.mxu0 0.0
  %1161 = vmatpush1.msra.mxu0 0.0
  %1162 = vmatprep.subr.mxu0 0.0
  %1163 = vmatpush1.msra.mxu0 0.0
  %1164 = vmatprep.subr.mxu0 0.0
  %1165 = vmatpush1.msra.mxu0 0.0
  %1166 = vmatprep.subr.mxu0 0.0
  %1167 = vmatpush1.msra.mxu0 0.0
  %1168 = vmatprep.subr.mxu0 0.0
  %1169 = vmatpush1.msra.mxu0 0.0
  %1170 = vmatprep.subr.mxu0 0.0
  %1171 = vmatpush1.msra.mxu0 0.0
  %1172 = vmatprep.subr.mxu0 0.0
  %1173 = vmatpush1.msra.mxu0 0.0
  %1174 = vmatprep.subr.mxu0 0.0
  %1175 = vmatpush1.msra.mxu0 0.0
  %1176 = vmatprep.subr.mxu0 0.0
  %1177 = vmatpush1.msra.mxu0 0.0
  %1178 = vmatprep.mubr.f32.mxu0 0.0
  %1179 = vmatmul.mubr.f32.gmra.mrb[0].mxu0 %v921
  %v1180 = vpop.f32.mrb[0].mxu0
  %v1181 = vadd.f32 0.0, %v1180
  %v1182 = vpop.f32.mrb[0].mxu0
  %v1183 = vadd.f32 0.0, %v1182
  %1184 = vdwg.mxu0
  %1185 = vmatprep.subr.mxu0 %v552
  %1186 = vmatpush1.msra.mxu0 %v551
  %1187 = vmatprep.subr.mxu0 %v556
  %1188 = vmatpush1.msra.mxu0 %v555
  %1189 = vmatprep.subr.mxu0 %v560
  %1190 = vmatpush1.msra.mxu0 %v559
  %1191 = vmatprep.subr.mxu0 %v564
  %1192 = vmatpush1.msra.mxu0 %v563
  %1193 = vmatprep.subr.mxu0 %v568
  %1194 = vmatpush1.msra.mxu0 %v567
  %1195 = vmatprep.subr.mxu0 %v572
  %1196 = vmatpush1.msra.mxu0 %v571
  %1197 = vmatprep.subr.mxu0 %v576
  %1198 = vmatpush1.msra.mxu0 %v575
  %1199 = vmatprep.subr.mxu0 %v580
  %1200 = vmatpush1.msra.mxu0 %v579
  %1201 = vmatprep.subr.mxu0 %v584
  %1202 = vmatpush1.msra.mxu0 %v583
  %1203 = vmatprep.subr.mxu0 %v588
  %1204 = vmatpush1.msra.mxu0 %v587
  %1205 = vmatprep.subr.mxu0 %v592
  %1206 = vmatpush1.msra.mxu0 %v591
  %1207 = vmatprep.subr.mxu0 %v596
  %1208 = vmatpush1.msra.mxu0 %v595
  %1209 = vmatprep.subr.mxu0 %v600
  %1210 = vmatpush1.msra.mxu0 %v599
  %1211 = vmatprep.subr.mxu0 %v604
  %1212 = vmatpush1.msra.mxu0 %v603
  %1213 = vmatprep.subr.mxu0 %v608
  %1214 = vmatpush1.msra.mxu0 %v607
  %1215 = vmatprep.subr.mxu0 %v612
  %1216 = vmatpush1.msra.mxu0 %v611
  %1217 = vmatprep.subr.mxu0 0.0
  %1218 = vmatpush1.msra.mxu0 0.0
  %1219 = vmatprep.subr.mxu0 0.0
  %1220 = vmatpush1.msra.mxu0 0.0
  %1221 = vmatprep.subr.mxu0 0.0
  %1222 = vmatpush1.msra.mxu0 0.0
  %1223 = vmatprep.subr.mxu0 0.0
  %1224 = vmatpush1.msra.mxu0 0.0
  %1225 = vmatprep.subr.mxu0 0.0
  %1226 = vmatpush1.msra.mxu0 0.0
  %1227 = vmatprep.subr.mxu0 0.0
  %1228 = vmatpush1.msra.mxu0 0.0
  %1229 = vmatprep.subr.mxu0 0.0
  %1230 = vmatpush1.msra.mxu0 0.0
  %1231 = vmatprep.subr.mxu0 0.0
  %1232 = vmatpush1.msra.mxu0 0.0
  %1233 = vmatprep.subr.mxu0 0.0
  %1234 = vmatpush1.msra.mxu0 0.0
  %1235 = vmatprep.subr.mxu0 0.0
  %1236 = vmatpush1.msra.mxu0 0.0
  %1237 = vmatprep.subr.mxu0 0.0
  %1238 = vmatpush1.msra.mxu0 0.0
  %1239 = vmatprep.subr.mxu0 0.0
  %1240 = vmatpush1.msra.mxu0 0.0
  %1241 = vmatprep.subr.mxu0 0.0
  %1242 = vmatpush1.msra.mxu0 0.0
  %1243 = vmatprep.subr.mxu0 0.0
  %1244 = vmatpush1.msra.mxu0 0.0
  %1245 = vmatprep.subr.mxu0 0.0
  %1246 = vmatpush1.msra.mxu0 0.0
  %1247 = vmatprep.subr.mxu0 0.0
  %1248 = vmatpush1.msra.mxu0 0.0
  %1249 = vmatprep.mubr.f32.mxu0 0.0
  %1250 = vmatmul.mubr.f32.gmra.mrb[0].mxu0 %v921
  %v1251 = vpop.f32.mrb[0].mxu0
  %v1252 = vadd.f32 0.0, %v1251
  %v1253 = vpop.f32.mrb[0].mxu0
  %v1254 = vadd.f32 0.0, %v1253
  %1255 = vdwg.mxu0
  %v1256 = vadd.f32 %v1110, %v1181
  %v1257 = vadd.f32 %v1111, %v1183
  %v1258 = vadd.f32 %v1112, %v1252
  %v1259 = vadd.f32 %v1113, %v1254
  %v1260 = vxor.u32 %v1256, 2147483648
  %v1261 = vmul.f32 %v1260, 1.442695
  %v1262 = vpow.pop %v1261
  %v1263 = vadd.f32 %v1262, 1.0
  %v1264 = vrcp.pop %v1263
  %v1265 = vmul.f32 1.0, %v1264
  %v1266 = vxor.u32 %v1257, 2147483648
  %v1267 = vmul.f32 %v1266, 1.442695
  %v1268 = vpow.pop %v1267
  %v1269 = vadd.f32 %v1268, 1.0
  %v1270 = vrcp.pop %v1269
  %v1271 = vmul.f32 1.0, %v1270
  %v1272 = vtanh.pop %v1258
  %v1273 = vxor.u32 %v1259, 2147483648
  %v1274 = vmul.f32 %v1273, 1.442695
  %v1275 = vpow.pop %v1274
  %v1276 = vadd.f32 %v1275, 1.0
  %v1277 = vrcp.pop %v1276
  %v1278 = vmul.f32 1.0, %v1277
  %v1279 = vmul.f32 %v1271, %v919
  %v1280 = vmul.f32 %v1265, %v1272
  %v1281 = vadd.f32 %v1279, %v1280
  %v1282 = vtanh.pop %v1281
  %v1283 = vmul.f32 %v1278, %v1282
  %1284 = vmatprep.subr.mxu0 %v614
  %1285 = vmatpush1.msra.mxu0 %v613
  %1286 = vmatprep.subr.mxu0 %v618
  %1287 = vmatpush1.msra.mxu0 %v617
  %1288 = vmatprep.subr.mxu0 %v622
  %1289 = vmatpush1.msra.mxu0 %v621
  %1290 = vmatprep.subr.mxu0 %v626
  %1291 = vmatpush1.msra.mxu0 %v625
  %1292 = vmatprep.subr.mxu0 %v630
  %1293 = vmatpush1.msra.mxu0 %v629
  %1294 = vmatprep.subr.mxu0 %v634
  %1295 = vmatpush1.msra.mxu0 %v633
  %1296 = vmatprep.subr.mxu0 %v638
  %1297 = vmatpush1.msra.mxu0 %v637
  %1298 = vmatprep.subr.mxu0 %v642
  %1299 = vmatpush1.msra.mxu0 %v641
  %1300 = vmatprep.subr.mxu0 %v646
  %1301 = vmatpush1.msra.mxu0 %v645
  %1302 = vmatprep.subr.mxu0 %v650
  %1303 = vmatpush1.msra.mxu0 %v649
  %1304 = vmatprep.subr.mxu0 %v654
  %1305 = vmatpush1.msra.mxu0 %v653
  %1306 = vmatprep.subr.mxu0 %v658
  %1307 = vmatpush1.msra.mxu0 %v657
  %1308 = vmatprep.subr.mxu0 %v662
  %1309 = vmatpush1.msra.mxu0 %v661
  %1310 = vmatprep.subr.mxu0 %v666
  %1311 = vmatpush1.msra.mxu0 %v665
  %1312 = vmatprep.subr.mxu0 %v670
  %1313 = vmatpush1.msra.mxu0 %v669
  %1314 = vmatprep.subr.mxu0 %v674
  %1315 = vmatpush1.msra.mxu0 %v673
  %1316 = vmatprep.subr.mxu0 %v678
  %1317 = vmatpush1.msra.mxu0 %v677
  %1318 = vmatprep.subr.mxu0 %v682
  %1319 = vmatpush1.msra.mxu0 %v681
  %1320 = vmatprep.subr.mxu0 %v686
  %1321 = vmatpush1.msra.mxu0 %v685
  %1322 = vmatprep.subr.mxu0 %v690
  %1323 = vmatpush1.msra.mxu0 %v689
  %1324 = vmatprep.subr.mxu0 %v694
  %1325 = vmatpush1.msra.mxu0 %v693
  %1326 = vmatprep.subr.mxu0 %v698
  %1327 = vmatpush1.msra.mxu0 %v697
  %1328 = vmatprep.subr.mxu0 %v702
  %1329 = vmatpush1.msra.mxu0 %v701
  %1330 = vmatprep.subr.mxu0 %v706
  %1331 = vmatpush1.msra.mxu0 %v705
  %1332 = vmatprep.subr.mxu0 %v710
  %1333 = vmatpush1.msra.mxu0 %v709
  %1334 = vmatprep.subr.mxu0 %v714
  %1335 = vmatpush1.msra.mxu0 %v713
  %1336 = vmatprep.subr.mxu0 %v718
  %1337 = vmatpush1.msra.mxu0 %v717
  %1338 = vmatprep.subr.mxu0 %v722
  %1339 = vmatpush1.msra.mxu0 %v721
  %1340 = vmatprep.subr.mxu0 %v726
  %1341 = vmatpush1.msra.mxu0 %v725
  %1342 = vmatprep.subr.mxu0 %v730
  %1343 = vmatpush1.msra.mxu0 %v729
  %1344 = vmatprep.subr.mxu0 %v734
  %1345 = vmatpush1.msra.mxu0 %v733
  %1346 = vmatprep.subr.mxu0 %v738
  %1347 = vmatpush1.msra.mxu0 %v737
  %1348 = vmatprep.mubr.f32.mxu0 %v1108
  %1349 = vmatmul.mubr.f32.gmra.mrb[0].mxu0 %v1283
  %v1350 = vpop.f32.mrb[0].mxu0
  %v1351 = vadd.f32 %v926, %v1350
  %v1352 = vpop.f32.mrb[0].mxu0
  %v1353 = vadd.f32 %v930, %v1352
  %1354 = vdwg.mxu0
  %1355 = vmatprep.subr.mxu0 %v616
  %1356 = vmatpush1.msra.mxu0 %v615
  %1357 = vmatprep.subr.mxu0 %v620
  %1358 = vmatpush1.msra.mxu0 %v619
  %1359 = vmatprep.subr.mxu0 %v624
  %1360 = vmatpush1.msra.mxu0 %v623
  %1361 = vmatprep.subr.mxu0 %v628
  %1362 = vmatpush1.msra.mxu0 %v627
  %1363 = vmatprep.subr.mxu0 %v632
  %1364 = vmatpush1.msra.mxu0 %v631
  %1365 = vmatprep.subr.mxu0 %v636
  %1366 = vmatpush1.msra.mxu0 %v635
  %1367 = vmatprep.subr.mxu0 %v640
  %1368 = vmatpush1.msra.mxu0 %v639
  %1369 = vmatprep.subr.mxu0 %v644
  %1370 = vmatpush1.msra.mxu0 %v643
  %1371 = vmatprep.subr.mxu0 %v648
  %1372 = vmatpush1.msra.mxu0 %v647
  %1373 = vmatprep.subr.mxu0 %v652
  %1374 = vmatpush1.msra.mxu0 %v651
  %1375 = vmatprep.subr.mxu0 %v656
  %1376 = vmatpush1.msra.mxu0 %v655
  %1377 = vmatprep.subr.mxu0 %v660
  %1378 = vmatpush1.msra.mxu0 %v659
  %1379 = vmatprep.subr.mxu0 %v664
  %1380 = vmatpush1.msra.mxu0 %v663
  %1381 = vmatprep.subr.mxu0 %v668
  %1382 = vmatpush1.msra.mxu0 %v667
  %1383 = vmatprep.subr.mxu0 %v672
  %1384 = vmatpush1.msra.mxu0 %v671
  %1385 = vmatprep.subr.mxu0 %v676
  %1386 = vmatpush1.msra.mxu0 %v675
  %1387 = vmatprep.subr.mxu0 %v680
  %1388 = vmatpush1.msra.mxu0 %v679
  %1389 = vmatprep.subr.mxu0 %v684
  %1390 = vmatpush1.msra.mxu0 %v683
  %1391 = vmatprep.subr.mxu0 %v688
  %1392 = vmatpush1.msra.mxu0 %v687
  %1393 = vmatprep.subr.mxu0 %v692
  %1394 = vmatpush1.msra.mxu0 %v691
  %1395 = vmatprep.subr.mxu0 %v696
  %1396 = vmatpush1.msra.mxu0 %v695
  %1397 = vmatprep.subr.mxu0 %v700
  %1398 = vmatpush1.msra.mxu0 %v699
  %1399 = vmatprep.subr.mxu0 %v704
  %1400 = vmatpush1.msra.mxu0 %v703
  %1401 = vmatprep.subr.mxu0 %v708
  %1402 = vmatpush1.msra.mxu0 %v707
  %1403 = vmatprep.subr.mxu0 %v712
  %1404 = vmatpush1.msra.mxu0 %v711
  %1405 = vmatprep.subr.mxu0 %v716
  %1406 = vmatpush1.msra.mxu0 %v715
  %1407 = vmatprep.subr.mxu0 %v720
  %1408 = vmatpush1.msra.mxu0 %v719
  %1409 = vmatprep.subr.mxu0 %v724
  %1410 = vmatpush1.msra.mxu0 %v723
  %1411 = vmatprep.subr.mxu0 %v728
  %1412 = vmatpush1.msra.mxu0 %v727
  %1413 = vmatprep.subr.mxu0 %v732
  %1414 = vmatpush1.msra.mxu0 %v731
  %1415 = vmatprep.subr.mxu0 %v736
  %1416 = vmatpush1.msra.mxu0 %v735
  %1417 = vmatprep.subr.mxu0 %v740
  %1418 = vmatpush1.msra.mxu0 %v739
  %1419 = vmatprep.mubr.f32.mxu0 %v1108
  %1420 = vmatmul.mubr.f32.gmra.mrb[0].mxu0 %v1283
  %v1421 = vpop.f32.mrb[0].mxu0
  %v1422 = vadd.f32 %v934, %v1421
  %v1423 = vpop.f32.mrb[0].mxu0
  %v1424 = vadd.f32 %v938, %v1423
  %1425 = vdwg.mxu0
  %v1426 = vxor.u32 %v1351, 2147483648
  %v1427 = vmul.f32 %v1426, 1.442695
  %v1428 = vpow.pop %v1427
  %v1429 = vadd.f32 %v1428, 1.0
  %v1430 = vrcp.pop %v1429
  %v1431 = vmul.f32 1.0, %v1430
  %v1432 = vxor.u32 %v1353, 2147483648
  %v1433 = vmul.f32 %v1432, 1.442695
  %v1434 = vpow.pop %v1433
  %v1435 = vadd.f32 %v1434, 1.0
  %v1436 = vrcp.pop %v1435
  %v1437 = vmul.f32 1.0, %v1436
  %v1438 = vtanh.pop %v1422
  %v1439 = vxor.u32 %v1424, 2147483648
  %v1440 = vmul.f32 %v1439, 1.442695
  %v1441 = vpow.pop %v1440
  %v1442 = vadd.f32 %v1441, 1.0
  %v1443 = vrcp.pop %v1442
  %v1444 = vmul.f32 1.0, %v1443
  %v1445 = vmul.f32 %v1437, %v1106
  %v1446 = vmul.f32 %v1431, %v1438
  %v1447 = vadd.f32 %v1445, %v1446
  %v1448 = vtanh.pop %v1447
  %v1449 = vmul.f32 %v1444, %v1448
  %s1450 = scalar_lea.vmem [#allocation2], 64
  %v1451 = vld [vmem:[%s1450] sm:$0xff]
  %v1452 = vld [vmem:[%s1450 + $0x8] sm:$0xff]
  %v1453 = vld [vmem:[%s1450 + $0x10] sm:$0xff]
  %v1454 = vld [vmem:[%s1450 + $0x18] sm:$0xff]
  %1455 = vmatprep.subr.mxu0 %v550
  %1456 = vmatpush1.msra.mxu0 %v549
  %1457 = vmatprep.subr.mxu0 %v554
  %1458 = vmatpush1.msra.mxu0 %v553
  %1459 = vmatprep.subr.mxu0 %v558
  %1460 = vmatpush1.msra.mxu0 %v557
  %1461 = vmatprep.subr.mxu0 %v562
  %1462 = vmatpush1.msra.mxu0 %v561
  %1463 = vmatprep.subr.mxu0 %v566
  %1464 = vmatpush1.msra.mxu0 %v565
  %1465 = vmatprep.subr.mxu0 %v570
  %1466 = vmatpush1.msra.mxu0 %v569
  %1467 = vmatprep.subr.mxu0 %v574
  %1468 = vmatpush1.msra.mxu0 %v573
  %1469 = vmatprep.subr.mxu0 %v578
  %1470 = vmatpush1.msra.mxu0 %v577
  %1471 = vmatprep.subr.mxu0 %v582
  %1472 = vmatpush1.msra.mxu0 %v581
  %1473 = vmatprep.subr.mxu0 %v586
  %1474 = vmatpush1.msra.mxu0 %v585
  %1475 = vmatprep.subr.mxu0 %v590
  %1476 = vmatpush1.msra.mxu0 %v589
  %1477 = vmatprep.subr.mxu0 %v594
  %1478 = vmatpush1.msra.mxu0 %v593
  %1479 = vmatprep.subr.mxu0 %v598
  %1480 = vmatpush1.msra.mxu0 %v597
  %1481 = vmatprep.subr.mxu0 %v602
  %1482 = vmatpush1.msra.mxu0 %v601
  %1483 = vmatprep.subr.mxu0 %v606
  %1484 = vmatpush1.msra.mxu0 %v605
  %1485 = vmatprep.subr.mxu0 %v610
  %1486 = vmatpush1.msra.mxu0 %v609
  %1487 = vmatprep.subr.mxu0 0.0
  %1488 = vmatpush1.msra.mxu0 0.0
  %1489 = vmatprep.subr.mxu0 0.0
  %1490 = vmatpush1.msra.mxu0 0.0
  %1491 = vmatprep.subr.mxu0 0.0
  %1492 = vmatpush1.msra.mxu0 0.0
  %1493 = vmatprep.subr.mxu0 0.0
  %1494 = vmatpush1.msra.mxu0 0.0
  %1495 = vmatprep.subr.mxu0 0.0
  %1496 = vmatpush1.msra.mxu0 0.0
  %1497 = vmatprep.subr.mxu0 0.0
  %1498 = vmatpush1.msra.mxu0 0.0
  %1499 = vmatprep.subr.mxu0 0.0
  %1500 = vmatpush1.msra.mxu0 0.0
  %1501 = vmatprep.subr.mxu0 0.0
  %1502 = vmatpush1.msra.mxu0 0.0
  %1503 = vmatprep.subr.mxu0 0.0
  %1504 = vmatpush1.msra.mxu0 0.0
  %1505 = vmatprep.subr.mxu0 0.0
  %1506 = vmatpush1.msra.mxu0 0.0
  %1507 = vmatprep.subr.mxu0 0.0
  %1508 = vmatpush1.msra.mxu0 0.0
  %1509 = vmatprep.subr.mxu0 0.0
  %1510 = vmatpush1.msra.mxu0 0.0
  %1511 = vmatprep.subr.mxu0 0.0
  %1512 = vmatpush1.msra.mxu0 0.0
  %1513 = vmatprep.subr.mxu0 0.0
  %1514 = vmatpush1.msra.mxu0 0.0
  %1515 = vmatprep.subr.mxu0 0.0
  %1516 = vmatpush1.msra.mxu0 0.0
  %1517 = vmatprep.subr.mxu0 0.0
  %1518 = vmatpush1.msra.mxu0 0.0
  %1519 = vmatprep.mubr.f32.mxu0 0.0
  %1520 = vmatmul.mubr.f32.gmra.mrb[0].mxu0 %v1283
  %v1521 = vpop.f32.mrb[0].mxu0
  %v1522 = vadd.f32 0.0, %v1521
  %v1523 = vpop.f32.mrb[0].mxu0
  %v1524 = vadd.f32 0.0, %v1523
  %1525 = vdwg.mxu0
  %1526 = vmatprep.subr.mxu0 %v552
  %1527 = vmatpush1.msra.mxu0 %v551
  %1528 = vmatprep.subr.mxu0 %v556
  %1529 = vmatpush1.msra.mxu0 %v555
  %1530 = vmatprep.subr.mxu0 %v560
  %1531 = vmatpush1.msra.mxu0 %v559
  %1532 = vmatprep.subr.mxu0 %v564
  %1533 = vmatpush1.msra.mxu0 %v563
  %1534 = vmatprep.subr.mxu0 %v568
  %1535 = vmatpush1.msra.mxu0 %v567
  %1536 = vmatprep.subr.mxu0 %v572
  %1537 = vmatpush1.msra.mxu0 %v571
  %1538 = vmatprep.subr.mxu0 %v576
  %1539 = vmatpush1.msra.mxu0 %v575
  %1540 = vmatprep.subr.mxu0 %v580
  %1541 = vmatpush1.msra.mxu0 %v579
  %1542 = vmatprep.subr.mxu0 %v584
  %1543 = vmatpush1.msra.mxu0 %v583
  %1544 = vmatprep.subr.mxu0 %v588
  %1545 = vmatpush1.msra.mxu0 %v587
  %1546 = vmatprep.subr.mxu0 %v592
  %1547 = vmatpush1.msra.mxu0 %v591
  %1548 = vmatprep.subr.mxu0 %v596
  %1549 = vmatpush1.msra.mxu0 %v595
  %1550 = vmatprep.subr.mxu0 %v600
  %1551 = vmatpush1.msra.mxu0 %v599
  %1552 = vmatprep.subr.mxu0 %v604
  %1553 = vmatpush1.msra.mxu0 %v603
  %1554 = vmatprep.subr.mxu0 %v608
  %1555 = vmatpush1.msra.mxu0 %v607
  %1556 = vmatprep.subr.mxu0 %v612
  %1557 = vmatpush1.msra.mxu0 %v611
  %1558 = vmatprep.subr.mxu0 0.0
  %1559 = vmatpush1.msra.mxu0 0.0
  %1560 = vmatprep.subr.mxu0 0.0
  %1561 = vmatpush1.msra.mxu0 0.0
  %1562 = vmatprep.subr.mxu0 0.0
  %1563 = vmatpush1.msra.mxu0 0.0
  %1564 = vmatprep.subr.mxu0 0.0
  %1565 = vmatpush1.msra.mxu0 0.0
  %1566 = vmatprep.subr.mxu0 0.0
  %1567 = vmatpush1.msra.mxu0 0.0
  %1568 = vmatprep.subr.mxu0 0.0
  %1569 = vmatpush1.msra.mxu0 0.0
  %1570 = vmatprep.subr.mxu0 0.0
  %1571 = vmatpush1.msra.mxu0 0.0
  %1572 = vmatprep.subr.mxu0 0.0
  %1573 = vmatpush1.msra.mxu0 0.0
  %1574 = vmatprep.subr.mxu0 0.0
  %1575 = vmatpush1.msra.mxu0 0.0
  %1576 = vmatprep.subr.mxu0 0.0
  %1577 = vmatpush1.msra.mxu0 0.0
  %1578 = vmatprep.subr.mxu0 0.0
  %1579 = vmatpush1.msra.mxu0 0.0
  %1580 = vmatprep.subr.mxu0 0.0
  %1581 = vmatpush1.msra.mxu0 0.0
  %1582 = vmatprep.subr.mxu0 0.0
  %1583 = vmatpush1.msra.mxu0 0.0
  %1584 = vmatprep.subr.mxu0 0.0
  %1585 = vmatpush1.msra.mxu0 0.0
  %1586 = vmatprep.subr.mxu0 0.0
  %1587 = vmatpush1.msra.mxu0 0.0
  %1588 = vmatprep.subr.mxu0 0.0
  %1589 = vmatpush1.msra.mxu0 0.0
  %1590 = vmatprep.mubr.f32.mxu0 0.0
  %1591 = vmatmul.mubr.f32.gmra.mrb[0].mxu0 %v1283
  %v1592 = vpop.f32.mrb[0].mxu0
  %v1593 = vadd.f32 0.0, %v1592
  %v1594 = vpop.f32.mrb[0].mxu0
  %v1595 = vadd.f32 0.0, %v1594
  %1596 = vdwg.mxu0
  %v1597 = vadd.f32 %v1451, %v1522
  %v1598 = vadd.f32 %v1452, %v1524
  %v1599 = vadd.f32 %v1453, %v1593
  %v1600 = vadd.f32 %v1454, %v1595
  %v1601 = vxor.u32 %v1597, 2147483648
  %v1602 = vmul.f32 %v1601, 1.442695
  %v1603 = vpow.pop %v1602
  %v1604 = vadd.f32 %v1603, 1.0
  %v1605 = vrcp.pop %v1604
  %v1606 = vmul.f32 1.0, %v1605
  %v1607 = vxor.u32 %v1598, 2147483648
  %v1608 = vmul.f32 %v1607, 1.442695
  %v1609 = vpow.pop %v1608
  %v1610 = vadd.f32 %v1609, 1.0
  %v1611 = vrcp.pop %v1610
  %v1612 = vmul.f32 1.0, %v1611
  %v1613 = vtanh.pop %v1599
  %v1614 = vxor.u32 %v1600, 2147483648
  %v1615 = vmul.f32 %v1614, 1.442695
  %v1616 = vpow.pop %v1615
  %v1617 = vadd.f32 %v1616, 1.0
  %v1618 = vrcp.pop %v1617
  %v1619 = vmul.f32 1.0, %v1618
  %v1620 = vmul.f32 %v1612, %v1281
  %v1621 = vmul.f32 %v1606, %v1613
  %v1622 = vadd.f32 %v1620, %v1621
  %v1623 = vtanh.pop %v1622
  %v1624 = vmul.f32 %v1619, %v1623
  %1625 = vmatprep.subr.mxu0 %v614
  %1626 = vmatpush1.msra.mxu0 %v613
  %1627 = vmatprep.subr.mxu0 %v618
  %1628 = vmatpush1.msra.mxu0 %v617
  %1629 = vmatprep.subr.mxu0 %v622
  %1630 = vmatpush1.msra.mxu0 %v621
  %1631 = vmatprep.subr.mxu0 %v626
  %1632 = vmatpush1.msra.mxu0 %v625
  %1633 = vmatprep.subr.mxu0 %v630
  %1634 = vmatpush1.msra.mxu0 %v629
  %1635 = vmatprep.subr.mxu0 %v634
  %1636 = vmatpush1.msra.mxu0 %v633
  %1637 = vmatprep.subr.mxu0 %v638
  %1638 = vmatpush1.msra.mxu0 %v637
  %1639 = vmatprep.subr.mxu0 %v642
  %1640 = vmatpush1.msra.mxu0 %v641
  %1641 = vmatprep.subr.mxu0 %v646
  %1642 = vmatpush1.msra.mxu0 %v645
  %1643 = vmatprep.subr.mxu0 %v650
  %1644 = vmatpush1.msra.mxu0 %v649
  %1645 = vmatprep.subr.mxu0 %v654
  %1646 = vmatpush1.msra.mxu0 %v653
  %1647 = vmatprep.subr.mxu0 %v658
  %1648 = vmatpush1.msra.mxu0 %v657
  %1649 = vmatprep.subr.mxu0 %v662
  %1650 = vmatpush1.msra.mxu0 %v661
  %1651 = vmatprep.subr.mxu0 %v666
  %1652 = vmatpush1.msra.mxu0 %v665
  %1653 = vmatprep.subr.mxu0 %v670
  %1654 = vmatpush1.msra.mxu0 %v669
  %1655 = vmatprep.subr.mxu0 %v674
  %1656 = vmatpush1.msra.mxu0 %v673
  %1657 = vmatprep.subr.mxu0 %v678
  %1658 = vmatpush1.msra.mxu0 %v677
  %1659 = vmatprep.subr.mxu0 %v682
  %1660 = vmatpush1.msra.mxu0 %v681
  %1661 = vmatprep.subr.mxu0 %v686
  %1662 = vmatpush1.msra.mxu0 %v685
  %1663 = vmatprep.subr.mxu0 %v690
  %1664 = vmatpush1.msra.mxu0 %v689
  %1665 = vmatprep.subr.mxu0 %v694
  %1666 = vmatpush1.msra.mxu0 %v693
  %1667 = vmatprep.subr.mxu0 %v698
  %1668 = vmatpush1.msra.mxu0 %v697
  %1669 = vmatprep.subr.mxu0 %v702
  %1670 = vmatpush1.msra.mxu0 %v701
  %1671 = vmatprep.subr.mxu0 %v706
  %1672 = vmatpush1.msra.mxu0 %v705
  %1673 = vmatprep.subr.mxu0 %v710
  %1674 = vmatpush1.msra.mxu0 %v709
  %1675 = vmatprep.subr.mxu0 %v714
  %1676 = vmatpush1.msra.mxu0 %v713
  %1677 = vmatprep.subr.mxu0 %v718
  %1678 = vmatpush1.msra.mxu0 %v717
  %1679 = vmatprep.subr.mxu0 %v722
  %1680 = vmatpush1.msra.mxu0 %v721
  %1681 = vmatprep.subr.mxu0 %v726
  %1682 = vmatpush1.msra.mxu0 %v725
  %1683 = vmatprep.subr.mxu0 %v730
  %1684 = vmatpush1.msra.mxu0 %v729
  %1685 = vmatprep.subr.mxu0 %v734
  %1686 = vmatpush1.msra.mxu0 %v733
  %1687 = vmatprep.subr.mxu0 %v738
  %1688 = vmatpush1.msra.mxu0 %v737
  %1689 = vmatprep.mubr.f32.mxu0 %v1449
  %1690 = vmatmul.mubr.f32.gmra.mrb[0].mxu0 %v1624
  %v1691 = vpop.f32.mrb[0].mxu0
  %v1692 = vadd.f32 %v926, %v1691
  %v1693 = vpop.f32.mrb[0].mxu0
  %v1694 = vadd.f32 %v930, %v1693
  %1695 = vdwg.mxu0
  %1696 = vmatprep.subr.mxu0 %v616
  %1697 = vmatpush1.msra.mxu0 %v615
  %1698 = vmatprep.subr.mxu0 %v620
  %1699 = vmatpush1.msra.mxu0 %v619
  %1700 = vmatprep.subr.mxu0 %v624
  %1701 = vmatpush1.msra.mxu0 %v623
  %1702 = vmatprep.subr.mxu0 %v628
  %1703 = vmatpush1.msra.mxu0 %v627
  %1704 = vmatprep.subr.mxu0 %v632
  %1705 = vmatpush1.msra.mxu0 %v631
  %1706 = vmatprep.subr.mxu0 %v636
  %1707 = vmatpush1.msra.mxu0 %v635
  %1708 = vmatprep.subr.mxu0 %v640
  %1709 = vmatpush1.msra.mxu0 %v639
  %1710 = vmatprep.subr.mxu0 %v644
  %1711 = vmatpush1.msra.mxu0 %v643
  %1712 = vmatprep.subr.mxu0 %v648
  %1713 = vmatpush1.msra.mxu0 %v647
  %1714 = vmatprep.subr.mxu0 %v652
  %1715 = vmatpush1.msra.mxu0 %v651
  %1716 = vmatprep.subr.mxu0 %v656
  %1717 = vmatpush1.msra.mxu0 %v655
  %1718 = vmatprep.subr.mxu0 %v660
  %1719 = vmatpush1.msra.mxu0 %v659
  %1720 = vmatprep.subr.mxu0 %v664
  %1721 = vmatpush1.msra.mxu0 %v663
  %1722 = vmatprep.subr.mxu0 %v668
  %1723 = vmatpush1.msra.mxu0 %v667
  %1724 = vmatprep.subr.mxu0 %v672
  %1725 = vmatpush1.msra.mxu0 %v671
  %1726 = vmatprep.subr.mxu0 %v676
  %1727 = vmatpush1.msra.mxu0 %v675
  %1728 = vmatprep.subr.mxu0 %v680
  %1729 = vmatpush1.msra.mxu0 %v679
  %1730 = vmatprep.subr.mxu0 %v684
  %1731 = vmatpush1.msra.mxu0 %v683
  %1732 = vmatprep.subr.mxu0 %v688
  %1733 = vmatpush1.msra.mxu0 %v687
  %1734 = vmatprep.subr.mxu0 %v692
  %1735 = vmatpush1.msra.mxu0 %v691
  %1736 = vmatprep.subr.mxu0 %v696
  %1737 = vmatpush1.msra.mxu0 %v695
  %1738 = vmatprep.subr.mxu0 %v700
  %1739 = vmatpush1.msra.mxu0 %v699
  %1740 = vmatprep.subr.mxu0 %v704
  %1741 = vmatpush1.msra.mxu0 %v703
  %1742 = vmatprep.subr.mxu0 %v708
  %1743 = vmatpush1.msra.mxu0 %v707
  %1744 = vmatprep.subr.mxu0 %v712
  %1745 = vmatpush1.msra.mxu0 %v711
  %1746 = vmatprep.subr.mxu0 %v716
  %1747 = vmatpush1.msra.mxu0 %v715
  %1748 = vmatprep.subr.mxu0 %v720
  %1749 = vmatpush1.msra.mxu0 %v719
  %1750 = vmatprep.subr.mxu0 %v724
  %1751 = vmatpush1.msra.mxu0 %v723
  %1752 = vmatprep.subr.mxu0 %v728
  %1753 = vmatpush1.msra.mxu0 %v727
  %1754 = vmatprep.subr.mxu0 %v732
  %1755 = vmatpush1.msra.mxu0 %v731
  %1756 = vmatprep.subr.mxu0 %v736
  %1757 = vmatpush1.msra.mxu0 %v735
  %1758 = vmatprep.subr.mxu0 %v740
  %1759 = vmatpush1.msra.mxu0 %v739
  %1760 = vmatprep.mubr.f32.mxu0 %v1449
  %1761 = vmatmul.mubr.f32.gmra.mrb[0].mxu0 %v1624
  %v1762 = vpop.f32.mrb[0].mxu0
  %v1763 = vadd.f32 %v934, %v1762
  %v1764 = vpop.f32.mrb[0].mxu0
  %v1765 = vadd.f32 %v938, %v1764
  %1766 = vdwg.mxu0
  %v1767 = vxor.u32 %v1692, 2147483648
  %v1768 = vmul.f32 %v1767, 1.442695
  %v1769 = vpow.pop %v1768
  %v1770 = vadd.f32 %v1769, 1.0
  %v1771 = vrcp.pop %v1770
  %v1772 = vmul.f32 1.0, %v1771
  %v1773 = vxor.u32 %v1694, 2147483648
  %v1774 = vmul.f32 %v1773, 1.442695
  %v1775 = vpow.pop %v1774
  %v1776 = vadd.f32 %v1775, 1.0
  %v1777 = vrcp.pop %v1776
  %v1778 = vmul.f32 1.0, %v1777
  %v1779 = vtanh.pop %v1763
  %v1780 = vxor.u32 %v1765, 2147483648
  %v1781 = vmul.f32 %v1780, 1.442695
  %v1782 = vpow.pop %v1781
  %v1783 = vadd.f32 %v1782, 1.0
  %v1784 = vrcp.pop %v1783
  %v1785 = vmul.f32 1.0, %v1784
  %v1786 = vmul.f32 %v1778, %v1447
  %v1787 = vmul.f32 %v1772, %v1779
  %v1788 = vadd.f32 %v1786, %v1787
  %v1789 = vtanh.pop %v1788
  %v1790 = vmul.f32 %v1785, %v1789
  %s1791 = scalar_lea.vmem [#allocation2], 96
  %v1792 = vld [vmem:[%s1791] sm:$0xff]
  %v1793 = vld [vmem:[%s1791 + $0x8] sm:$0xff]
  %v1794 = vld [vmem:[%s1791 + $0x10] sm:$0xff]
  %v1795 = vld [vmem:[%s1791 + $0x18] sm:$0xff]
  %1796 = vmatprep.subr.mxu0 %v550
  %1797 = vmatpush1.msra.mxu0 %v549
  %1798 = vmatprep.subr.mxu0 %v554
  %1799 = vmatpush1.msra.mxu0 %v553
  %1800 = vmatprep.subr.mxu0 %v558
  %1801 = vmatpush1.msra.mxu0 %v557
  %1802 = vmatprep.subr.mxu0 %v562
  %1803 = vmatpush1.msra.mxu0 %v561
  %1804 = vmatprep.subr.mxu0 %v566
  %1805 = vmatpush1.msra.mxu0 %v565
  %1806 = vmatprep.subr.mxu0 %v570
  %1807 = vmatpush1.msra.mxu0 %v569
  %1808 = vmatprep.subr.mxu0 %v574
  %1809 = vmatpush1.msra.mxu0 %v573
  %1810 = vmatprep.subr.mxu0 %v578
  %1811 = vmatpush1.msra.mxu0 %v577
  %1812 = vmatprep.subr.mxu0 %v582
  %1813 = vmatpush1.msra.mxu0 %v581
  %1814 = vmatprep.subr.mxu0 %v586
  %1815 = vmatpush1.msra.mxu0 %v585
  %1816 = vmatprep.subr.mxu0 %v590
  %1817 = vmatpush1.msra.mxu0 %v589
  %1818 = vmatprep.subr.mxu0 %v594
  %1819 = vmatpush1.msra.mxu0 %v593
  %1820 = vmatprep.subr.mxu0 %v598
  %1821 = vmatpush1.msra.mxu0 %v597
  %1822 = vmatprep.subr.mxu0 %v602
  %1823 = vmatpush1.msra.mxu0 %v601
  %1824 = vmatprep.subr.mxu0 %v606
  %1825 = vmatpush1.msra.mxu0 %v605
  %1826 = vmatprep.subr.mxu0 %v610
  %1827 = vmatpush1.msra.mxu0 %v609
  %1828 = vmatprep.subr.mxu0 0.0
  %1829 = vmatpush1.msra.mxu0 0.0
  %1830 = vmatprep.subr.mxu0 0.0
  %1831 = vmatpush1.msra.mxu0 0.0
  %1832 = vmatprep.subr.mxu0 0.0
  %1833 = vmatpush1.msra.mxu0 0.0
  %1834 = vmatprep.subr.mxu0 0.0
  %1835 = vmatpush1.msra.mxu0 0.0
  %1836 = vmatprep.subr.mxu0 0.0
  %1837 = vmatpush1.msra.mxu0 0.0
  %1838 = vmatprep.subr.mxu0 0.0
  %1839 = vmatpush1.msra.mxu0 0.0
  %1840 = vmatprep.subr.mxu0 0.0
  %1841 = vmatpush1.msra.mxu0 0.0
  %1842 = vmatprep.subr.mxu0 0.0
  %1843 = vmatpush1.msra.mxu0 0.0
  %1844 = vmatprep.subr.mxu0 0.0
  %1845 = vmatpush1.msra.mxu0 0.0
  %1846 = vmatprep.subr.mxu0 0.0
  %1847 = vmatpush1.msra.mxu0 0.0
  %1848 = vmatprep.subr.mxu0 0.0
  %1849 = vmatpush1.msra.mxu0 0.0
  %1850 = vmatprep.subr.mxu0 0.0
  %1851 = vmatpush1.msra.mxu0 0.0
  %1852 = vmatprep.subr.mxu0 0.0
  %1853 = vmatpush1.msra.mxu0 0.0
  %1854 = vmatprep.subr.mxu0 0.0
  %1855 = vmatpush1.msra.mxu0 0.0
  %1856 = vmatprep.subr.mxu0 0.0
  %1857 = vmatpush1.msra.mxu0 0.0
  %1858 = vmatprep.subr.mxu0 0.0
  %1859 = vmatpush1.msra.mxu0 0.0
  %1860 = vmatprep.mubr.f32.mxu0 0.0
  %1861 = vmatmul.mubr.f32.gmra.mrb[0].mxu0 %v1624
  %v1862 = vpop.f32.mrb[0].mxu0
  %v1863 = vadd.f32 0.0, %v1862
  %v1864 = vpop.f32.mrb[0].mxu0
  %v1865 = vadd.f32 0.0, %v1864
  %1866 = vdwg.mxu0
  %1867 = vmatprep.subr.mxu0 %v552
  %1868 = vmatpush1.msra.mxu0 %v551
  %1869 = vmatprep.subr.mxu0 %v556
  %1870 = vmatpush1.msra.mxu0 %v555
  %1871 = vmatprep.subr.mxu0 %v560
  %1872 = vmatpush1.msra.mxu0 %v559
  %1873 = vmatprep.subr.mxu0 %v564
  %1874 = vmatpush1.msra.mxu0 %v563
  %1875 = vmatprep.subr.mxu0 %v568
  %1876 = vmatpush1.msra.mxu0 %v567
  %1877 = vmatprep.subr.mxu0 %v572
  %1878 = vmatpush1.msra.mxu0 %v571
  %1879 = vmatprep.subr.mxu0 %v576
  %1880 = vmatpush1.msra.mxu0 %v575
  %1881 = vmatprep.subr.mxu0 %v580
  %1882 = vmatpush1.msra.mxu0 %v579
  %1883 = vmatprep.subr.mxu0 %v584
  %1884 = vmatpush1.msra.mxu0 %v583
  %1885 = vmatprep.subr.mxu0 %v588
  %1886 = vmatpush1.msra.mxu0 %v587
  %1887 = vmatprep.subr.mxu0 %v592
  %1888 = vmatpush1.msra.mxu0 %v591
  %1889 = vmatprep.subr.mxu0 %v596
  %1890 = vmatpush1.msra.mxu0 %v595
  %1891 = vmatprep.subr.mxu0 %v600
  %1892 = vmatpush1.msra.mxu0 %v599
  %1893 = vmatprep.subr.mxu0 %v604
  %1894 = vmatpush1.msra.mxu0 %v603
  %1895 = vmatprep.subr.mxu0 %v608
  %1896 = vmatpush1.msra.mxu0 %v607
  %1897 = vmatprep.subr.mxu0 %v612
  %1898 = vmatpush1.msra.mxu0 %v611
  %1899 = vmatprep.subr.mxu0 0.0
  %1900 = vmatpush1.msra.mxu0 0.0
  %1901 = vmatprep.subr.mxu0 0.0
  %1902 = vmatpush1.msra.mxu0 0.0
  %1903 = vmatprep.subr.mxu0 0.0
  %1904 = vmatpush1.msra.mxu0 0.0
  %1905 = vmatprep.subr.mxu0 0.0
  %1906 = vmatpush1.msra.mxu0 0.0
  %1907 = vmatprep.subr.mxu0 0.0
  %1908 = vmatpush1.msra.mxu0 0.0
  %1909 = vmatprep.subr.mxu0 0.0
  %1910 = vmatpush1.msra.mxu0 0.0
  %1911 = vmatprep.subr.mxu0 0.0
  %1912 = vmatpush1.msra.mxu0 0.0
  %1913 = vmatprep.subr.mxu0 0.0
  %1914 = vmatpush1.msra.mxu0 0.0
  %1915 = vmatprep.subr.mxu0 0.0
  %1916 = vmatpush1.msra.mxu0 0.0
  %1917 = vmatprep.subr.mxu0 0.0
  %1918 = vmatpush1.msra.mxu0 0.0
  %1919 = vmatprep.subr.mxu0 0.0
  %1920 = vmatpush1.msra.mxu0 0.0
  %1921 = vmatprep.subr.mxu0 0.0
  %1922 = vmatpush1.msra.mxu0 0.0
  %1923 = vmatprep.subr.mxu0 0.0
  %1924 = vmatpush1.msra.mxu0 0.0
  %1925 = vmatprep.subr.mxu0 0.0
  %1926 = vmatpush1.msra.mxu0 0.0
  %1927 = vmatprep.subr.mxu0 0.0
  %1928 = vmatpush1.msra.mxu0 0.0
  %1929 = vmatprep.subr.mxu0 0.0
  %1930 = vmatpush1.msra.mxu0 0.0
  %1931 = vmatprep.mubr.f32.mxu0 0.0
  %1932 = vmatmul.mubr.f32.gmra.mrb[0].mxu0 %v1624
  %v1933 = vpop.f32.mrb[0].mxu0
  %v1934 = vadd.f32 0.0, %v1933
  %v1935 = vpop.f32.mrb[0].mxu0
  %v1936 = vadd.f32 0.0, %v1935
  %1937 = vdwg.mxu0
  %v1938 = vadd.f32 %v1792, %v1863
  %v1939 = vadd.f32 %v1793, %v1865
  %v1940 = vadd.f32 %v1794, %v1934
  %v1941 = vadd.f32 %v1795, %v1936
  %v1942 = vxor.u32 %v1938, 2147483648
  %v1943 = vmul.f32 %v1942, 1.442695
  %v1944 = vpow.pop %v1943
  %v1945 = vadd.f32 %v1944, 1.0
  %v1946 = vrcp.pop %v1945
  %v1947 = vmul.f32 1.0, %v1946
  %v1948 = vxor.u32 %v1939, 2147483648
  %v1949 = vmul.f32 %v1948, 1.442695
  %v1950 = vpow.pop %v1949
  %v1951 = vadd.f32 %v1950, 1.0
  %v1952 = vrcp.pop %v1951
  %v1953 = vmul.f32 1.0, %v1952
  %v1954 = vtanh.pop %v1940
  %v1955 = vxor.u32 %v1941, 2147483648
  %v1956 = vmul.f32 %v1955, 1.442695
  %v1957 = vpow.pop %v1956
  %v1958 = vadd.f32 %v1957, 1.0
  %v1959 = vrcp.pop %v1958
  %v1960 = vmul.f32 1.0, %v1959
  %v1961 = vmul.f32 %v1953, %v1622
  %v1962 = vmul.f32 %v1947, %v1954
  %v1963 = vadd.f32 %v1961, %v1962
  %v1964 = vtanh.pop %v1963
  %v1965 = vmul.f32 %v1960, %v1964
  %1966 = vmatprep.subr.mxu0 %v614
  %1967 = vmatpush1.msra.mxu0 %v613
  %1968 = vmatprep.subr.mxu0 %v618
  %1969 = vmatpush1.msra.mxu0 %v617
  %1970 = vmatprep.subr.mxu0 %v622
  %1971 = vmatpush1.msra.mxu0 %v621
  %1972 = vmatprep.subr.mxu0 %v626
  %1973 = vmatpush1.msra.mxu0 %v625
  %1974 = vmatprep.subr.mxu0 %v630
  %1975 = vmatpush1.msra.mxu0 %v629
  %1976 = vmatprep.subr.mxu0 %v634
  %1977 = vmatpush1.msra.mxu0 %v633
  %1978 = vmatprep.subr.mxu0 %v638
  %1979 = vmatpush1.msra.mxu0 %v637
  %1980 = vmatprep.subr.mxu0 %v642
  %1981 = vmatpush1.msra.mxu0 %v641
  %1982 = vmatprep.subr.mxu0 %v646
  %1983 = vmatpush1.msra.mxu0 %v645
  %1984 = vmatprep.subr.mxu0 %v650
  %1985 = vmatpush1.msra.mxu0 %v649
  %1986 = vmatprep.subr.mxu0 %v654
  %1987 = vmatpush1.msra.mxu0 %v653
  %1988 = vmatprep.subr.mxu0 %v658
  %1989 = vmatpush1.msra.mxu0 %v657
  %1990 = vmatprep.subr.mxu0 %v662
  %1991 = vmatpush1.msra.mxu0 %v661
  %1992 = vmatprep.subr.mxu0 %v666
  %1993 = vmatpush1.msra.mxu0 %v665
  %1994 = vmatprep.subr.mxu0 %v670
  %1995 = vmatpush1.msra.mxu0 %v669
  %1996 = vmatprep.subr.mxu0 %v674
  %1997 = vmatpush1.msra.mxu0 %v673
  %1998 = vmatprep.subr.mxu0 %v678
  %1999 = vmatpush1.msra.mxu0 %v677
  %2000 = vmatprep.subr.mxu0 %v682
  %2001 = vmatpush1.msra.mxu0 %v681
  %2002 = vmatprep.subr.mxu0 %v686
  %2003 = vmatpush1.msra.mxu0 %v685
  %2004 = vmatprep.subr.mxu0 %v690
  %2005 = vmatpush1.msra.mxu0 %v689
  %2006 = vmatprep.subr.mxu0 %v694
  %2007 = vmatpush1.msra.mxu0 %v693
  %2008 = vmatprep.subr.mxu0 %v698
  %2009 = vmatpush1.msra.mxu0 %v697
  %2010 = vmatprep.subr.mxu0 %v702
  %2011 = vmatpush1.msra.mxu0 %v701
  %2012 = vmatprep.subr.mxu0 %v706
  %2013 = vmatpush1.msra.mxu0 %v705
  %2014 = vmatprep.subr.mxu0 %v710
  %2015 = vmatpush1.msra.mxu0 %v709
  %2016 = vmatprep.subr.mxu0 %v714
  %2017 = vmatpush1.msra.mxu0 %v713
  %2018 = vmatprep.subr.mxu0 %v718
  %2019 = vmatpush1.msra.mxu0 %v717
  %2020 = vmatprep.subr.mxu0 %v722
  %2021 = vmatpush1.msra.mxu0 %v721
  %2022 = vmatprep.subr.mxu0 %v726
  %2023 = vmatpush1.msra.mxu0 %v725
  %2024 = vmatprep.subr.mxu0 %v730
  %2025 = vmatpush1.msra.mxu0 %v729
  %2026 = vmatprep.subr.mxu0 %v734
  %2027 = vmatpush1.msra.mxu0 %v733
  %2028 = vmatprep.subr.mxu0 %v738
  %2029 = vmatpush1.msra.mxu0 %v737
  %2030 = vmatprep.mubr.f32.mxu0 %v1790
  %2031 = vmatmul.mubr.f32.gmra.mrb[0].mxu0 %v1965
  %v2032 = vpop.f32.mrb[0].mxu0
  %v2033 = vadd.f32 %v926, %v2032
  %v2034 = vpop.f32.mrb[0].mxu0
  %v2035 = vadd.f32 %v930, %v2034
  %2036 = vdwg.mxu0
  %2037 = vmatprep.subr.mxu0 %v616
  %2038 = vmatpush1.msra.mxu0 %v615
  %2039 = vmatprep.subr.mxu0 %v620
  %2040 = vmatpush1.msra.mxu0 %v619
  %2041 = vmatprep.subr.mxu0 %v624
  %2042 = vmatpush1.msra.mxu0 %v623
  %2043 = vmatprep.subr.mxu0 %v628
  %2044 = vmatpush1.msra.mxu0 %v627
  %2045 = vmatprep.subr.mxu0 %v632
  %2046 = vmatpush1.msra.mxu0 %v631
  %2047 = vmatprep.subr.mxu0 %v636
  %2048 = vmatpush1.msra.mxu0 %v635
  %2049 = vmatprep.subr.mxu0 %v640
  %2050 = vmatpush1.msra.mxu0 %v639
  %2051 = vmatprep.subr.mxu0 %v644
  %2052 = vmatpush1.msra.mxu0 %v643
  %2053 = vmatprep.subr.mxu0 %v648
  %2054 = vmatpush1.msra.mxu0 %v647
  %2055 = vmatprep.subr.mxu0 %v652
  %2056 = vmatpush1.msra.mxu0 %v651
  %2057 = vmatprep.subr.mxu0 %v656
  %2058 = vmatpush1.msra.mxu0 %v655
  %2059 = vmatprep.subr.mxu0 %v660
  %2060 = vmatpush1.msra.mxu0 %v659
  %2061 = vmatprep.subr.mxu0 %v664
  %2062 = vmatpush1.msra.mxu0 %v663
  %2063 = vmatprep.subr.mxu0 %v668
  %2064 = vmatpush1.msra.mxu0 %v667
  %2065 = vmatprep.subr.mxu0 %v672
  %2066 = vmatpush1.msra.mxu0 %v671
  %2067 = vmatprep.subr.mxu0 %v676
  %2068 = vmatpush1.msra.mxu0 %v675
  %2069 = vmatprep.subr.mxu0 %v680
  %2070 = vmatpush1.msra.mxu0 %v679
  %2071 = vmatprep.subr.mxu0 %v684
  %2072 = vmatpush1.msra.mxu0 %v683
  %2073 = vmatprep.subr.mxu0 %v688
  %2074 = vmatpush1.msra.mxu0 %v687
  %2075 = vmatprep.subr.mxu0 %v692
  %2076 = vmatpush1.msra.mxu0 %v691
  %2077 = vmatprep.subr.mxu0 %v696
  %2078 = vmatpush1.msra.mxu0 %v695
  %2079 = vmatprep.subr.mxu0 %v700
  %2080 = vmatpush1.msra.mxu0 %v699
  %2081 = vmatprep.subr.mxu0 %v704
  %2082 = vmatpush1.msra.mxu0 %v703
  %2083 = vmatprep.subr.mxu0 %v708
  %2084 = vmatpush1.msra.mxu0 %v707
  %2085 = vmatprep.subr.mxu0 %v712
  %2086 = vmatpush1.msra.mxu0 %v711
  %2087 = vmatprep.subr.mxu0 %v716
  %2088 = vmatpush1.msra.mxu0 %v715
  %2089 = vmatprep.subr.mxu0 %v720
  %2090 = vmatpush1.msra.mxu0 %v719
  %2091 = vmatprep.subr.mxu0 %v724
  %2092 = vmatpush1.msra.mxu0 %v723
  %2093 = vmatprep.subr.mxu0 %v728
  %2094 = vmatpush1.msra.mxu0 %v727
  %2095 = vmatprep.subr.mxu0 %v732
  %2096 = vmatpush1.msra.mxu0 %v731
  %2097 = vmatprep.subr.mxu0 %v736
  %2098 = vmatpush1.msra.mxu0 %v735
  %2099 = vmatprep.subr.mxu0 %v740
  %2100 = vmatpush1.msra.mxu0 %v739
  %2101 = vmatprep.mubr.f32.mxu0 %v1790
  %2102 = vmatmul.mubr.f32.gmra.mrb[0].mxu0 %v1965
  %v2103 = vpop.f32.mrb[0].mxu0
  %v2104 = vadd.f32 %v934, %v2103
  %v2105 = vpop.f32.mrb[0].mxu0
  %v2106 = vadd.f32 %v938, %v2105
  %2107 = vdwg.mxu0
  %v2108 = vxor.u32 %v2033, 2147483648
  %v2109 = vmul.f32 %v2108, 1.442695
  %v2110 = vpow.pop %v2109
  %v2111 = vadd.f32 %v2110, 1.0
  %v2112 = vrcp.pop %v2111
  %v2113 = vmul.f32 1.0, %v2112
  %v2114 = vxor.u32 %v2035, 2147483648
  %v2115 = vmul.f32 %v2114, 1.442695
  %v2116 = vpow.pop %v2115
  %v2117 = vadd.f32 %v2116, 1.0
  %v2118 = vrcp.pop %v2117
  %v2119 = vmul.f32 1.0, %v2118
  %v2120 = vtanh.pop %v2104
  %v2121 = vxor.u32 %v2106, 2147483648
  %v2122 = vmul.f32 %v2121, 1.442695
  %v2123 = vpow.pop %v2122
  %v2124 = vadd.f32 %v2123, 1.0
  %v2125 = vrcp.pop %v2124
  %v2126 = vmul.f32 1.0, %v2125
  %v2127 = vmul.f32 %v2119, %v1788
  %v2128 = vmul.f32 %v2113, %v2120
  %v2129 = vadd.f32 %v2127, %v2128
  %v2130 = vtanh.pop %v2129
  %v2131 = vmul.f32 %v2126, %v2130
  %s2132 = scalar_lea.vmem [#allocation2], 128
  %v2133 = vld [vmem:[%s2132] sm:$0xff]
  %v2134 = vld [vmem:[%s2132 + $0x8] sm:$0xff]
  %v2135 = vld [vmem:[%s2132 + $0x10] sm:$0xff]
  %v2136 = vld [vmem:[%s2132 + $0x18] sm:$0xff]
  %2137 = vmatprep.subr.mxu0 %v550
  %2138 = vmatpush1.msra.mxu0 %v549
  %2139 = vmatprep.subr.mxu0 %v554
  %2140 = vmatpush1.msra.mxu0 %v553
  %2141 = vmatprep.subr.mxu0 %v558
  %2142 = vmatpush1.msra.mxu0 %v557
  %2143 = vmatprep.subr.mxu0 %v562
  %2144 = vmatpush1.msra.mxu0 %v561
  %2145 = vmatprep.subr.mxu0 %v566
  %2146 = vmatpush1.msra.mxu0 %v565
  %2147 = vmatprep.subr.mxu0 %v570
  %2148 = vmatpush1.msra.mxu0 %v569
  %2149 = vmatprep.subr.mxu0 %v574
  %2150 = vmatpush1.msra.mxu0 %v573
  %2151 = vmatprep.subr.mxu0 %v578
  %2152 = vmatpush1.msra.mxu0 %v577
  %2153 = vmatprep.subr.mxu0 %v582
  %2154 = vmatpush1.msra.mxu0 %v581
  %2155 = vmatprep.subr.mxu0 %v586
  %2156 = vmatpush1.msra.mxu0 %v585
  %2157 = vmatprep.subr.mxu0 %v590
  %2158 = vmatpush1.msra.mxu0 %v589
  %2159 = vmatprep.subr.mxu0 %v594
  %2160 = vmatpush1.msra.mxu0 %v593
  %2161 = vmatprep.subr.mxu0 %v598
  %2162 = vmatpush1.msra.mxu0 %v597
  %2163 = vmatprep.subr.mxu0 %v602
  %2164 = vmatpush1.msra.mxu0 %v601
  %2165 = vmatprep.subr.mxu0 %v606
  %2166 = vmatpush1.msra.mxu0 %v605
  %2167 = vmatprep.subr.mxu0 %v610
  %2168 = vmatpush1.msra.mxu0 %v609
  %2169 = vmatprep.subr.mxu0 0.0
  %2170 = vmatpush1.msra.mxu0 0.0
  %2171 = vmatprep.subr.mxu0 0.0
  %2172 = vmatpush1.msra.mxu0 0.0
  %2173 = vmatprep.subr.mxu0 0.0
  %2174 = vmatpush1.msra.mxu0 0.0
  %2175 = vmatprep.subr.mxu0 0.0
  %2176 = vmatpush1.msra.mxu0 0.0
  %2177 = vmatprep.subr.mxu0 0.0
  %2178 = vmatpush1.msra.mxu0 0.0
  %2179 = vmatprep.subr.mxu0 0.0
  %2180 = vmatpush1.msra.mxu0 0.0
  %2181 = vmatprep.subr.mxu0 0.0
  %2182 = vmatpush1.msra.mxu0 0.0
  %2183 = vmatprep.subr.mxu0 0.0
  %2184 = vmatpush1.msra.mxu0 0.0
  %2185 = vmatprep.subr.mxu0 0.0
  %2186 = vmatpush1.msra.mxu0 0.0
  %2187 = vmatprep.subr.mxu0 0.0
  %2188 = vmatpush1.msra.mxu0 0.0
  %2189 = vmatprep.subr.mxu0 0.0
  %2190 = vmatpush1.msra.mxu0 0.0
  %2191 = vmatprep.subr.mxu0 0.0
  %2192 = vmatpush1.msra.mxu0 0.0
  %2193 = vmatprep.subr.mxu0 0.0
  %2194 = vmatpush1.msra.mxu0 0.0
  %2195 = vmatprep.subr.mxu0 0.0
  %2196 = vmatpush1.msra.mxu0 0.0
  %2197 = vmatprep.subr.mxu0 0.0
  %2198 = vmatpush1.msra.mxu0 0.0
  %2199 = vmatprep.subr.mxu0 0.0
  %2200 = vmatpush1.msra.mxu0 0.0
  %2201 = vmatprep.mubr.f32.mxu0 0.0
  %2202 = vmatmul.mubr.f32.gmra.mrb[0].mxu0 %v1965
  %v2203 = vpop.f32.mrb[0].mxu0
  %v2204 = vadd.f32 0.0, %v2203
  %v2205 = vpop.f32.mrb[0].mxu0
  %v2206 = vadd.f32 0.0, %v2205
  %2207 = vdwg.mxu0
  %2208 = vmatprep.subr.mxu0 %v552
  %2209 = vmatpush1.msra.mxu0 %v551
  %2210 = vmatprep.subr.mxu0 %v556
  %2211 = vmatpush1.msra.mxu0 %v555
  %2212 = vmatprep.subr.mxu0 %v560
  %2213 = vmatpush1.msra.mxu0 %v559
  %2214 = vmatprep.subr.mxu0 %v564
  %2215 = vmatpush1.msra.mxu0 %v563
  %2216 = vmatprep.subr.mxu0 %v568
  %2217 = vmatpush1.msra.mxu0 %v567
  %2218 = vmatprep.subr.mxu0 %v572
  %2219 = vmatpush1.msra.mxu0 %v571
  %2220 = vmatprep.subr.mxu0 %v576
  %2221 = vmatpush1.msra.mxu0 %v575
  %2222 = vmatprep.subr.mxu0 %v580
  %2223 = vmatpush1.msra.mxu0 %v579
  %2224 = vmatprep.subr.mxu0 %v584
  %2225 = vmatpush1.msra.mxu0 %v583
  %2226 = vmatprep.subr.mxu0 %v588
  %2227 = vmatpush1.msra.mxu0 %v587
  %2228 = vmatprep.subr.mxu0 %v592
  %2229 = vmatpush1.msra.mxu0 %v591
  %2230 = vmatprep.subr.mxu0 %v596
  %2231 = vmatpush1.msra.mxu0 %v595
  %2232 = vmatprep.subr.mxu0 %v600
  %2233 = vmatpush1.msra.mxu0 %v599
  %2234 = vmatprep.subr.mxu0 %v604
  %2235 = vmatpush1.msra.mxu0 %v603
  %2236 = vmatprep.subr.mxu0 %v608
  %2237 = vmatpush1.msra.mxu0 %v607
  %2238 = vmatprep.subr.mxu0 %v612
  %2239 = vmatpush1.msra.mxu0 %v611
  %2240 = vmatprep.subr.mxu0 0.0
  %2241 = vmatpush1.msra.mxu0 0.0
  %2242 = vmatprep.subr.mxu0 0.0
  %2243 = vmatpush1.msra.mxu0 0.0
  %2244 = vmatprep.subr.mxu0 0.0
  %2245 = vmatpush1.msra.mxu0 0.0
  %2246 = vmatprep.subr.mxu0 0.0
  %2247 = vmatpush1.msra.mxu0 0.0
  %2248 = vmatprep.subr.mxu0 0.0
  %2249 = vmatpush1.msra.mxu0 0.0
  %2250 = vmatprep.subr.mxu0 0.0
  %2251 = vmatpush1.msra.mxu0 0.0
  %2252 = vmatprep.subr.mxu0 0.0
  %2253 = vmatpush1.msra.mxu0 0.0
  %2254 = vmatprep.subr.mxu0 0.0
  %2255 = vmatpush1.msra.mxu0 0.0
  %2256 = vmatprep.subr.mxu0 0.0
  %2257 = vmatpush1.msra.mxu0 0.0
  %2258 = vmatprep.subr.mxu0 0.0
  %2259 = vmatpush1.msra.mxu0 0.0
  %2260 = vmatprep.subr.mxu0 0.0
  %2261 = vmatpush1.msra.mxu0 0.0
  %2262 = vmatprep.subr.mxu0 0.0
  %2263 = vmatpush1.msra.mxu0 0.0
  %2264 = vmatprep.subr.mxu0 0.0
  %2265 = vmatpush1.msra.mxu0 0.0
  %2266 = vmatprep.subr.mxu0 0.0
  %2267 = vmatpush1.msra.mxu0 0.0
  %2268 = vmatprep.subr.mxu0 0.0
  %2269 = vmatpush1.msra.mxu0 0.0
  %2270 = vmatprep.subr.mxu0 0.0
  %2271 = vmatpush1.msra.mxu0 0.0
  %2272 = vmatprep.mubr.f32.mxu0 0.0
  %2273 = vmatmul.mubr.f32.gmra.mrb[0].mxu0 %v1965
  %v2274 = vpop.f32.mrb[0].mxu0
  %v2275 = vadd.f32 0.0, %v2274
  %v2276 = vpop.f32.mrb[0].mxu0
  %v2277 = vadd.f32 0.0, %v2276
  %2278 = vdwg.mxu0
  %v2279 = vadd.f32 %v2133, %v2204
  %v2280 = vadd.f32 %v2134, %v2206
  %v2281 = vadd.f32 %v2135, %v2275
  %v2282 = vadd.f32 %v2136, %v2277
  %v2283 = vxor.u32 %v2279, 2147483648
  %v2284 = vmul.f32 %v2283, 1.442695
  %v2285 = vpow.pop %v2284
  %v2286 = vadd.f32 %v2285, 1.0
  %v2287 = vrcp.pop %v2286
  %v2288 = vmul.f32 1.0, %v2287
  %v2289 = vxor.u32 %v2280, 2147483648
  %v2290 = vmul.f32 %v2289, 1.442695
  %v2291 = vpow.pop %v2290
  %v2292 = vadd.f32 %v2291, 1.0
  %v2293 = vrcp.pop %v2292
  %v2294 = vmul.f32 1.0, %v2293
  %v2295 = vtanh.pop %v2281
  %v2296 = vxor.u32 %v2282, 2147483648
  %v2297 = vmul.f32 %v2296, 1.442695
  %v2298 = vpow.pop %v2297
  %v2299 = vadd.f32 %v2298, 1.0
  %v2300 = vrcp.pop %v2299
  %v2301 = vmul.f32 1.0, %v2300
  %v2302 = vmul.f32 %v2294, %v1963
  %v2303 = vmul.f32 %v2288, %v2295
  %v2304 = vadd.f32 %v2302, %v2303
  %v2305 = vtanh.pop %v2304
  %v2306 = vmul.f32 %v2301, %v2305
  %2307 = vmatprep.subr.mxu0 %v614
  %2308 = vmatpush1.msra.mxu0 %v613
  %2309 = vmatprep.subr.mxu0 %v618
  %2310 = vmatpush1.msra.mxu0 %v617
  %2311 = vmatprep.subr.mxu0 %v622
  %2312 = vmatpush1.msra.mxu0 %v621
  %2313 = vmatprep.subr.mxu0 %v626
  %2314 = vmatpush1.msra.mxu0 %v625
  %2315 = vmatprep.subr.mxu0 %v630
  %2316 = vmatpush1.msra.mxu0 %v629
  %2317 = vmatprep.subr.mxu0 %v634
  %2318 = vmatpush1.msra.mxu0 %v633
  %2319 = vmatprep.subr.mxu0 %v638
  %2320 = vmatpush1.msra.mxu0 %v637
  %2321 = vmatprep.subr.mxu0 %v642
  %2322 = vmatpush1.msra.mxu0 %v641
  %2323 = vmatprep.subr.mxu0 %v646
  %2324 = vmatpush1.msra.mxu0 %v645
  %2325 = vmatprep.subr.mxu0 %v650
  %2326 = vmatpush1.msra.mxu0 %v649
  %2327 = vmatprep.subr.mxu0 %v654
  %2328 = vmatpush1.msra.mxu0 %v653
  %2329 = vmatprep.subr.mxu0 %v658
  %2330 = vmatpush1.msra.mxu0 %v657
  %2331 = vmatprep.subr.mxu0 %v662
  %2332 = vmatpush1.msra.mxu0 %v661
  %2333 = vmatprep.subr.mxu0 %v666
  %2334 = vmatpush1.msra.mxu0 %v665
  %2335 = vmatprep.subr.mxu0 %v670
  %2336 = vmatpush1.msra.mxu0 %v669
  %2337 = vmatprep.subr.mxu0 %v674
  %2338 = vmatpush1.msra.mxu0 %v673
  %2339 = vmatprep.subr.mxu0 %v678
  %2340 = vmatpush1.msra.mxu0 %v677
  %2341 = vmatprep.subr.mxu0 %v682
  %2342 = vmatpush1.msra.mxu0 %v681
  %2343 = vmatprep.subr.mxu0 %v686
  %2344 = vmatpush1.msra.mxu0 %v685
  %2345 = vmatprep.subr.mxu0 %v690
  %2346 = vmatpush1.msra.mxu0 %v689
  %2347 = vmatprep.subr.mxu0 %v694
  %2348 = vmatpush1.msra.mxu0 %v693
  %2349 = vmatprep.subr.mxu0 %v698
  %2350 = vmatpush1.msra.mxu0 %v697
  %2351 = vmatprep.subr.mxu0 %v702
  %2352 = vmatpush1.msra.mxu0 %v701
  %2353 = vmatprep.subr.mxu0 %v706
  %2354 = vmatpush1.msra.mxu0 %v705
  %2355 = vmatprep.subr.mxu0 %v710
  %2356 = vmatpush1.msra.mxu0 %v709
  %2357 = vmatprep.subr.mxu0 %v714
  %2358 = vmatpush1.msra.mxu0 %v713
  %2359 = vmatprep.subr.mxu0 %v718
  %2360 = vmatpush1.msra.mxu0 %v717
  %2361 = vmatprep.subr.mxu0 %v722
  %2362 = vmatpush1.msra.mxu0 %v721
  %2363 = vmatprep.subr.mxu0 %v726
  %2364 = vmatpush1.msra.mxu0 %v725
  %2365 = vmatprep.subr.mxu0 %v730
  %2366 = vmatpush1.msra.mxu0 %v729
  %2367 = vmatprep.subr.mxu0 %v734
  %2368 = vmatpush1.msra.mxu0 %v733
  %2369 = vmatprep.subr.mxu0 %v738
  %2370 = vmatpush1.msra.mxu0 %v737
  %2371 = vmatprep.mubr.f32.mxu0 %v2131
  %2372 = vmatmul.mubr.f32.gmra.mrb[0].mxu0 %v2306
  %v2373 = vpop.f32.mrb[0].mxu0
  %v2374 = vadd.f32 %v926, %v2373
  %v2375 = vpop.f32.mrb[0].mxu0
  %v2376 = vadd.f32 %v930, %v2375
  %2377 = vdwg.mxu0
  %2378 = vmatprep.subr.mxu0 %v616
  %2379 = vmatpush1.msra.mxu0 %v615
  %2380 = vmatprep.subr.mxu0 %v620
  %2381 = vmatpush1.msra.mxu0 %v619
  %2382 = vmatprep.subr.mxu0 %v624
  %2383 = vmatpush1.msra.mxu0 %v623
  %2384 = vmatprep.subr.mxu0 %v628
  %2385 = vmatpush1.msra.mxu0 %v627
  %2386 = vmatprep.subr.mxu0 %v632
  %2387 = vmatpush1.msra.mxu0 %v631
  %2388 = vmatprep.subr.mxu0 %v636
  %2389 = vmatpush1.msra.mxu0 %v635
  %2390 = vmatprep.subr.mxu0 %v640
  %2391 = vmatpush1.msra.mxu0 %v639
  %2392 = vmatprep.subr.mxu0 %v644
  %2393 = vmatpush1.msra.mxu0 %v643
  %2394 = vmatprep.subr.mxu0 %v648
  %2395 = vmatpush1.msra.mxu0 %v647
  %2396 = vmatprep.subr.mxu0 %v652
  %2397 = vmatpush1.msra.mxu0 %v651
  %2398 = vmatprep.subr.mxu0 %v656
  %2399 = vmatpush1.msra.mxu0 %v655
  %2400 = vmatprep.subr.mxu0 %v660
  %2401 = vmatpush1.msra.mxu0 %v659
  %2402 = vmatprep.subr.mxu0 %v664
  %2403 = vmatpush1.msra.mxu0 %v663
  %2404 = vmatprep.subr.mxu0 %v668
  %2405 = vmatpush1.msra.mxu0 %v667
  %2406 = vmatprep.subr.mxu0 %v672
  %2407 = vmatpush1.msra.mxu0 %v671
  %2408 = vmatprep.subr.mxu0 %v676
  %2409 = vmatpush1.msra.mxu0 %v675
  %2410 = vmatprep.subr.mxu0 %v680
  %2411 = vmatpush1.msra.mxu0 %v679
  %2412 = vmatprep.subr.mxu0 %v684
  %2413 = vmatpush1.msra.mxu0 %v683
  %2414 = vmatprep.subr.mxu0 %v688
  %2415 = vmatpush1.msra.mxu0 %v687
  %2416 = vmatprep.subr.mxu0 %v692
  %2417 = vmatpush1.msra.mxu0 %v691
  %2418 = vmatprep.subr.mxu0 %v696
  %2419 = vmatpush1.msra.mxu0 %v695
  %2420 = vmatprep.subr.mxu0 %v700
  %2421 = vmatpush1.msra.mxu0 %v699
  %2422 = vmatprep.subr.mxu0 %v704
  %2423 = vmatpush1.msra.mxu0 %v703
  %2424 = vmatprep.subr.mxu0 %v708
  %2425 = vmatpush1.msra.mxu0 %v707
  %2426 = vmatprep.subr.mxu0 %v712
  %2427 = vmatpush1.msra.mxu0 %v711
  %2428 = vmatprep.subr.mxu0 %v716
  %2429 = vmatpush1.msra.mxu0 %v715
  %2430 = vmatprep.subr.mxu0 %v720
  %2431 = vmatpush1.msra.mxu0 %v719
  %2432 = vmatprep.subr.mxu0 %v724
  %2433 = vmatpush1.msra.mxu0 %v723
  %2434 = vmatprep.subr.mxu0 %v728
  %2435 = vmatpush1.msra.mxu0 %v727
  %2436 = vmatprep.subr.mxu0 %v732
  %2437 = vmatpush1.msra.mxu0 %v731
  %2438 = vmatprep.subr.mxu0 %v736
  %2439 = vmatpush1.msra.mxu0 %v735
  %2440 = vmatprep.subr.mxu0 %v740
  %2441 = vmatpush1.msra.mxu0 %v739
  %2442 = vmatprep.mubr.f32.mxu0 %v2131
  %2443 = vmatmul.mubr.f32.gmra.mrb[0].mxu0 %v2306
  %v2444 = vpop.f32.mrb[0].mxu0
  %v2445 = vadd.f32 %v934, %v2444
  %v2446 = vpop.f32.mrb[0].mxu0
  %v2447 = vadd.f32 %v938, %v2446
  %2448 = vdwg.mxu0
  %v2449 = vxor.u32 %v2374, 2147483648
  %v2450 = vmul.f32 %v2449, 1.442695
  %v2451 = vpow.pop %v2450
  %v2452 = vadd.f32 %v2451, 1.0
  %v2453 = vrcp.pop %v2452
  %v2454 = vmul.f32 1.0, %v2453
  %v2455 = vxor.u32 %v2376, 2147483648
  %v2456 = vmul.f32 %v2455, 1.442695
  %v2457 = vpow.pop %v2456
  %v2458 = vadd.f32 %v2457, 1.0
  %v2459 = vrcp.pop %v2458
  %v2460 = vmul.f32 1.0, %v2459
  %v2461 = vtanh.pop %v2445
  %v2462 = vxor.u32 %v2447, 2147483648
  %v2463 = vmul.f32 %v2462, 1.442695
  %v2464 = vpow.pop %v2463
  %v2465 = vadd.f32 %v2464, 1.0
  %v2466 = vrcp.pop %v2465
  %v2467 = vmul.f32 1.0, %v2466
  %v2468 = vmul.f32 %v2460, %v2129
  %v2469 = vmul.f32 %v2454, %v2461
  %v2470 = vadd.f32 %v2468, %v2469
  %v2471 = vtanh.pop %v2470
  %v2472 = vmul.f32 %v2467, %v2471
  %s2473 = scalar_lea.vmem [#allocation2], 160
  %v2474 = vld [vmem:[%s2473] sm:$0xff]
  %v2475 = vld [vmem:[%s2473 + $0x8] sm:$0xff]
  %v2476 = vld [vmem:[%s2473 + $0x10] sm:$0xff]
  %v2477 = vld [vmem:[%s2473 + $0x18] sm:$0xff]
  %2478 = vmatprep.subr.mxu0 %v550
  %2479 = vmatpush1.msra.mxu0 %v549
  %2480 = vmatprep.subr.mxu0 %v554
  %2481 = vmatpush1.msra.mxu0 %v553
  %2482 = vmatprep.subr.mxu0 %v558
  %2483 = vmatpush1.msra.mxu0 %v557
  %2484 = vmatprep.subr.mxu0 %v562
  %2485 = vmatpush1.msra.mxu0 %v561
  %2486 = vmatprep.subr.mxu0 %v566
  %2487 = vmatpush1.msra.mxu0 %v565
  %2488 = vmatprep.subr.mxu0 %v570
  %2489 = vmatpush1.msra.mxu0 %v569
  %2490 = vmatprep.subr.mxu0 %v574
  %2491 = vmatpush1.msra.mxu0 %v573
  %2492 = vmatprep.subr.mxu0 %v578
  %2493 = vmatpush1.msra.mxu0 %v577
  %2494 = vmatprep.subr.mxu0 %v582
  %2495 = vmatpush1.msra.mxu0 %v581
  %2496 = vmatprep.subr.mxu0 %v586
  %2497 = vmatpush1.msra.mxu0 %v585
  %2498 = vmatprep.subr.mxu0 %v590
  %2499 = vmatpush1.msra.mxu0 %v589
  %2500 = vmatprep.subr.mxu0 %v594
  %2501 = vmatpush1.msra.mxu0 %v593
  %2502 = vmatprep.subr.mxu0 %v598
  %2503 = vmatpush1.msra.mxu0 %v597
  %2504 = vmatprep.subr.mxu0 %v602
  %2505 = vmatpush1.msra.mxu0 %v601
  %2506 = vmatprep.subr.mxu0 %v606
  %2507 = vmatpush1.msra.mxu0 %v605
  %2508 = vmatprep.subr.mxu0 %v610
  %2509 = vmatpush1.msra.mxu0 %v609
  %2510 = vmatprep.subr.mxu0 0.0
  %2511 = vmatpush1.msra.mxu0 0.0
  %2512 = vmatprep.subr.mxu0 0.0
  %2513 = vmatpush1.msra.mxu0 0.0
  %2514 = vmatprep.subr.mxu0 0.0
  %2515 = vmatpush1.msra.mxu0 0.0
  %2516 = vmatprep.subr.mxu0 0.0
  %2517 = vmatpush1.msra.mxu0 0.0
  %2518 = vmatprep.subr.mxu0 0.0
  %2519 = vmatpush1.msra.mxu0 0.0
  %2520 = vmatprep.subr.mxu0 0.0
  %2521 = vmatpush1.msra.mxu0 0.0
  %2522 = vmatprep.subr.mxu0 0.0
  %2523 = vmatpush1.msra.mxu0 0.0
  %2524 = vmatprep.subr.mxu0 0.0
  %2525 = vmatpush1.msra.mxu0 0.0
  %2526 = vmatprep.subr.mxu0 0.0
  %2527 = vmatpush1.msra.mxu0 0.0
  %2528 = vmatprep.subr.mxu0 0.0
  %2529 = vmatpush1.msra.mxu0 0.0
  %2530 = vmatprep.subr.mxu0 0.0
  %2531 = vmatpush1.msra.mxu0 0.0
  %2532 = vmatprep.subr.mxu0 0.0
  %2533 = vmatpush1.msra.mxu0 0.0
  %2534 = vmatprep.subr.mxu0 0.0
  %2535 = vmatpush1.msra.mxu0 0.0
  %2536 = vmatprep.subr.mxu0 0.0
  %2537 = vmatpush1.msra.mxu0 0.0
  %2538 = vmatprep.subr.mxu0 0.0
  %2539 = vmatpush1.msra.mxu0 0.0
  %2540 = vmatprep.subr.mxu0 0.0
  %2541 = vmatpush1.msra.mxu0 0.0
  %2542 = vmatprep.mubr.f32.mxu0 0.0
  %2543 = vmatmul.mubr.f32.gmra.mrb[0].mxu0 %v2306
  %v2544 = vpop.f32.mrb[0].mxu0
  %v2545 = vadd.f32 0.0, %v2544
  %v2546 = vpop.f32.mrb[0].mxu0
  %v2547 = vadd.f32 0.0, %v2546
  %2548 = vdwg.mxu0
  %2549 = vmatprep.subr.mxu0 %v552
  %2550 = vmatpush1.msra.mxu0 %v551
  %2551 = vmatprep.subr.mxu0 %v556
  %2552 = vmatpush1.msra.mxu0 %v555
  %2553 = vmatprep.subr.mxu0 %v560
  %2554 = vmatpush1.msra.mxu0 %v559
  %2555 = vmatprep.subr.mxu0 %v564
  %2556 = vmatpush1.msra.mxu0 %v563
  %2557 = vmatprep.subr.mxu0 %v568
  %2558 = vmatpush1.msra.mxu0 %v567
  %2559 = vmatprep.subr.mxu0 %v572
  %2560 = vmatpush1.msra.mxu0 %v571
  %2561 = vmatprep.subr.mxu0 %v576
  %2562 = vmatpush1.msra.mxu0 %v575
  %2563 = vmatprep.subr.mxu0 %v580
  %2564 = vmatpush1.msra.mxu0 %v579
  %2565 = vmatprep.subr.mxu0 %v584
  %2566 = vmatpush1.msra.mxu0 %v583
  %2567 = vmatprep.subr.mxu0 %v588
  %2568 = vmatpush1.msra.mxu0 %v587
  %2569 = vmatprep.subr.mxu0 %v592
  %2570 = vmatpush1.msra.mxu0 %v591
  %2571 = vmatprep.subr.mxu0 %v596
  %2572 = vmatpush1.msra.mxu0 %v595
  %2573 = vmatprep.subr.mxu0 %v600
  %2574 = vmatpush1.msra.mxu0 %v599
  %2575 = vmatprep.subr.mxu0 %v604
  %2576 = vmatpush1.msra.mxu0 %v603
  %2577 = vmatprep.subr.mxu0 %v608
  %2578 = vmatpush1.msra.mxu0 %v607
  %2579 = vmatprep.subr.mxu0 %v612
  %2580 = vmatpush1.msra.mxu0 %v611
  %2581 = vmatprep.subr.mxu0 0.0
  %2582 = vmatpush1.msra.mxu0 0.0
  %2583 = vmatprep.subr.mxu0 0.0
  %2584 = vmatpush1.msra.mxu0 0.0
  %2585 = vmatprep.subr.mxu0 0.0
  %2586 = vmatpush1.msra.mxu0 0.0
  %2587 = vmatprep.subr.mxu0 0.0
  %2588 = vmatpush1.msra.mxu0 0.0
  %2589 = vmatprep.subr.mxu0 0.0
  %2590 = vmatpush1.msra.mxu0 0.0
  %2591 = vmatprep.subr.mxu0 0.0
  %2592 = vmatpush1.msra.mxu0 0.0
  %2593 = vmatprep.subr.mxu0 0.0
  %2594 = vmatpush1.msra.mxu0 0.0
  %2595 = vmatprep.subr.mxu0 0.0
  %2596 = vmatpush1.msra.mxu0 0.0
  %2597 = vmatprep.subr.mxu0 0.0
  %2598 = vmatpush1.msra.mxu0 0.0
  %2599 = vmatprep.subr.mxu0 0.0
  %2600 = vmatpush1.msra.mxu0 0.0
  %2601 = vmatprep.subr.mxu0 0.0
  %2602 = vmatpush1.msra.mxu0 0.0
  %2603 = vmatprep.subr.mxu0 0.0
  %2604 = vmatpush1.msra.mxu0 0.0
  %2605 = vmatprep.subr.mxu0 0.0
  %2606 = vmatpush1.msra.mxu0 0.0
  %2607 = vmatprep.subr.mxu0 0.0
  %2608 = vmatpush1.msra.mxu0 0.0
  %2609 = vmatprep.subr.mxu0 0.0
  %2610 = vmatpush1.msra.mxu0 0.0
  %2611 = vmatprep.subr.mxu0 0.0
  %2612 = vmatpush1.msra.mxu0 0.0
  %2613 = vmatprep.mubr.f32.mxu0 0.0
  %2614 = vmatmul.mubr.f32.gmra.mrb[0].mxu0 %v2306
  %v2615 = vpop.f32.mrb[0].mxu0
  %v2616 = vadd.f32 0.0, %v2615
  %v2617 = vpop.f32.mrb[0].mxu0
  %v2618 = vadd.f32 0.0, %v2617
  %2619 = vdwg.mxu0
  %v2620 = vadd.f32 %v2474, %v2545
  %v2621 = vadd.f32 %v2475, %v2547
  %v2622 = vadd.f32 %v2476, %v2616
  %v2623 = vadd.f32 %v2477, %v2618
  %v2624 = vxor.u32 %v2620, 2147483648
  %v2625 = vmul.f32 %v2624, 1.442695
  %v2626 = vpow.pop %v2625
  %v2627 = vadd.f32 %v2626, 1.0
  %v2628 = vrcp.pop %v2627
  %v2629 = vmul.f32 1.0, %v2628
  %v2630 = vxor.u32 %v2621, 2147483648
  %v2631 = vmul.f32 %v2630, 1.442695
  %v2632 = vpow.pop %v2631
  %v2633 = vadd.f32 %v2632, 1.0
  %v2634 = vrcp.pop %v2633
  %v2635 = vmul.f32 1.0, %v2634
  %v2636 = vtanh.pop %v2622
  %v2637 = vxor.u32 %v2623, 2147483648
  %v2638 = vmul.f32 %v2637, 1.442695
  %v2639 = vpow.pop %v2638
  %v2640 = vadd.f32 %v2639, 1.0
  %v2641 = vrcp.pop %v2640
  %v2642 = vmul.f32 1.0, %v2641
  %v2643 = vmul.f32 %v2635, %v2304
  %v2644 = vmul.f32 %v2629, %v2636
  %v2645 = vadd.f32 %v2643, %v2644
  %v2646 = vtanh.pop %v2645
  %v2647 = vmul.f32 %v2642, %v2646
  %2648 = vmatprep.subr.mxu0 %v614
  %2649 = vmatpush1.msra.mxu0 %v613
  %2650 = vmatprep.subr.mxu0 %v618
  %2651 = vmatpush1.msra.mxu0 %v617
  %2652 = vmatprep.subr.mxu0 %v622
  %2653 = vmatpush1.msra.mxu0 %v621
  %2654 = vmatprep.subr.mxu0 %v626
  %2655 = vmatpush1.msra.mxu0 %v625
  %2656 = vmatprep.subr.mxu0 %v630
  %2657 = vmatpush1.msra.mxu0 %v629
  %2658 = vmatprep.subr.mxu0 %v634
  %2659 = vmatpush1.msra.mxu0 %v633
  %2660 = vmatprep.subr.mxu0 %v638
  %2661 = vmatpush1.msra.mxu0 %v637
  %2662 = vmatprep.subr.mxu0 %v642
  %2663 = vmatpush1.msra.mxu0 %v641
  %2664 = vmatprep.subr.mxu0 %v646
  %2665 = vmatpush1.msra.mxu0 %v645
  %2666 = vmatprep.subr.mxu0 %v650
  %2667 = vmatpush1.msra.mxu0 %v649
  %2668 = vmatprep.subr.mxu0 %v654
  %2669 = vmatpush1.msra.mxu0 %v653
  %2670 = vmatprep.subr.mxu0 %v658
  %2671 = vmatpush1.msra.mxu0 %v657
  %2672 = vmatprep.subr.mxu0 %v662
  %2673 = vmatpush1.msra.mxu0 %v661
  %2674 = vmatprep.subr.mxu0 %v666
  %2675 = vmatpush1.msra.mxu0 %v665
  %2676 = vmatprep.subr.mxu0 %v670
  %2677 = vmatpush1.msra.mxu0 %v669
  %2678 = vmatprep.subr.mxu0 %v674
  %2679 = vmatpush1.msra.mxu0 %v673
  %2680 = vmatprep.subr.mxu0 %v678
  %2681 = vmatpush1.msra.mxu0 %v677
  %2682 = vmatprep.subr.mxu0 %v682
  %2683 = vmatpush1.msra.mxu0 %v681
  %2684 = vmatprep.subr.mxu0 %v686
  %2685 = vmatpush1.msra.mxu0 %v685
  %2686 = vmatprep.subr.mxu0 %v690
  %2687 = vmatpush1.msra.mxu0 %v689
  %2688 = vmatprep.subr.mxu0 %v694
  %2689 = vmatpush1.msra.mxu0 %v693
  %2690 = vmatprep.subr.mxu0 %v698
  %2691 = vmatpush1.msra.mxu0 %v697
  %2692 = vmatprep.subr.mxu0 %v702
  %2693 = vmatpush1.msra.mxu0 %v701
  %2694 = vmatprep.subr.mxu0 %v706
  %2695 = vmatpush1.msra.mxu0 %v705
  %2696 = vmatprep.subr.mxu0 %v710
  %2697 = vmatpush1.msra.mxu0 %v709
  %2698 = vmatprep.subr.mxu0 %v714
  %2699 = vmatpush1.msra.mxu0 %v713
  %2700 = vmatprep.subr.mxu0 %v718
  %2701 = vmatpush1.msra.mxu0 %v717
  %2702 = vmatprep.subr.mxu0 %v722
  %2703 = vmatpush1.msra.mxu0 %v721
  %2704 = vmatprep.subr.mxu0 %v726
  %2705 = vmatpush1.msra.mxu0 %v725
  %2706 = vmatprep.subr.mxu0 %v730
  %2707 = vmatpush1.msra.mxu0 %v729
  %2708 = vmatprep.subr.mxu0 %v734
  %2709 = vmatpush1.msra.mxu0 %v733
  %2710 = vmatprep.subr.mxu0 %v738
  %2711 = vmatpush1.msra.mxu0 %v737
  %2712 = vmatprep.mubr.f32.mxu0 %v2472
  %2713 = vmatmul.mubr.f32.gmra.mrb[0].mxu0 %v2647
  %v2714 = vpop.f32.mrb[0].mxu0
  %v2715 = vadd.f32 %v926, %v2714
  %v2716 = vpop.f32.mrb[0].mxu0
  %v2717 = vadd.f32 %v930, %v2716
  %2718 = vdwg.mxu0
  %2719 = vmatprep.subr.mxu0 %v616
  %2720 = vmatpush1.msra.mxu0 %v615
  %2721 = vmatprep.subr.mxu0 %v620
  %2722 = vmatpush1.msra.mxu0 %v619
  %2723 = vmatprep.subr.mxu0 %v624
  %2724 = vmatpush1.msra.mxu0 %v623
  %2725 = vmatprep.subr.mxu0 %v628
  %2726 = vmatpush1.msra.mxu0 %v627
  %2727 = vmatprep.subr.mxu0 %v632
  %2728 = vmatpush1.msra.mxu0 %v631
  %2729 = vmatprep.subr.mxu0 %v636
  %2730 = vmatpush1.msra.mxu0 %v635
  %2731 = vmatprep.subr.mxu0 %v640
  %2732 = vmatpush1.msra.mxu0 %v639
  %2733 = vmatprep.subr.mxu0 %v644
  %2734 = vmatpush1.msra.mxu0 %v643
  %2735 = vmatprep.subr.mxu0 %v648
  %2736 = vmatpush1.msra.mxu0 %v647
  %2737 = vmatprep.subr.mxu0 %v652
  %2738 = vmatpush1.msra.mxu0 %v651
  %2739 = vmatprep.subr.mxu0 %v656
  %2740 = vmatpush1.msra.mxu0 %v655
  %2741 = vmatprep.subr.mxu0 %v660
  %2742 = vmatpush1.msra.mxu0 %v659
  %2743 = vmatprep.subr.mxu0 %v664
  %2744 = vmatpush1.msra.mxu0 %v663
  %2745 = vmatprep.subr.mxu0 %v668
  %2746 = vmatpush1.msra.mxu0 %v667
  %2747 = vmatprep.subr.mxu0 %v672
  %2748 = vmatpush1.msra.mxu0 %v671
  %2749 = vmatprep.subr.mxu0 %v676
  %2750 = vmatpush1.msra.mxu0 %v675
  %2751 = vmatprep.subr.mxu0 %v680
  %2752 = vmatpush1.msra.mxu0 %v679
  %2753 = vmatprep.subr.mxu0 %v684
  %2754 = vmatpush1.msra.mxu0 %v683
  %2755 = vmatprep.subr.mxu0 %v688
  %2756 = vmatpush1.msra.mxu0 %v687
  %2757 = vmatprep.subr.mxu0 %v692
  %2758 = vmatpush1.msra.mxu0 %v691
  %2759 = vmatprep.subr.mxu0 %v696
  %2760 = vmatpush1.msra.mxu0 %v695
  %2761 = vmatprep.subr.mxu0 %v700
  %2762 = vmatpush1.msra.mxu0 %v699
  %2763 = vmatprep.subr.mxu0 %v704
  %2764 = vmatpush1.msra.mxu0 %v703
  %2765 = vmatprep.subr.mxu0 %v708
  %2766 = vmatpush1.msra.mxu0 %v707
  %2767 = vmatprep.subr.mxu0 %v712
  %2768 = vmatpush1.msra.mxu0 %v711
  %2769 = vmatprep.subr.mxu0 %v716
  %2770 = vmatpush1.msra.mxu0 %v715
  %2771 = vmatprep.subr.mxu0 %v720
  %2772 = vmatpush1.msra.mxu0 %v719
  %2773 = vmatprep.subr.mxu0 %v724
  %2774 = vmatpush1.msra.mxu0 %v723
  %2775 = vmatprep.subr.mxu0 %v728
  %2776 = vmatpush1.msra.mxu0 %v727
  %2777 = vmatprep.subr.mxu0 %v732
  %2778 = vmatpush1.msra.mxu0 %v731
  %2779 = vmatprep.subr.mxu0 %v736
  %2780 = vmatpush1.msra.mxu0 %v735
  %2781 = vmatprep.subr.mxu0 %v740
  %2782 = vmatpush1.msra.mxu0 %v739
  %2783 = vmatprep.mubr.f32.mxu0 %v2472
  %2784 = vmatmul.mubr.f32.gmra.mrb[0].mxu0 %v2647
  %v2785 = vpop.f32.mrb[0].mxu0
  %v2786 = vadd.f32 %v934, %v2785
  %v2787 = vpop.f32.mrb[0].mxu0
  %v2788 = vadd.f32 %v938, %v2787
  %2789 = vdwg.mxu0
  %v2790 = vxor.u32 %v2715, 2147483648
  %v2791 = vmul.f32 %v2790, 1.442695
  %v2792 = vpow.pop %v2791
  %v2793 = vadd.f32 %v2792, 1.0
  %v2794 = vrcp.pop %v2793
  %v2795 = vmul.f32 1.0, %v2794
  %v2796 = vxor.u32 %v2717, 2147483648
  %v2797 = vmul.f32 %v2796, 1.442695
  %v2798 = vpow.pop %v2797
  %v2799 = vadd.f32 %v2798, 1.0
  %v2800 = vrcp.pop %v2799
  %v2801 = vmul.f32 1.0, %v2800
  %v2802 = vtanh.pop %v2786
  %v2803 = vxor.u32 %v2788, 2147483648
  %v2804 = vmul.f32 %v2803, 1.442695
  %v2805 = vpow.pop %v2804
  %v2806 = vadd.f32 %v2805, 1.0
  %v2807 = vrcp.pop %v2806
  %v2808 = vmul.f32 1.0, %v2807
  %v2809 = vmul.f32 %v2801, %v2470
  %v2810 = vmul.f32 %v2795, %v2802
  %v2811 = vadd.f32 %v2809, %v2810
  %v2812 = vtanh.pop %v2811
  %v2813 = vmul.f32 %v2808, %v2812
  %s2814 = scalar_lea.vmem [#allocation2], 192
  %v2815 = vld [vmem:[%s2814] sm:$0xff]
  %v2816 = vld [vmem:[%s2814 + $0x8] sm:$0xff]
  %v2817 = vld [vmem:[%s2814 + $0x10] sm:$0xff]
  %v2818 = vld [vmem:[%s2814 + $0x18] sm:$0xff]
  %2819 = vmatprep.subr.mxu0 %v550
  %2820 = vmatpush1.msra.mxu0 %v549
  %2821 = vmatprep.subr.mxu0 %v554
  %2822 = vmatpush1.msra.mxu0 %v553
  %2823 = vmatprep.subr.mxu0 %v558
  %2824 = vmatpush1.msra.mxu0 %v557
  %2825 = vmatprep.subr.mxu0 %v562
  %2826 = vmatpush1.msra.mxu0 %v561
  %2827 = vmatprep.subr.mxu0 %v566
  %2828 = vmatpush1.msra.mxu0 %v565
  %2829 = vmatprep.subr.mxu0 %v570
  %2830 = vmatpush1.msra.mxu0 %v569
  %2831 = vmatprep.subr.mxu0 %v574
  %2832 = vmatpush1.msra.mxu0 %v573
  %2833 = vmatprep.subr.mxu0 %v578
  %2834 = vmatpush1.msra.mxu0 %v577
  %2835 = vmatprep.subr.mxu0 %v582
  %2836 = vmatpush1.msra.mxu0 %v581
  %2837 = vmatprep.subr.mxu0 %v586
  %2838 = vmatpush1.msra.mxu0 %v585
  %2839 = vmatprep.subr.mxu0 %v590
  %2840 = vmatpush1.msra.mxu0 %v589
  %2841 = vmatprep.subr.mxu0 %v594
  %2842 = vmatpush1.msra.mxu0 %v593
  %2843 = vmatprep.subr.mxu0 %v598
  %2844 = vmatpush1.msra.mxu0 %v597
  %2845 = vmatprep.subr.mxu0 %v602
  %2846 = vmatpush1.msra.mxu0 %v601
  %2847 = vmatprep.subr.mxu0 %v606
  %2848 = vmatpush1.msra.mxu0 %v605
  %2849 = vmatprep.subr.mxu0 %v610
  %2850 = vmatpush1.msra.mxu0 %v609
  %2851 = vmatprep.subr.mxu0 0.0
  %2852 = vmatpush1.msra.mxu0 0.0
  %2853 = vmatprep.subr.mxu0 0.0
  %2854 = vmatpush1.msra.mxu0 0.0
  %2855 = vmatprep.subr.mxu0 0.0
  %2856 = vmatpush1.msra.mxu0 0.0
  %2857 = vmatprep.subr.mxu0 0.0
  %2858 = vmatpush1.msra.mxu0 0.0
  %2859 = vmatprep.subr.mxu0 0.0
  %2860 = vmatpush1.msra.mxu0 0.0
  %2861 = vmatprep.subr.mxu0 0.0
  %2862 = vmatpush1.msra.mxu0 0.0
  %2863 = vmatprep.subr.mxu0 0.0
  %2864 = vmatpush1.msra.mxu0 0.0
  %2865 = vmatprep.subr.mxu0 0.0
  %2866 = vmatpush1.msra.mxu0 0.0
  %2867 = vmatprep.subr.mxu0 0.0
  %2868 = vmatpush1.msra.mxu0 0.0
  %2869 = vmatprep.subr.mxu0 0.0
  %2870 = vmatpush1.msra.mxu0 0.0
  %2871 = vmatprep.subr.mxu0 0.0
  %2872 = vmatpush1.msra.mxu0 0.0
  %2873 = vmatprep.subr.mxu0 0.0
  %2874 = vmatpush1.msra.mxu0 0.0
  %2875 = vmatprep.subr.mxu0 0.0
  %2876 = vmatpush1.msra.mxu0 0.0
  %2877 = vmatprep.subr.mxu0 0.0
  %2878 = vmatpush1.msra.mxu0 0.0
  %2879 = vmatprep.subr.mxu0 0.0
  %2880 = vmatpush1.msra.mxu0 0.0
  %2881 = vmatprep.subr.mxu0 0.0
  %2882 = vmatpush1.msra.mxu0 0.0
  %2883 = vmatprep.mubr.f32.mxu0 0.0
  %2884 = vmatmul.mubr.f32.gmra.mrb[0].mxu0 %v2647
  %v2885 = vpop.f32.mrb[0].mxu0
  %v2886 = vadd.f32 0.0, %v2885
  %v2887 = vpop.f32.mrb[0].mxu0
  %v2888 = vadd.f32 0.0, %v2887
  %2889 = vdwg.mxu0
  %2890 = vmatprep.subr.mxu0 %v552
  %2891 = vmatpush1.msra.mxu0 %v551
  %2892 = vmatprep.subr.mxu0 %v556
  %2893 = vmatpush1.msra.mxu0 %v555
  %2894 = vmatprep.subr.mxu0 %v560
  %2895 = vmatpush1.msra.mxu0 %v559
  %2896 = vmatprep.subr.mxu0 %v564
  %2897 = vmatpush1.msra.mxu0 %v563
  %2898 = vmatprep.subr.mxu0 %v568
  %2899 = vmatpush1.msra.mxu0 %v567
  %2900 = vmatprep.subr.mxu0 %v572
  %2901 = vmatpush1.msra.mxu0 %v571
  %2902 = vmatprep.subr.mxu0 %v576
  %2903 = vmatpush1.msra.mxu0 %v575
  %2904 = vmatprep.subr.mxu0 %v580
  %2905 = vmatpush1.msra.mxu0 %v579
  %2906 = vmatprep.subr.mxu0 %v584
  %2907 = vmatpush1.msra.mxu0 %v583
  %2908 = vmatprep.subr.mxu0 %v588
  %2909 = vmatpush1.msra.mxu0 %v587
  %2910 = vmatprep.subr.mxu0 %v592
  %2911 = vmatpush1.msra.mxu0 %v591
  %2912 = vmatprep.subr.mxu0 %v596
  %2913 = vmatpush1.msra.mxu0 %v595
  %2914 = vmatprep.subr.mxu0 %v600
  %2915 = vmatpush1.msra.mxu0 %v599
  %2916 = vmatprep.subr.mxu0 %v604
  %2917 = vmatpush1.msra.mxu0 %v603
  %2918 = vmatprep.subr.mxu0 %v608
  %2919 = vmatpush1.msra.mxu0 %v607
  %2920 = vmatprep.subr.mxu0 %v612
  %2921 = vmatpush1.msra.mxu0 %v611
  %2922 = vmatprep.subr.mxu0 0.0
  %2923 = vmatpush1.msra.mxu0 0.0
  %2924 = vmatprep.subr.mxu0 0.0
  %2925 = vmatpush1.msra.mxu0 0.0
  %2926 = vmatprep.subr.mxu0 0.0
  %2927 = vmatpush1.msra.mxu0 0.0
  %2928 = vmatprep.subr.mxu0 0.0
  %2929 = vmatpush1.msra.mxu0 0.0
  %2930 = vmatprep.subr.mxu0 0.0
  %2931 = vmatpush1.msra.mxu0 0.0
  %2932 = vmatprep.subr.mxu0 0.0
  %2933 = vmatpush1.msra.mxu0 0.0
  %2934 = vmatprep.subr.mxu0 0.0
  %2935 = vmatpush1.msra.mxu0 0.0
  %2936 = vmatprep.subr.mxu0 0.0
  %2937 = vmatpush1.msra.mxu0 0.0
  %2938 = vmatprep.subr.mxu0 0.0
  %2939 = vmatpush1.msra.mxu0 0.0
  %2940 = vmatprep.subr.mxu0 0.0
  %2941 = vmatpush1.msra.mxu0 0.0
  %2942 = vmatprep.subr.mxu0 0.0
  %2943 = vmatpush1.msra.mxu0 0.0
  %2944 = vmatprep.subr.mxu0 0.0
  %2945 = vmatpush1.msra.mxu0 0.0
  %2946 = vmatprep.subr.mxu0 0.0
  %2947 = vmatpush1.msra.mxu0 0.0
  %2948 = vmatprep.subr.mxu0 0.0
  %2949 = vmatpush1.msra.mxu0 0.0
  %2950 = vmatprep.subr.mxu0 0.0
  %2951 = vmatpush1.msra.mxu0 0.0
  %2952 = vmatprep.subr.mxu0 0.0
  %2953 = vmatpush1.msra.mxu0 0.0
  %2954 = vmatprep.mubr.f32.mxu0 0.0
  %2955 = vmatmul.mubr.f32.gmra.mrb[0].mxu0 %v2647
  %v2956 = vpop.f32.mrb[0].mxu0
  %v2957 = vadd.f32 0.0, %v2956
  %v2958 = vpop.f32.mrb[0].mxu0
  %v2959 = vadd.f32 0.0, %v2958
  %2960 = vdwg.mxu0
  %v2961 = vadd.f32 %v2815, %v2886
  %v2962 = vadd.f32 %v2816, %v2888
  %v2963 = vadd.f32 %v2817, %v2957
  %v2964 = vadd.f32 %v2818, %v2959
  %v2965 = vxor.u32 %v2961, 2147483648
  %v2966 = vmul.f32 %v2965, 1.442695
  %v2967 = vpow.pop %v2966
  %v2968 = vadd.f32 %v2967, 1.0
  %v2969 = vrcp.pop %v2968
  %v2970 = vmul.f32 1.0, %v2969
  %v2971 = vxor.u32 %v2962, 2147483648
  %v2972 = vmul.f32 %v2971, 1.442695
  %v2973 = vpow.pop %v2972
  %v2974 = vadd.f32 %v2973, 1.0
  %v2975 = vrcp.pop %v2974
  %v2976 = vmul.f32 1.0, %v2975
  %v2977 = vtanh.pop %v2963
  %v2978 = vxor.u32 %v2964, 2147483648
  %v2979 = vmul.f32 %v2978, 1.442695
  %v2980 = vpow.pop %v2979
  %v2981 = vadd.f32 %v2980, 1.0
  %v2982 = vrcp.pop %v2981
  %v2983 = vmul.f32 1.0, %v2982
  %v2984 = vmul.f32 %v2976, %v2645
  %v2985 = vmul.f32 %v2970, %v2977
  %v2986 = vadd.f32 %v2984, %v2985
  %v2987 = vtanh.pop %v2986
  %v2988 = vmul.f32 %v2983, %v2987
  %2989 = vmatprep.subr.mxu0 %v614
  %2990 = vmatpush1.msra.mxu0 %v613
  %2991 = vmatprep.subr.mxu0 %v618
  %2992 = vmatpush1.msra.mxu0 %v617
  %2993 = vmatprep.subr.mxu0 %v622
  %2994 = vmatpush1.msra.mxu0 %v621
  %2995 = vmatprep.subr.mxu0 %v626
  %2996 = vmatpush1.msra.mxu0 %v625
  %2997 = vmatprep.subr.mxu0 %v630
  %2998 = vmatpush1.msra.mxu0 %v629
  %2999 = vmatprep.subr.mxu0 %v634
  %3000 = vmatpush1.msra.mxu0 %v633
  %3001 = vmatprep.subr.mxu0 %v638
  %3002 = vmatpush1.msra.mxu0 %v637
  %3003 = vmatprep.subr.mxu0 %v642
  %3004 = vmatpush1.msra.mxu0 %v641
  %3005 = vmatprep.subr.mxu0 %v646
  %3006 = vmatpush1.msra.mxu0 %v645
  %3007 = vmatprep.subr.mxu0 %v650
  %3008 = vmatpush1.msra.mxu0 %v649
  %3009 = vmatprep.subr.mxu0 %v654
  %3010 = vmatpush1.msra.mxu0 %v653
  %3011 = vmatprep.subr.mxu0 %v658
  %3012 = vmatpush1.msra.mxu0 %v657
  %3013 = vmatprep.subr.mxu0 %v662
  %3014 = vmatpush1.msra.mxu0 %v661
  %3015 = vmatprep.subr.mxu0 %v666
  %3016 = vmatpush1.msra.mxu0 %v665
  %3017 = vmatprep.subr.mxu0 %v670
  %3018 = vmatpush1.msra.mxu0 %v669
  %3019 = vmatprep.subr.mxu0 %v674
  %3020 = vmatpush1.msra.mxu0 %v673
  %3021 = vmatprep.subr.mxu0 %v678
  %3022 = vmatpush1.msra.mxu0 %v677
  %3023 = vmatprep.subr.mxu0 %v682
  %3024 = vmatpush1.msra.mxu0 %v681
  %3025 = vmatprep.subr.mxu0 %v686
  %3026 = vmatpush1.msra.mxu0 %v685
  %3027 = vmatprep.subr.mxu0 %v690
  %3028 = vmatpush1.msra.mxu0 %v689
  %3029 = vmatprep.subr.mxu0 %v694
  %3030 = vmatpush1.msra.mxu0 %v693
  %3031 = vmatprep.subr.mxu0 %v698
  %3032 = vmatpush1.msra.mxu0 %v697
  %3033 = vmatprep.subr.mxu0 %v702
  %3034 = vmatpush1.msra.mxu0 %v701
  %3035 = vmatprep.subr.mxu0 %v706
  %3036 = vmatpush1.msra.mxu0 %v705
  %3037 = vmatprep.subr.mxu0 %v710
  %3038 = vmatpush1.msra.mxu0 %v709
  %3039 = vmatprep.subr.mxu0 %v714
  %3040 = vmatpush1.msra.mxu0 %v713
  %3041 = vmatprep.subr.mxu0 %v718
  %3042 = vmatpush1.msra.mxu0 %v717
  %3043 = vmatprep.subr.mxu0 %v722
  %3044 = vmatpush1.msra.mxu0 %v721
  %3045 = vmatprep.subr.mxu0 %v726
  %3046 = vmatpush1.msra.mxu0 %v725
  %3047 = vmatprep.subr.mxu0 %v730
  %3048 = vmatpush1.msra.mxu0 %v729
  %3049 = vmatprep.subr.mxu0 %v734
  %3050 = vmatpush1.msra.mxu0 %v733
  %3051 = vmatprep.subr.mxu0 %v738
  %3052 = vmatpush1.msra.mxu0 %v737
  %3053 = vmatprep.mubr.f32.mxu0 %v2813
  %3054 = vmatmul.mubr.f32.gmra.mrb[0].mxu0 %v2988
  %v3055 = vpop.f32.mrb[0].mxu0
  %v3056 = vadd.f32 %v926, %v3055
  %v3057 = vpop.f32.mrb[0].mxu0
  %v3058 = vadd.f32 %v930, %v3057
  %3059 = vdwg.mxu0
  %3060 = vmatprep.subr.mxu0 %v616
  %3061 = vmatpush1.msra.mxu0 %v615
  %3062 = vmatprep.subr.mxu0 %v620
  %3063 = vmatpush1.msra.mxu0 %v619
  %3064 = vmatprep.subr.mxu0 %v624
  %3065 = vmatpush1.msra.mxu0 %v623
  %3066 = vmatprep.subr.mxu0 %v628
  %3067 = vmatpush1.msra.mxu0 %v627
  %3068 = vmatprep.subr.mxu0 %v632
  %3069 = vmatpush1.msra.mxu0 %v631
  %3070 = vmatprep.subr.mxu0 %v636
  %3071 = vmatpush1.msra.mxu0 %v635
  %3072 = vmatprep.subr.mxu0 %v640
  %3073 = vmatpush1.msra.mxu0 %v639
  %3074 = vmatprep.subr.mxu0 %v644
  %3075 = vmatpush1.msra.mxu0 %v643
  %3076 = vmatprep.subr.mxu0 %v648
  %3077 = vmatpush1.msra.mxu0 %v647
  %3078 = vmatprep.subr.mxu0 %v652
  %3079 = vmatpush1.msra.mxu0 %v651
  %3080 = vmatprep.subr.mxu0 %v656
  %3081 = vmatpush1.msra.mxu0 %v655
  %3082 = vmatprep.subr.mxu0 %v660
  %3083 = vmatpush1.msra.mxu0 %v659
  %3084 = vmatprep.subr.mxu0 %v664
  %3085 = vmatpush1.msra.mxu0 %v663
  %3086 = vmatprep.subr.mxu0 %v668
  %3087 = vmatpush1.msra.mxu0 %v667
  %3088 = vmatprep.subr.mxu0 %v672
  %3089 = vmatpush1.msra.mxu0 %v671
  %3090 = vmatprep.subr.mxu0 %v676
  %3091 = vmatpush1.msra.mxu0 %v675
  %3092 = vmatprep.subr.mxu0 %v680
  %3093 = vmatpush1.msra.mxu0 %v679
  %3094 = vmatprep.subr.mxu0 %v684
  %3095 = vmatpush1.msra.mxu0 %v683
  %3096 = vmatprep.subr.mxu0 %v688
  %3097 = vmatpush1.msra.mxu0 %v687
  %3098 = vmatprep.subr.mxu0 %v692
  %3099 = vmatpush1.msra.mxu0 %v691
  %3100 = vmatprep.subr.mxu0 %v696
  %3101 = vmatpush1.msra.mxu0 %v695
  %3102 = vmatprep.subr.mxu0 %v700
  %3103 = vmatpush1.msra.mxu0 %v699
  %3104 = vmatprep.subr.mxu0 %v704
  %3105 = vmatpush1.msra.mxu0 %v703
  %3106 = vmatprep.subr.mxu0 %v708
  %3107 = vmatpush1.msra.mxu0 %v707
  %3108 = vmatprep.subr.mxu0 %v712
  %3109 = vmatpush1.msra.mxu0 %v711
  %3110 = vmatprep.subr.mxu0 %v716
  %3111 = vmatpush1.msra.mxu0 %v715
  %3112 = vmatprep.subr.mxu0 %v720
  %3113 = vmatpush1.msra.mxu0 %v719
  %3114 = vmatprep.subr.mxu0 %v724
  %3115 = vmatpush1.msra.mxu0 %v723
  %3116 = vmatprep.subr.mxu0 %v728
  %3117 = vmatpush1.msra.mxu0 %v727
  %3118 = vmatprep.subr.mxu0 %v732
  %3119 = vmatpush1.msra.mxu0 %v731
  %3120 = vmatprep.subr.mxu0 %v736
  %3121 = vmatpush1.msra.mxu0 %v735
  %3122 = vmatprep.subr.mxu0 %v740
  %3123 = vmatpush1.msra.mxu0 %v739
  %3124 = vmatprep.mubr.f32.mxu0 %v2813
  %3125 = vmatmul.mubr.f32.gmra.mrb[0].mxu0 %v2988
  %v3126 = vpop.f32.mrb[0].mxu0
  %v3127 = vadd.f32 %v934, %v3126
  %v3128 = vpop.f32.mrb[0].mxu0
  %v3129 = vadd.f32 %v938, %v3128
  %3130 = vdwg.mxu0
  %v3131 = vxor.u32 %v3056, 2147483648
  %v3132 = vmul.f32 %v3131, 1.442695
  %v3133 = vpow.pop %v3132
  %v3134 = vadd.f32 %v3133, 1.0
  %v3135 = vrcp.pop %v3134
  %v3136 = vmul.f32 1.0, %v3135
  %v3137 = vxor.u32 %v3058, 2147483648
  %v3138 = vmul.f32 %v3137, 1.442695
  %v3139 = vpow.pop %v3138
  %v3140 = vadd.f32 %v3139, 1.0
  %v3141 = vrcp.pop %v3140
  %v3142 = vmul.f32 1.0, %v3141
  %v3143 = vtanh.pop %v3127
  %v3144 = vxor.u32 %v3129, 2147483648
  %v3145 = vmul.f32 %v3144, 1.442695
  %v3146 = vpow.pop %v3145
  %v3147 = vadd.f32 %v3146, 1.0
  %v3148 = vrcp.pop %v3147
  %v3149 = vmul.f32 1.0, %v3148
  %v3150 = vmul.f32 %v3142, %v2811
  %v3151 = vmul.f32 %v3136, %v3143
  %v3152 = vadd.f32 %v3150, %v3151
  %v3153 = vtanh.pop %v3152
  %v3154 = vmul.f32 %v3149, %v3153
  %s3155 = scalar_lea.vmem [#allocation2], 224
  %v3156 = vld [vmem:[%s3155] sm:$0xff]
  %v3157 = vld [vmem:[%s3155 + $0x8] sm:$0xff]
  %v3158 = vld [vmem:[%s3155 + $0x10] sm:$0xff]
  %v3159 = vld [vmem:[%s3155 + $0x18] sm:$0xff]
  %3160 = vmatprep.subr.mxu0 %v550
  %3161 = vmatpush1.msra.mxu0 %v549
  %3162 = vmatprep.subr.mxu0 %v554
  %3163 = vmatpush1.msra.mxu0 %v553
  %3164 = vmatprep.subr.mxu0 %v558
  %3165 = vmatpush1.msra.mxu0 %v557
  %3166 = vmatprep.subr.mxu0 %v562
  %3167 = vmatpush1.msra.mxu0 %v561
  %3168 = vmatprep.subr.mxu0 %v566
  %3169 = vmatpush1.msra.mxu0 %v565
  %3170 = vmatprep.subr.mxu0 %v570
  %3171 = vmatpush1.msra.mxu0 %v569
  %3172 = vmatprep.subr.mxu0 %v574
  %3173 = vmatpush1.msra.mxu0 %v573
  %3174 = vmatprep.subr.mxu0 %v578
  %3175 = vmatpush1.msra.mxu0 %v577
  %3176 = vmatprep.subr.mxu0 %v582
  %3177 = vmatpush1.msra.mxu0 %v581
  %3178 = vmatprep.subr.mxu0 %v586
  %3179 = vmatpush1.msra.mxu0 %v585
  %3180 = vmatprep.subr.mxu0 %v590
  %3181 = vmatpush1.msra.mxu0 %v589
  %3182 = vmatprep.subr.mxu0 %v594
  %3183 = vmatpush1.msra.mxu0 %v593
  %3184 = vmatprep.subr.mxu0 %v598
  %3185 = vmatpush1.msra.mxu0 %v597
  %3186 = vmatprep.subr.mxu0 %v602
  %3187 = vmatpush1.msra.mxu0 %v601
  %3188 = vmatprep.subr.mxu0 %v606
  %3189 = vmatpush1.msra.mxu0 %v605
  %3190 = vmatprep.subr.mxu0 %v610
  %3191 = vmatpush1.msra.mxu0 %v609
  %3192 = vmatprep.subr.mxu0 0.0
  %3193 = vmatpush1.msra.mxu0 0.0
  %3194 = vmatprep.subr.mxu0 0.0
  %3195 = vmatpush1.msra.mxu0 0.0
  %3196 = vmatprep.subr.mxu0 0.0
  %3197 = vmatpush1.msra.mxu0 0.0
  %3198 = vmatprep.subr.mxu0 0.0
  %3199 = vmatpush1.msra.mxu0 0.0
  %3200 = vmatprep.subr.mxu0 0.0
  %3201 = vmatpush1.msra.mxu0 0.0
  %3202 = vmatprep.subr.mxu0 0.0
  %3203 = vmatpush1.msra.mxu0 0.0
  %3204 = vmatprep.subr.mxu0 0.0
  %3205 = vmatpush1.msra.mxu0 0.0
  %3206 = vmatprep.subr.mxu0 0.0
  %3207 = vmatpush1.msra.mxu0 0.0
  %3208 = vmatprep.subr.mxu0 0.0
  %3209 = vmatpush1.msra.mxu0 0.0
  %3210 = vmatprep.subr.mxu0 0.0
  %3211 = vmatpush1.msra.mxu0 0.0
  %3212 = vmatprep.subr.mxu0 0.0
  %3213 = vmatpush1.msra.mxu0 0.0
  %3214 = vmatprep.subr.mxu0 0.0
  %3215 = vmatpush1.msra.mxu0 0.0
  %3216 = vmatprep.subr.mxu0 0.0
  %3217 = vmatpush1.msra.mxu0 0.0
  %3218 = vmatprep.subr.mxu0 0.0
  %3219 = vmatpush1.msra.mxu0 0.0
  %3220 = vmatprep.subr.mxu0 0.0
  %3221 = vmatpush1.msra.mxu0 0.0
  %3222 = vmatprep.subr.mxu0 0.0
  %3223 = vmatpush1.msra.mxu0 0.0
  %3224 = vmatprep.mubr.f32.mxu0 0.0
  %3225 = vmatmul.mubr.f32.gmra.mrb[0].mxu0 %v2988
  %v3226 = vpop.f32.mrb[0].mxu0
  %v3227 = vadd.f32 0.0, %v3226
  %v3228 = vpop.f32.mrb[0].mxu0
  %v3229 = vadd.f32 0.0, %v3228
  %3230 = vdwg.mxu0
  %3231 = vmatprep.subr.mxu0 %v552
  %3232 = vmatpush1.msra.mxu0 %v551
  %3233 = vmatprep.subr.mxu0 %v556
  %3234 = vmatpush1.msra.mxu0 %v555
  %3235 = vmatprep.subr.mxu0 %v560
  %3236 = vmatpush1.msra.mxu0 %v559
  %3237 = vmatprep.subr.mxu0 %v564
  %3238 = vmatpush1.msra.mxu0 %v563
  %3239 = vmatprep.subr.mxu0 %v568
  %3240 = vmatpush1.msra.mxu0 %v567
  %3241 = vmatprep.subr.mxu0 %v572
  %3242 = vmatpush1.msra.mxu0 %v571
  %3243 = vmatprep.subr.mxu0 %v576
  %3244 = vmatpush1.msra.mxu0 %v575
  %3245 = vmatprep.subr.mxu0 %v580
  %3246 = vmatpush1.msra.mxu0 %v579
  %3247 = vmatprep.subr.mxu0 %v584
  %3248 = vmatpush1.msra.mxu0 %v583
  %3249 = vmatprep.subr.mxu0 %v588
  %3250 = vmatpush1.msra.mxu0 %v587
  %3251 = vmatprep.subr.mxu0 %v592
  %3252 = vmatpush1.msra.mxu0 %v591
  %3253 = vmatprep.subr.mxu0 %v596
  %3254 = vmatpush1.msra.mxu0 %v595
  %3255 = vmatprep.subr.mxu0 %v600
  %3256 = vmatpush1.msra.mxu0 %v599
  %3257 = vmatprep.subr.mxu0 %v604
  %3258 = vmatpush1.msra.mxu0 %v603
  %3259 = vmatprep.subr.mxu0 %v608
  %3260 = vmatpush1.msra.mxu0 %v607
  %3261 = vmatprep.subr.mxu0 %v612
  %3262 = vmatpush1.msra.mxu0 %v611
  %3263 = vmatprep.subr.mxu0 0.0
  %3264 = vmatpush1.msra.mxu0 0.0
  %3265 = vmatprep.subr.mxu0 0.0
  %3266 = vmatpush1.msra.mxu0 0.0
  %3267 = vmatprep.subr.mxu0 0.0
  %3268 = vmatpush1.msra.mxu0 0.0
  %3269 = vmatprep.subr.mxu0 0.0
  %3270 = vmatpush1.msra.mxu0 0.0
  %3271 = vmatprep.subr.mxu0 0.0
  %3272 = vmatpush1.msra.mxu0 0.0
  %3273 = vmatprep.subr.mxu0 0.0
  %3274 = vmatpush1.msra.mxu0 0.0
  %3275 = vmatprep.subr.mxu0 0.0
  %3276 = vmatpush1.msra.mxu0 0.0
  %3277 = vmatprep.subr.mxu0 0.0
  %3278 = vmatpush1.msra.mxu0 0.0
  %3279 = vmatprep.subr.mxu0 0.0
  %3280 = vmatpush1.msra.mxu0 0.0
  %3281 = vmatprep.subr.mxu0 0.0
  %3282 = vmatpush1.msra.mxu0 0.0
  %3283 = vmatprep.subr.mxu0 0.0
  %3284 = vmatpush1.msra.mxu0 0.0
  %3285 = vmatprep.subr.mxu0 0.0
  %3286 = vmatpush1.msra.mxu0 0.0
  %3287 = vmatprep.subr.mxu0 0.0
  %3288 = vmatpush1.msra.mxu0 0.0
  %3289 = vmatprep.subr.mxu0 0.0
  %3290 = vmatpush1.msra.mxu0 0.0
  %3291 = vmatprep.subr.mxu0 0.0
  %3292 = vmatpush1.msra.mxu0 0.0
  %3293 = vmatprep.subr.mxu0 0.0
  %3294 = vmatpush1.msra.mxu0 0.0
  %3295 = vmatprep.mubr.f32.mxu0 0.0
  %3296 = vmatmul.mubr.f32.gmra.mrb[0].mxu0 %v2988
  %v3297 = vpop.f32.mrb[0].mxu0
  %v3298 = vadd.f32 0.0, %v3297
  %v3299 = vpop.f32.mrb[0].mxu0
  %v3300 = vadd.f32 0.0, %v3299
  %3301 = vdwg.mxu0
  %v3302 = vadd.f32 %v3156, %v3227
  %v3303 = vadd.f32 %v3157, %v3229
  %v3304 = vadd.f32 %v3158, %v3298
  %v3305 = vadd.f32 %v3159, %v3300
  %v3306 = vxor.u32 %v3302, 2147483648
  %v3307 = vmul.f32 %v3306, 1.442695
  %v3308 = vpow.pop %v3307
  %v3309 = vadd.f32 %v3308, 1.0
  %v3310 = vrcp.pop %v3309
  %v3311 = vmul.f32 1.0, %v3310
  %v3312 = vxor.u32 %v3303, 2147483648
  %v3313 = vmul.f32 %v3312, 1.442695
  %v3314 = vpow.pop %v3313
  %v3315 = vadd.f32 %v3314, 1.0
  %v3316 = vrcp.pop %v3315
  %v3317 = vmul.f32 1.0, %v3316
  %v3318 = vtanh.pop %v3304
  %v3319 = vxor.u32 %v3305, 2147483648
  %v3320 = vmul.f32 %v3319, 1.442695
  %v3321 = vpow.pop %v3320
  %v3322 = vadd.f32 %v3321, 1.0
  %v3323 = vrcp.pop %v3322
  %v3324 = vmul.f32 1.0, %v3323
  %v3325 = vmul.f32 %v3317, %v2986
  %v3326 = vmul.f32 %v3311, %v3318
  %v3327 = vadd.f32 %v3325, %v3326
  %v3328 = vtanh.pop %v3327
  %v3329 = vmul.f32 %v3324, %v3328
  %3330 = vmatprep.subr.mxu0 %v614
  %3331 = vmatpush1.msra.mxu0 %v613
  %3332 = vmatprep.subr.mxu0 %v618
  %3333 = vmatpush1.msra.mxu0 %v617
  %3334 = vmatprep.subr.mxu0 %v622
  %3335 = vmatpush1.msra.mxu0 %v621
  %3336 = vmatprep.subr.mxu0 %v626
  %3337 = vmatpush1.msra.mxu0 %v625
  %3338 = vmatprep.subr.mxu0 %v630
  %3339 = vmatpush1.msra.mxu0 %v629
  %3340 = vmatprep.subr.mxu0 %v634
  %3341 = vmatpush1.msra.mxu0 %v633
  %3342 = vmatprep.subr.mxu0 %v638
  %3343 = vmatpush1.msra.mxu0 %v637
  %3344 = vmatprep.subr.mxu0 %v642
  %3345 = vmatpush1.msra.mxu0 %v641
  %3346 = vmatprep.subr.mxu0 %v646
  %3347 = vmatpush1.msra.mxu0 %v645
  %3348 = vmatprep.subr.mxu0 %v650
  %3349 = vmatpush1.msra.mxu0 %v649
  %3350 = vmatprep.subr.mxu0 %v654
  %3351 = vmatpush1.msra.mxu0 %v653
  %3352 = vmatprep.subr.mxu0 %v658
  %3353 = vmatpush1.msra.mxu0 %v657
  %3354 = vmatprep.subr.mxu0 %v662
  %3355 = vmatpush1.msra.mxu0 %v661
  %3356 = vmatprep.subr.mxu0 %v666
  %3357 = vmatpush1.msra.mxu0 %v665
  %3358 = vmatprep.subr.mxu0 %v670
  %3359 = vmatpush1.msra.mxu0 %v669
  %3360 = vmatprep.subr.mxu0 %v674
  %3361 = vmatpush1.msra.mxu0 %v673
  %3362 = vmatprep.subr.mxu0 %v678
  %3363 = vmatpush1.msra.mxu0 %v677
  %3364 = vmatprep.subr.mxu0 %v682
  %3365 = vmatpush1.msra.mxu0 %v681
  %3366 = vmatprep.subr.mxu0 %v686
  %3367 = vmatpush1.msra.mxu0 %v685
  %3368 = vmatprep.subr.mxu0 %v690
  %3369 = vmatpush1.msra.mxu0 %v689
  %3370 = vmatprep.subr.mxu0 %v694
  %3371 = vmatpush1.msra.mxu0 %v693
  %3372 = vmatprep.subr.mxu0 %v698
  %3373 = vmatpush1.msra.mxu0 %v697
  %3374 = vmatprep.subr.mxu0 %v702
  %3375 = vmatpush1.msra.mxu0 %v701
  %3376 = vmatprep.subr.mxu0 %v706
  %3377 = vmatpush1.msra.mxu0 %v705
  %3378 = vmatprep.subr.mxu0 %v710
  %3379 = vmatpush1.msra.mxu0 %v709
  %3380 = vmatprep.subr.mxu0 %v714
  %3381 = vmatpush1.msra.mxu0 %v713
  %3382 = vmatprep.subr.mxu0 %v718
  %3383 = vmatpush1.msra.mxu0 %v717
  %3384 = vmatprep.subr.mxu0 %v722
  %3385 = vmatpush1.msra.mxu0 %v721
  %3386 = vmatprep.subr.mxu0 %v726
  %3387 = vmatpush1.msra.mxu0 %v725
  %3388 = vmatprep.subr.mxu0 %v730
  %3389 = vmatpush1.msra.mxu0 %v729
  %3390 = vmatprep.subr.mxu0 %v734
  %3391 = vmatpush1.msra.mxu0 %v733
  %3392 = vmatprep.subr.mxu0 %v738
  %3393 = vmatpush1.msra.mxu0 %v737
  %3394 = vmatprep.mubr.f32.mxu0 %v3154
  %3395 = vmatmul.mubr.f32.gmra.mrb[0].mxu0 %v3329
  %v3396 = vpop.f32.mrb[0].mxu0
  %v3397 = vadd.f32 %v926, %v3396
  %v3398 = vpop.f32.mrb[0].mxu0
  %v3399 = vadd.f32 %v930, %v3398
  %3400 = vdwg.mxu0
  %3401 = vmatprep.subr.mxu0 %v616
  %3402 = vmatpush1.msra.mxu0 %v615
  %3403 = vmatprep.subr.mxu0 %v620
  %3404 = vmatpush1.msra.mxu0 %v619
  %3405 = vmatprep.subr.mxu0 %v624
  %3406 = vmatpush1.msra.mxu0 %v623
  %3407 = vmatprep.subr.mxu0 %v628
  %3408 = vmatpush1.msra.mxu0 %v627
  %3409 = vmatprep.subr.mxu0 %v632
  %3410 = vmatpush1.msra.mxu0 %v631
  %3411 = vmatprep.subr.mxu0 %v636
  %3412 = vmatpush1.msra.mxu0 %v635
  %3413 = vmatprep.subr.mxu0 %v640
  %3414 = vmatpush1.msra.mxu0 %v639
  %3415 = vmatprep.subr.mxu0 %v644
  %3416 = vmatpush1.msra.mxu0 %v643
  %3417 = vmatprep.subr.mxu0 %v648
  %3418 = vmatpush1.msra.mxu0 %v647
  %3419 = vmatprep.subr.mxu0 %v652
  %3420 = vmatpush1.msra.mxu0 %v651
  %3421 = vmatprep.subr.mxu0 %v656
  %3422 = vmatpush1.msra.mxu0 %v655
  %3423 = vmatprep.subr.mxu0 %v660
  %3424 = vmatpush1.msra.mxu0 %v659
  %3425 = vmatprep.subr.mxu0 %v664
  %3426 = vmatpush1.msra.mxu0 %v663
  %3427 = vmatprep.subr.mxu0 %v668
  %3428 = vmatpush1.msra.mxu0 %v667
  %3429 = vmatprep.subr.mxu0 %v672
  %3430 = vmatpush1.msra.mxu0 %v671
  %3431 = vmatprep.subr.mxu0 %v676
  %3432 = vmatpush1.msra.mxu0 %v675
  %3433 = vmatprep.subr.mxu0 %v680
  %3434 = vmatpush1.msra.mxu0 %v679
  %3435 = vmatprep.subr.mxu0 %v684
  %3436 = vmatpush1.msra.mxu0 %v683
  %3437 = vmatprep.subr.mxu0 %v688
  %3438 = vmatpush1.msra.mxu0 %v687
  %3439 = vmatprep.subr.mxu0 %v692
  %3440 = vmatpush1.msra.mxu0 %v691
  %3441 = vmatprep.subr.mxu0 %v696
  %3442 = vmatpush1.msra.mxu0 %v695
  %3443 = vmatprep.subr.mxu0 %v700
  %3444 = vmatpush1.msra.mxu0 %v699
  %3445 = vmatprep.subr.mxu0 %v704
  %3446 = vmatpush1.msra.mxu0 %v703
  %3447 = vmatprep.subr.mxu0 %v708
  %3448 = vmatpush1.msra.mxu0 %v707
  %3449 = vmatprep.subr.mxu0 %v712
  %3450 = vmatpush1.msra.mxu0 %v711
  %3451 = vmatprep.subr.mxu0 %v716
  %3452 = vmatpush1.msra.mxu0 %v715
  %3453 = vmatprep.subr.mxu0 %v720
  %3454 = vmatpush1.msra.mxu0 %v719
  %3455 = vmatprep.subr.mxu0 %v724
  %3456 = vmatpush1.msra.mxu0 %v723
  %3457 = vmatprep.subr.mxu0 %v728
  %3458 = vmatpush1.msra.mxu0 %v727
  %3459 = vmatprep.subr.mxu0 %v732
  %3460 = vmatpush1.msra.mxu0 %v731
  %3461 = vmatprep.subr.mxu0 %v736
  %3462 = vmatpush1.msra.mxu0 %v735
  %3463 = vmatprep.subr.mxu0 %v740
  %3464 = vmatpush1.msra.mxu0 %v739
  %3465 = vmatprep.mubr.f32.mxu0 %v3154
  %3466 = vmatmul.mubr.f32.gmra.mrb[0].mxu0 %v3329
  %v3467 = vpop.f32.mrb[0].mxu0
  %v3468 = vadd.f32 %v934, %v3467
  %v3469 = vpop.f32.mrb[0].mxu0
  %v3470 = vadd.f32 %v938, %v3469
  %3471 = vdwg.mxu0
  %v3472 = vxor.u32 %v3397, 2147483648
  %v3473 = vmul.f32 %v3472, 1.442695
  %v3474 = vpow.pop %v3473
  %v3475 = vadd.f32 %v3474, 1.0
  %v3476 = vrcp.pop %v3475
  %v3477 = vmul.f32 1.0, %v3476
  %v3478 = vxor.u32 %v3399, 2147483648
  %v3479 = vmul.f32 %v3478, 1.442695
  %v3480 = vpow.pop %v3479
  %v3481 = vadd.f32 %v3480, 1.0
  %v3482 = vrcp.pop %v3481
  %v3483 = vmul.f32 1.0, %v3482
  %v3484 = vtanh.pop %v3468
  %v3485 = vxor.u32 %v3470, 2147483648
  %v3486 = vmul.f32 %v3485, 1.442695
  %v3487 = vpow.pop %v3486
  %v3488 = vadd.f32 %v3487, 1.0
  %v3489 = vrcp.pop %v3488
  %v3490 = vmul.f32 1.0, %v3489
  %v3491 = vmul.f32 %v3483, %v3152
  %v3492 = vmul.f32 %v3477, %v3484
  %v3493 = vadd.f32 %v3491, %v3492
  %v3494 = vtanh.pop %v3493
  %v3495 = vmul.f32 %v3490, %v3494
  %v3496 = vld [vmem:[%s10] sm:$0xff]
  %v3497 = vld [vmem:[%s10 + $0x8] sm:$0xff]
  %v3498 = vld [vmem:[%s10 + $0x10] sm:$0xff]
  %v3499 = vld [vmem:[%s10 + $0x18] sm:$0xff]
  %v3500 = vld [vmem:[%s10 + $0x20] sm:$0xff]
  %v3501 = vld [vmem:[%s10 + $0x28] sm:$0xff]
  %v3502 = vld [vmem:[%s10 + $0x30] sm:$0xff]
  %v3503 = vld [vmem:[%s10 + $0x38] sm:$0xff]
  %v3504 = vld [vmem:[%s10 + $0x40] sm:$0xff]
  %v3505 = vld [vmem:[%s10 + $0x48] sm:$0xff]
  %v3506 = vld [vmem:[%s10 + $0x50] sm:$0xff]
  %v3507 = vld [vmem:[%s10 + $0x58] sm:$0xff]
  %v3508 = vld [vmem:[%s10 + $0x60] sm:$0xff]
  %v3509 = vld [vmem:[%s10 + $0x68] sm:$0xff]
  %v3510 = vld [vmem:[%s10 + $0x70] sm:$0xff]
  %v3511 = vld [vmem:[%s10 + $0x78] sm:$0xff]
  %v3512 = vld [vmem:[%s11] sm:$0x1]
  %v3514 = vlaneseq
  %v3515 = vshrl.u32 %v3514, 7
  %v3516 = vsub.s32 0, %v3515
  %v3517 = vrot.slane %v3512, %v3516
  %3519 = vmatprep.subr.mxu0 0.0
  %3520 = vmatpush1.msra.mxu0 %v3496
  %3521 = vmatprep.subr.mxu0 0.0
  %3522 = vmatpush1.msra.mxu0 %v3497
  %3523 = vmatprep.subr.mxu0 0.0
  %3524 = vmatpush1.msra.mxu0 %v3498
  %3525 = vmatprep.subr.mxu0 0.0
  %3526 = vmatpush1.msra.mxu0 %v3499
  %3527 = vmatprep.subr.mxu0 0.0
  %3528 = vmatpush1.msra.mxu0 %v3500
  %3529 = vmatprep.subr.mxu0 0.0
  %3530 = vmatpush1.msra.mxu0 %v3501
  %3531 = vmatprep.subr.mxu0 0.0
  %3532 = vmatpush1.msra.mxu0 %v3502
  %3533 = vmatprep.subr.mxu0 0.0
  %3534 = vmatpush1.msra.mxu0 %v3503
  %3535 = vmatprep.subr.mxu0 0.0
  %3536 = vmatpush1.msra.mxu0 %v3504
  %3537 = vmatprep.subr.mxu0 0.0
  %3538 = vmatpush1.msra.mxu0 %v3505
  %3539 = vmatprep.subr.mxu0 0.0
  %3540 = vmatpush1.msra.mxu0 %v3506
  %3541 = vmatprep.subr.mxu0 0.0
  %3542 = vmatpush1.msra.mxu0 %v3507
  %3543 = vmatprep.subr.mxu0 0.0
  %3544 = vmatpush1.msra.mxu0 %v3508
  %3545 = vmatprep.subr.mxu0 0.0
  %3546 = vmatpush1.msra.mxu0 %v3509
  %3547 = vmatprep.subr.mxu0 0.0
  %3548 = vmatpush1.msra.mxu0 %v3510
  %3549 = vmatprep.subr.mxu0 0.0
  %3550 = vmatpush1.msra.mxu0 %v3511
  %3551 = vmatprep.subr.mxu0 0.0
  %3552 = vmatpush1.msra.mxu0 0.0
  %3553 = vmatprep.subr.mxu0 0.0
  %3554 = vmatpush1.msra.mxu0 0.0
  %3555 = vmatprep.subr.mxu0 0.0
  %3556 = vmatpush1.msra.mxu0 0.0
  %3557 = vmatprep.subr.mxu0 0.0
  %3558 = vmatpush1.msra.mxu0 0.0
  %3559 = vmatprep.subr.mxu0 0.0
  %3560 = vmatpush1.msra.mxu0 0.0
  %3561 = vmatprep.subr.mxu0 0.0
  %3562 = vmatpush1.msra.mxu0 0.0
  %3563 = vmatprep.subr.mxu0 0.0
  %3564 = vmatpush1.msra.mxu0 0.0
  %3565 = vmatprep.subr.mxu0 0.0
  %3566 = vmatpush1.msra.mxu0 0.0
  %3567 = vmatprep.subr.mxu0 0.0
  %3568 = vmatpush1.msra.mxu0 0.0
  %3569 = vmatprep.subr.mxu0 0.0
  %3570 = vmatpush1.msra.mxu0 0.0
  %3571 = vmatprep.subr.mxu0 0.0
  %3572 = vmatpush1.msra.mxu0 0.0
  %3573 = vmatprep.subr.mxu0 0.0
  %3574 = vmatpush1.msra.mxu0 0.0
  %3575 = vmatprep.subr.mxu0 0.0
  %3576 = vmatpush1.msra.mxu0 0.0
  %3577 = vmatprep.subr.mxu0 0.0
  %3578 = vmatpush1.msra.mxu0 0.0
  %3579 = vmatprep.subr.mxu0 0.0
  %3580 = vmatpush1.msra.mxu0 0.0
  %3581 = vmatprep.subr.mxu0 0.0
  %3582 = vmatpush1.msra.mxu0 0.0
  %3583 = vmatprep.mubr.f32.mxu0 0.0
  %3584 = vmatmul.mubr.f32.gmra.mrb[0].mxu0 %v3495
  %v3585 = vpop.f32.mrb[0].mxu0
  %v3586 = vadd.f32 %v3517, %v3585
  %v3587 = vpop.f32.mrb[0].mxu0
  %3588 = vdwg.mxu0
  %vm3589 = vcmask 171008
  %v3590 = vsel %vm3589, %v3586, -inf
  %3591 = vmax.xlane.f32.xlu0 %v3590
  %v3592 = vpop.xlane.xlu0 %3591
  %v3593 = vsub.f32 %v3586, %v3592
  %v3594 = vmul.f32 %v3593, 1.442695
  %v3595 = vpow.pop %v3594
  %v3596 = vsel %vm3589, %v3595, 0.0
  %3597 = vadd.xlane.f32.xlu0 %v3596
  %v3598 = vpop.xlane.xlu0 %3597
  %v3599 = vlog2.pop %v3598
  %v3600 = vmul.f32 %v3599, 0.6931472
  %v3601 = vsub.f32 %v3593, %v3600
  %3602 = vst.msk [vmem:[%s12] sm:$0xff] %vm3589, %v3601
  // Predicated region
  $region50: #{mlp_lstm_forward.1} parent=0 // pred_check
    _
  $region51: #{mlp_lstm_forward.1} parent=0 // pred_check_branch
    %3604 = sbr.rel (0) target = $region53
  $region52: #{mlp_lstm_forward.1} parent=0 // pred_region
    _
  $region53: #{mlp_lstm_forward.1} parent=0 // pred_fallthru
    _
  // Predicated region
  $region54: #{mlp_lstm_forward.1} parent=0 // pred_check
    _
  $region55: #{mlp_lstm_forward.1} parent=0 // pred_check_branch
    %3606 = sbr.rel (0) target = $region57
  $region56: #{mlp_lstm_forward.1} parent=0 // pred_region
    _
  $region57: #{mlp_lstm_forward.1} parent=0 // pred_fallthru
    _

</llo_original>
